<compile_context>
chip_gen: v5e
topology: v5e:2x2
jax: 0.10.0
libtpu: 0.0.40
codegen_flags: <defaults>
</compile_context>

<pallas_src>
import math
import functools

import jax
import jax.numpy as jnp
from jax.experimental import pallas as pl
from jax.experimental.pallas import tpu as pltpu

EPS = 1e-5  # PyTorch LayerNorm default


def _layer_norm(x, g, b):
    mu = jnp.mean(x, axis=-1, keepdims=True)
    var = jnp.mean(jnp.square(x - mu), axis=-1, keepdims=True)
    return (x - mu) * jax.lax.rsqrt(var + EPS) * g + b


def _erf(x):
    # Abramowitz & Stegun 7.1.26 polynomial (|err| < 1.5e-7); uses only exp / mul / where,
    # which always lower in Mosaic.  Matches exact erf-based nn.GELU() to f32 accuracy.
    a1, a2, a3, a4, a5 = 0.254829592, -0.284496736, 1.421413741, -1.453152027, 1.061405429
    p = 0.3275911
    ax = jnp.abs(x)
    t = 1.0 / (1.0 + p * ax)
    poly = ((((a5 * t + a4) * t + a3) * t + a2) * t + a1) * t
    y = 1.0 - poly * jnp.exp(-ax * ax)
    return jnp.where(x >= 0, y, -y)


def _gelu(x):
    # exact (erf-based) GELU, as used by open_clip's Transformer (nn.GELU())
    return 0.5 * x * (1.0 + _erf(x * 0.7071067811865476))


def clip_tower_kernel(x0_ref,
                      ln1g, ln1b, wqkv, bqkv, wo, bo,
                      ln2g, ln2b, w1, b1, w2, b2,
                      lnfg, lnfb,
                      o_ref, acc_ref,
                      *, num_heads, batch, seq):
    """One grid step = one ResidualAttentionBlock; activations stay resident in acc_ref.

    acc_ref / x0_ref / o_ref : (B*S, D) f32.  Per-layer weight refs carry a leading size-1
    layer axis (streamed by BlockSpec).  Weights are pre-transposed to (in, out)."""
    l = pl.program_id(0)
    n_layers = pl.num_programs(0)

    @pl.when(l == 0)
    def _():
        acc_ref[...] = x0_ref[...]

    x = acc_ref[...]                                    # (B*S, D)
    BS, D = x.shape
    dh = D // num_heads
    scale = 1.0 / math.sqrt(dh)

    # ---- attention sublayer: x = x + attn(ln_1(x)) ----
    h = _layer_norm(x, ln1g[0], ln1b[0])
    qkv = jnp.dot(h, wqkv[0], preferred_element_type=jnp.float32) + bqkv[0]   # (BS, 3D)
    q = qkv[:, :D]
    k = qkv[:, D:2 * D]
    v = qkv[:, 2 * D:]

    # causal additive mask built in-kernel (VPU filler, no DMA)
    row = jax.lax.broadcasted_iota(jnp.int32, (seq, seq), 0)
    col = jax.lax.broadcasted_iota(jnp.int32, (seq, seq), 1)
    neg = jnp.where(col > row, jnp.float32(-1e9), jnp.float32(0.0))           # (S, S)

    wo_mat = wo[0]                                      # (D, D)
    attn = jnp.zeros((BS, D), jnp.float32)
    for hd in range(num_heads):                         # static unroll over heads
        sl = slice(hd * dh, (hd + 1) * dh)
        qh = (q[:, sl] * scale).reshape(batch, seq, dh)
        kh = k[:, sl].reshape(batch, seq, dh)
        vh = v[:, sl].reshape(batch, seq, dh)
        s = jnp.einsum('bqd,bkd->bqk', qh, kh,
                       preferred_element_type=jnp.float32) + neg[None]        # (B, S, S)
        s = s - jnp.max(s, axis=-1, keepdims=True)
        p = jnp.exp(s)
        p = p / jnp.sum(p, axis=-1, keepdims=True)
        ctx = jnp.einsum('bqk,bkd->bqd', p, vh,
                         preferred_element_type=jnp.float32).reshape(BS, dh)
        # fold head output straight into the output projection (no lane concat)
        attn = attn + jnp.dot(ctx, wo_mat[sl, :], preferred_element_type=jnp.float32)
    x = x + attn + bo[0]

    # ---- MLP sublayer: x = x + mlp(ln_2(x)) ----
    h2 = _layer_norm(x, ln2g[0], ln2b[0])
    h2 = jnp.dot(h2, w1[0], preferred_element_type=jnp.float32) + b1[0]       # (BS, 4D)
    h2 = _gelu(h2)
    h2 = jnp.dot(h2, w2[0], preferred_element_type=jnp.float32) + b2[0]       # (BS, D)
    x = x + h2

    acc_ref[...] = x

    @pl.when(l == n_layers - 1)
    def _():
        o_ref[...] = _layer_norm(x, lnfg[0], lnfb[0])   # fused ln_final


_PARAM_KEYS = ('ln1g', 'ln1b', 'wqkv', 'bqkv', 'wo', 'bo',
               'ln2g', 'ln2b', 'w1', 'b1', 'w2', 'b2')


def frozen_openclip_embed(tokens, tok_emb, pos_emb, params, lnf_g, lnf_b,
                          *, num_heads, layer_idx=0):
    B, S = tokens.shape
    D = tok_emb.shape[1]
    L = params['wqkv'].shape[0]
    n_run = L - layer_idx                       # layer='last' -> layer_idx=0 -> all blocks

    # glue: token_embedding gather + positional_embedding (kept in plain JAX; dynamic gather)
    x = jnp.take(tok_emb, tokens, axis=0) + pos_emb[None, :, :]               # (B, S, D)
    x = x.reshape(B * S, D).astype(jnp.float32)                               # lane-dense slab

    stacked = [params[k][:n_run] for k in _PARAM_KEYS]

    def wspec(a):   # one layer's slice per grid step (auto double-buffered / pipelined)
        return pl.BlockSpec((1,) + a.shape[1:], lambda l, nd=a.ndim: (l,) + (0,) * (nd - 1))

    def fullspec(a):  # whole array, same block every step
        return pl.BlockSpec(a.shape, lambda l, nd=a.ndim: (0,) * nd)

    out = pl.pallas_call(
        functools.partial(clip_tower_kernel, num_heads=num_heads, batch=B, seq=S),
        out_shape=jax.ShapeDtypeStruct((B * S, D), jnp.float32),
        grid=(n_run,),
        in_specs=[fullspec(x)] + [wspec(a) for a in stacked]
                 + [fullspec(lnf_g), fullspec(lnf_b)],
        out_specs=fullspec(x),
        scratch_shapes=[pltpu.VMEM((B * S, D), jnp.float32)],
        compiler_params=pltpu.CompilerParams(
            dimension_semantics=("arbitrary",),          # layer axis carries the accumulator
            vmem_limit_bytes=32 * 1024 * 1024),
    )(x, *stacked, lnf_g, lnf_b)
    return out.reshape(B, S, D)


def ref_forward(tokens, tok_emb, pos_emb, params, lnf_g, lnf_b, *, num_heads, layer_idx=0):
    """Pure-JAX reference matching PyTorch encode_with_transformer (for validation)."""
    B, S = tokens.shape
    D = tok_emb.shape[1]
    L = params['wqkv'].shape[0]
    n_run = L - layer_idx
    dh = D // num_heads
    scale = 1.0 / math.sqrt(dh)

    x = (jnp.take(tok_emb, tokens, axis=0) + pos_emb[None]).astype(jnp.float32)  # (B,S,D)
    col = jnp.arange(S)[None, :]
    rowi = jnp.arange(S)[:, None]
    mask = jnp.where(col > rowi, -jnp.inf, 0.0).astype(jnp.float32)               # (S,S)

    def ln(t, g, b):
        mu = t.mean(-1, keepdims=True)
        var = ((t - mu) ** 2).mean(-1, keepdims=True)
        return (t - mu) / jnp.sqrt(var + EPS) * g + b

    for li in range(n_run):
        p = {kk: params[kk][li] for kk in _PARAM_KEYS}
        h = ln(x, p['ln1g'][0], p['ln1b'][0])
        qkv = h @ p['wqkv'] + p['bqkv'][0]
        q, k, v = qkv[..., :D], qkv[..., D:2 * D], qkv[..., 2 * D:]
        q = q.reshape(B, S, num_heads, dh).transpose(0, 2, 1, 3)
        k = k.reshape(B, S, num_heads, dh).transpose(0, 2, 1, 3)
        v = v.reshape(B, S, num_heads, dh).transpose(0, 2, 1, 3)
        s = jnp.einsum('bhqd,bhkd->bhqk', q * scale, k) + mask
        a = jax.nn.softmax(s, axis=-1)
        ctx = jnp.einsum('bhqk,bhkd->bhqd', a, v).transpose(0, 2, 1, 3).reshape(B, S, D)
        x = x + ctx @ p['wo'] + p['bo'][0]
        h2 = ln(x, p['ln2g'][0], p['ln2b'][0])
        h2 = jax.nn.gelu(h2 @ p['w1'] + p['b1'][0], approximate=False)
        x = x + h2 @ p['w2'] + p['b2'][0]
    return ln(x, lnf_g[0], lnf_b[0])


def make_params(key, L, D):
    def one(k):
        k0, k1, k2, k3 = jax.random.split(k, 4)
        return dict(
            ln1g=jnp.ones((1, D), jnp.float32),
            ln1b=jnp.zeros((1, D), jnp.float32),
            wqkv=jax.random.normal(k0, (D, 3 * D), jnp.float32) * 0.02,   # pre-transposed (in, out)
            bqkv=jnp.zeros((1, 3 * D), jnp.float32),
            wo=jax.random.normal(k1, (D, D), jnp.float32) * 0.02,
            bo=jnp.zeros((1, D), jnp.float32),
            ln2g=jnp.ones((1, D), jnp.float32),
            ln2b=jnp.zeros((1, D), jnp.float32),
            w1=jax.random.normal(k2, (D, 4 * D), jnp.float32) * 0.02,
            b1=jnp.zeros((1, 4 * D), jnp.float32),
            w2=jax.random.normal(k3, (4 * D, D), jnp.float32) * 0.02,
            b2=jnp.zeros((1, D), jnp.float32),
        )
    per_layer = [one(k) for k in jax.random.split(key, L)]
    return {k: jnp.stack([p[k] for p in per_layer], axis=0) for k in _PARAM_KEYS}


if __name__ == "__main__":
    # batch, max_length, width, heads, layers, vocab  (width 128 -> lane-dense tiles)
    B, S, D, H, L, V = 2, 8, 128, 4, 2, 64

    key = jax.random.PRNGKey(0)
    k_tok, k_emb, k_pos, k_layers = jax.random.split(key, 4)

    # TODO(synk): open_clip.tokenize(text) (BPE tokenizer) has no Pallas equivalent;
    # stand-in deterministic integer token ids.
    tokens = jax.random.randint(k_tok, (B, S), 0, V, dtype=jnp.int32)

    tok_emb = jax.random.normal(k_emb, (V, D), jnp.float32) * 0.02       # token_embedding.weight
    pos_emb = jax.random.normal(k_pos, (S, D), jnp.float32) * 0.01       # positional_embedding
    params = make_params(k_layers, L, D)                                 # stacked resblock weights
    lnf_g = jnp.ones((1, D), jnp.float32)                                # ln_final.weight
    lnf_b = jnp.zeros((1, D), jnp.float32)                               # ln_final.bias

    z = frozen_openclip_embed(tokens, tok_emb, pos_emb, params, lnf_g, lnf_b,
                              num_heads=H, layer_idx=0)
    z = jax.block_until_ready(z)

    assert z.shape == (B, S, D)
    assert bool(jnp.all(jnp.isfinite(z)))

    # correctness check against a pure-JAX reference of the PyTorch forward
    z_ref = ref_forward(tokens, tok_emb, pos_emb, params, lnf_g, lnf_b,
                        num_heads=H, layer_idx=0)
    z_ref = jax.block_until_ready(z_ref)
    assert bool(jnp.allclose(z, z_ref, atol=1e-2, rtol=1e-2)), \
        f"max abs diff {float(jnp.max(jnp.abs(z - z_ref)))}"

    print("KERNEL_OK")
</pallas_src>

<mosaic_0001>
module attributes {stable_mosaic.version = 11 : i64} {
  func.func @clip_tower_kernel(%arg0: i32, %arg1: memref<16x128xf32, #tpu.memory_space<vmem>>, %arg2: memref<1x1x128xf32, #tpu.memory_space<vmem>>, %arg3: memref<1x1x128xf32, #tpu.memory_space<vmem>>, %arg4: memref<1x128x384xf32, #tpu.memory_space<vmem>>, %arg5: memref<1x1x384xf32, #tpu.memory_space<vmem>>, %arg6: memref<1x128x128xf32, #tpu.memory_space<vmem>>, %arg7: memref<1x1x128xf32, #tpu.memory_space<vmem>>, %arg8: memref<1x1x128xf32, #tpu.memory_space<vmem>>, %arg9: memref<1x1x128xf32, #tpu.memory_space<vmem>>, %arg10: memref<1x128x512xf32, #tpu.memory_space<vmem>>, %arg11: memref<1x1x512xf32, #tpu.memory_space<vmem>>, %arg12: memref<1x512x128xf32, #tpu.memory_space<vmem>>, %arg13: memref<1x1x128xf32, #tpu.memory_space<vmem>>, %arg14: memref<1x128xf32, #tpu.memory_space<vmem>>, %arg15: memref<1x128xf32, #tpu.memory_space<vmem>>, %arg16: memref<16x128xf32, #tpu.memory_space<vmem>>, %arg17: memref<16x128xf32, #tpu.memory_space<vmem>>) attributes {dimension_semantics = [#tpu.dimension_semantics<arbitrary>], iteration_bounds = array<i64: 2>, scalar_prefetch = 0 : i64, scratch_operands = 1 : i64, tpu.core_type = #tpu.core_type<tc>, window_params = [{pipeline_mode = #tpu.pipeline_mode<synchronous>, transform_indices = @transform_0, window_bounds = array<i64: 16, 128>}, {transform_indices = @transform_1, window_bounds = array<i64: 1, 1, 128>}, {transform_indices = @transform_2, window_bounds = array<i64: 1, 1, 128>}, {transform_indices = @transform_3, window_bounds = array<i64: 1, 128, 384>}, {transform_indices = @transform_4, window_bounds = array<i64: 1, 1, 384>}, {transform_indices = @transform_5, window_bounds = array<i64: 1, 128, 128>}, {transform_indices = @transform_6, window_bounds = array<i64: 1, 1, 128>}, {transform_indices = @transform_7, window_bounds = array<i64: 1, 1, 128>}, {transform_indices = @transform_8, window_bounds = array<i64: 1, 1, 128>}, {transform_indices = @transform_9, window_bounds = array<i64: 1, 128, 512>}, {transform_indices = @transform_10, window_bounds = array<i64: 1, 1, 512>}, {transform_indices = @transform_11, window_bounds = array<i64: 1, 512, 128>}, {transform_indices = @transform_12, window_bounds = array<i64: 1, 1, 128>}, {pipeline_mode = #tpu.pipeline_mode<synchronous>, transform_indices = @transform_13, window_bounds = array<i64: 1, 128>}, {pipeline_mode = #tpu.pipeline_mode<synchronous>, transform_indices = @transform_14, window_bounds = array<i64: 1, 128>}, {pipeline_mode = #tpu.pipeline_mode<synchronous>, transform_indices = @transform_15, window_bounds = array<i64: 16, 128>}]} {
    %c0_i32 = arith.constant 0 : i32
    %0 = arith.cmpi eq, %arg0, %c0_i32 : i32
    %1 = arith.extui %0 : i1 to i32
    %c0_i32_0 = arith.constant 0 : i32
    %2 = arith.cmpi ne, %1, %c0_i32_0 : i32
    scf.if %2 {
      %c0_95 = arith.constant 0 : index
      %c0_96 = arith.constant 0 : index
      %243 = vector.load %arg1[%c0_95, %c0_96] : memref<16x128xf32, #tpu.memory_space<vmem>>, vector<16x128xf32>
      %c0_97 = arith.constant 0 : index
      %c0_98 = arith.constant 0 : index
      %244 = vector.load %arg17[%c0_97, %c0_98] : memref<16x128xf32, #tpu.memory_space<vmem>>, vector<16x128xf32>
      tpu.vector_store %arg17[%c0_97, %c0_98], %243 {strides = array<i32>} : memref<16x128xf32, #tpu.memory_space<vmem>>, vector<16x128xf32>,
    } else {
    }
    %c0 = arith.constant 0 : index
    %c0_1 = arith.constant 0 : index
    %3 = vector.load %arg17[%c0, %c0_1] : memref<16x128xf32, #tpu.memory_space<vmem>>, vector<16x128xf32>
    %c0_2 = arith.constant 0 : index
    %c0_3 = arith.constant 0 : index
    %c0_4 = arith.constant 0 : index
    %4 = vector.load %arg2[%c0_2, %c0_3, %c0_4] : memref<1x1x128xf32, #tpu.memory_space<vmem>>, vector<1x1x128xf32>
    %5 = vector.shape_cast %4 : vector<1x1x128xf32> to vector<1x128xf32>
    %c0_5 = arith.constant 0 : index
    %c0_6 = arith.constant 0 : index
    %c0_7 = arith.constant 0 : index
    %6 = vector.load %arg3[%c0_5, %c0_6, %c0_7] : memref<1x1x128xf32, #tpu.memory_space<vmem>>, vector<1x1x128xf32>
    %7 = vector.shape_cast %6 : vector<1x1x128xf32> to vector<1x128xf32>
    %cst = arith.constant dense<0.000000e+00> : vector<16xf32>
    %8 = vector.multi_reduction <add>, %3, %cst [1] : vector<16x128xf32> to vector<16xf32>
    %9 = vector.shape_cast %8 : vector<16xf32> to vector<16x1xf32>
    %cst_8 = arith.constant 1.280000e+02 : f32
    %10 = vector.broadcast %cst_8 : f32 to vector<16x1xf32>
    %11 = arith.divf %9, %10 : vector<16x1xf32>
    %12 = vector.broadcast %11 : vector<16x1xf32> to vector<16x128xf32>
    %13 = arith.subf %3, %12 : vector<16x128xf32>
    %14 = arith.mulf %13, %13 : vector<16x128xf32>
    %cst_9 = arith.constant dense<0.000000e+00> : vector<16xf32>
    %15 = vector.multi_reduction <add>, %14, %cst_9 [1] : vector<16x128xf32> to vector<16xf32>
    %16 = vector.shape_cast %15 : vector<16xf32> to vector<16x1xf32>
    %cst_10 = arith.constant 1.280000e+02 : f32
    %17 = vector.broadcast %cst_10 : f32 to vector<16x1xf32>
    %18 = arith.divf %16, %17 : vector<16x1xf32>
    %19 = vector.broadcast %11 : vector<16x1xf32> to vector<16x128xf32>
    %20 = arith.subf %3, %19 : vector<16x128xf32>
    %cst_11 = arith.constant 9.99999974E-6 : f32
    %21 = vector.broadcast %cst_11 : f32 to vector<16x1xf32>
    %22 = arith.addf %18, %21 : vector<16x1xf32>
    %23 = math.rsqrt %22 : vector<16x1xf32>
    %24 = vector.broadcast %23 : vector<16x1xf32> to vector<16x128xf32>
    %25 = arith.mulf %20, %24 : vector<16x128xf32>
    %26 = vector.broadcast %5 : vector<1x128xf32> to vector<16x128xf32>
    %27 = arith.mulf %25, %26 : vector<16x128xf32>
    %28 = vector.broadcast %7 : vector<1x128xf32> to vector<16x128xf32>
    %29 = arith.addf %27, %28 : vector<16x128xf32>
    %c0_12 = arith.constant 0 : index
    %c0_13 = arith.constant 0 : index
    %c0_14 = arith.constant 0 : index
    %30 = vector.load %arg4[%c0_12, %c0_13, %c0_14] : memref<1x128x384xf32, #tpu.memory_space<vmem>>, vector<1x128x384xf32>
    %31 = vector.shape_cast %30 : vector<1x128x384xf32> to vector<128x384xf32>
    %cst_15 = arith.constant dense<0.000000e+00> : vector<16x384xf32>
    %32 = tpu.matmul %29, %31, %cst_15 {dimension_numbers = #tpu.dot_dimension_numbers<[1], [0], [0], [1], [0, 0, 1, 1], [], []>} : vector<16x128xf32>, vector<128x384xf32>, vector<16x384xf32> -> vector<16x384xf32>
    %c0_16 = arith.constant 0 : index
    %c0_17 = arith.constant 0 : index
    %c0_18 = arith.constant 0 : index
    %33 = vector.load %arg5[%c0_16, %c0_17, %c0_18] : memref<1x1x384xf32, #tpu.memory_space<vmem>>, vector<1x1x384xf32>
    %34 = vector.shape_cast %33 : vector<1x1x384xf32> to vector<1x384xf32>
    %35 = vector.broadcast %34 : vector<1x384xf32> to vector<16x384xf32>
    %36 = arith.addf %32, %35 : vector<16x384xf32>
    %37 = vector.extract_strided_slice %36 {offsets = [0, 0], sizes = [16, 128], strides = [1, 1]} : vector<16x384xf32> to vector<16x128xf32>
    %38 = vector.extract_strided_slice %36 {offsets = [0, 128], sizes = [16, 128], strides = [1, 1]} : vector<16x384xf32> to vector<16x128xf32>
    %39 = vector.extract_strided_slice %36 {offsets = [0, 256], sizes = [16, 128], strides = [1, 1]} : vector<16x384xf32> to vector<16x128xf32>
    %40 = tpu.iota {dimensions = array<i32: 0>} : vector<8x8xi32>
    %41 = tpu.iota {dimensions = array<i32: 1>} : vector<8x8xi32>
    %42 = arith.cmpi sgt, %41, %40 : vector<8x8xi32>
    %cst_19 = arith.constant -1.000000e+09 : f32
    %cst_20 = arith.constant 0.000000e+00 : f32
    %43 = vector.broadcast %cst_19 : f32 to vector<8x8xf32>
    %44 = vector.broadcast %cst_20 : f32 to vector<8x8xf32>
    %45 = arith.select %42, %43, %44 : vector<8x8xi1>, vector<8x8xf32>
    %c0_21 = arith.constant 0 : index
    %c0_22 = arith.constant 0 : index
    %c0_23 = arith.constant 0 : index
    %46 = vector.load %arg6[%c0_21, %c0_22, %c0_23] : memref<1x128x128xf32, #tpu.memory_space<vmem>>, vector<1x128x128xf32>
    %47 = vector.shape_cast %46 : vector<1x128x128xf32> to vector<128x128xf32>
    %cst_24 = arith.constant 0.000000e+00 : f32
    %48 = vector.broadcast %cst_24 : f32 to vector<16x128xf32>
    %49 = vector.extract_strided_slice %37 {offsets = [0, 0], sizes = [16, 32], strides = [1, 1]} : vector<16x128xf32> to vector<16x32xf32>
    %cst_25 = arith.constant 0.176776692 : f32
    %50 = vector.broadcast %cst_25 : f32 to vector<16x32xf32>
    %51 = arith.mulf %49, %50 : vector<16x32xf32>
    %52 = vector.shape_cast %51 : vector<16x32xf32> to vector<2x8x32xf32>
    %53 = vector.extract_strided_slice %38 {offsets = [0, 0], sizes = [16, 32], strides = [1, 1]} : vector<16x128xf32> to vector<16x32xf32>
    %54 = vector.shape_cast %53 : vector<16x32xf32> to vector<2x8x32xf32>
    %55 = vector.extract_strided_slice %39 {offsets = [0, 0], sizes = [16, 32], strides = [1, 1]} : vector<16x128xf32> to vector<16x32xf32>
    %56 = vector.shape_cast %55 : vector<16x32xf32> to vector<2x8x32xf32>
    "tpu.trace_start"() <{level = 10 : i32, message = "bqd,bkd->bqk"}> : () -> ()
    %cst_26 = arith.constant dense<0.000000e+00> : vector<2x8x8xf32>
    %57 = tpu.matmul %52, %54, %cst_26 {dimension_numbers = #tpu.dot_dimension_numbers<[2], [2], [1], [1], [0, 0, 0, 1, 1, 1], [0], [0]>} : vector<2x8x32xf32>, vector<2x8x32xf32>, vector<2x8x8xf32> -> vector<2x8x8xf32>
    "tpu.trace_stop"() : () -> ()
    %58 = vector.shape_cast %45 : vector<8x8xf32> to vector<1x8x8xf32>
    %59 = vector.broadcast %58 : vector<1x8x8xf32> to vector<2x8x8xf32>
    %60 = arith.addf %57, %59 : vector<2x8x8xf32>
    %cst_27 = arith.constant dense<0xFF800000> : vector<2x8xf32>
    %61 = vector.multi_reduction <maximumf>, %60, %cst_27 [2] : vector<2x8x8xf32> to vector<2x8xf32>
    %62 = vector.shape_cast %61 : vector<2x8xf32> to vector<2x8x1xf32>
    %63 = vector.broadcast %62 : vector<2x8x1xf32> to vector<2x8x8xf32>
    %64 = arith.subf %60, %63 : vector<2x8x8xf32>
    %65 = math.exp %64 : vector<2x8x8xf32>
    %cst_28 = arith.constant dense<0.000000e+00> : vector<2x8xf32>
    %66 = vector.multi_reduction <add>, %65, %cst_28 [2] : vector<2x8x8xf32> to vector<2x8xf32>
    %67 = vector.shape_cast %66 : vector<2x8xf32> to vector<2x8x1xf32>
    %68 = vector.broadcast %67 : vector<2x8x1xf32> to vector<2x8x8xf32>
    %69 = arith.divf %65, %68 : vector<2x8x8xf32>
    "tpu.trace_start"() <{level = 10 : i32, message = "bqk,bkd->bqd"}> : () -> ()
    %cst_29 = arith.constant dense<0.000000e+00> : vector<2x8x32xf32>
    %70 = tpu.matmul %69, %56, %cst_29 {dimension_numbers = #tpu.dot_dimension_numbers<[2], [1], [1], [2], [0, 0, 0, 1, 1, 2], [0], [0]>} : vector<2x8x8xf32>, vector<2x8x32xf32>, vector<2x8x32xf32> -> vector<2x8x32xf32>
    "tpu.trace_stop"() : () -> ()
    %71 = vector.shape_cast %70 : vector<2x8x32xf32> to vector<16x32xf32>
    %72 = vector.extract_strided_slice %47 {offsets = [0, 0], sizes = [32, 128], strides = [1, 1]} : vector<128x128xf32> to vector<32x128xf32>
    %cst_30 = arith.constant dense<0.000000e+00> : vector<16x128xf32>
    %73 = tpu.matmul %71, %72, %cst_30 {dimension_numbers = #tpu.dot_dimension_numbers<[1], [0], [0], [1], [0, 0, 1, 1], [], []>} : vector<16x32xf32>, vector<32x128xf32>, vector<16x128xf32> -> vector<16x128xf32>
    %74 = arith.addf %48, %73 : vector<16x128xf32>
    %75 = vector.extract_strided_slice %37 {offsets = [0, 32], sizes = [16, 32], strides = [1, 1]} : vector<16x128xf32> to vector<16x32xf32>
    %cst_31 = arith.constant 0.176776692 : f32
    %76 = vector.broadcast %cst_31 : f32 to vector<16x32xf32>
    %77 = arith.mulf %75, %76 : vector<16x32xf32>
    %78 = vector.shape_cast %77 : vector<16x32xf32> to vector<2x8x32xf32>
    %79 = vector.extract_strided_slice %38 {offsets = [0, 32], sizes = [16, 32], strides = [1, 1]} : vector<16x128xf32> to vector<16x32xf32>
    %80 = vector.shape_cast %79 : vector<16x32xf32> to vector<2x8x32xf32>
    %81 = vector.extract_strided_slice %39 {offsets = [0, 32], sizes = [16, 32], strides = [1, 1]} : vector<16x128xf32> to vector<16x32xf32>
    %82 = vector.shape_cast %81 : vector<16x32xf32> to vector<2x8x32xf32>
    "tpu.trace_start"() <{level = 10 : i32, message = "bqd,bkd->bqk"}> : () -> ()
    %cst_32 = arith.constant dense<0.000000e+00> : vector<2x8x8xf32>
    %83 = tpu.matmul %78, %80, %cst_32 {dimension_numbers = #tpu.dot_dimension_numbers<[2], [2], [1], [1], [0, 0, 0, 1, 1, 1], [0], [0]>} : vector<2x8x32xf32>, vector<2x8x32xf32>, vector<2x8x8xf32> -> vector<2x8x8xf32>
    "tpu.trace_stop"() : () -> ()
    %84 = vector.shape_cast %45 : vector<8x8xf32> to vector<1x8x8xf32>
    %85 = vector.broadcast %84 : vector<1x8x8xf32> to vector<2x8x8xf32>
    %86 = arith.addf %83, %85 : vector<2x8x8xf32>
    %cst_33 = arith.constant dense<0xFF800000> : vector<2x8xf32>
    %87 = vector.multi_reduction <maximumf>, %86, %cst_33 [2] : vector<2x8x8xf32> to vector<2x8xf32>
    %88 = vector.shape_cast %87 : vector<2x8xf32> to vector<2x8x1xf32>
    %89 = vector.broadcast %88 : vector<2x8x1xf32> to vector<2x8x8xf32>
    %90 = arith.subf %86, %89 : vector<2x8x8xf32>
    %91 = math.exp %90 : vector<2x8x8xf32>
    %cst_34 = arith.constant dense<0.000000e+00> : vector<2x8xf32>
    %92 = vector.multi_reduction <add>, %91, %cst_34 [2] : vector<2x8x8xf32> to vector<2x8xf32>
    %93 = vector.shape_cast %92 : vector<2x8xf32> to vector<2x8x1xf32>
    %94 = vector.broadcast %93 : vector<2x8x1xf32> to vector<2x8x8xf32>
    %95 = arith.divf %91, %94 : vector<2x8x8xf32>
    "tpu.trace_start"() <{level = 10 : i32, message = "bqk,bkd->bqd"}> : () -> ()
    %cst_35 = arith.constant dense<0.000000e+00> : vector<2x8x32xf32>
    %96 = tpu.matmul %95, %82, %cst_35 {dimension_numbers = #tpu.dot_dimension_numbers<[2], [1], [1], [2], [0, 0, 0, 1, 1, 2], [0], [0]>} : vector<2x8x8xf32>, vector<2x8x32xf32>, vector<2x8x32xf32> -> vector<2x8x32xf32>
    "tpu.trace_stop"() : () -> ()
    %97 = vector.shape_cast %96 : vector<2x8x32xf32> to vector<16x32xf32>
    %98 = vector.extract_strided_slice %47 {offsets = [32, 0], sizes = [32, 128], strides = [1, 1]} : vector<128x128xf32> to vector<32x128xf32>
    %cst_36 = arith.constant dense<0.000000e+00> : vector<16x128xf32>
    %99 = tpu.matmul %97, %98, %cst_36 {dimension_numbers = #tpu.dot_dimension_numbers<[1], [0], [0], [1], [0, 0, 1, 1], [], []>} : vector<16x32xf32>, vector<32x128xf32>, vector<16x128xf32> -> vector<16x128xf32>
    %100 = arith.addf %74, %99 : vector<16x128xf32>
    %101 = vector.extract_strided_slice %37 {offsets = [0, 64], sizes = [16, 32], strides = [1, 1]} : vector<16x128xf32> to vector<16x32xf32>
    %cst_37 = arith.constant 0.176776692 : f32
    %102 = vector.broadcast %cst_37 : f32 to vector<16x32xf32>
    %103 = arith.mulf %101, %102 : vector<16x32xf32>
    %104 = vector.shape_cast %103 : vector<16x32xf32> to vector<2x8x32xf32>
    %105 = vector.extract_strided_slice %38 {offsets = [0, 64], sizes = [16, 32], strides = [1, 1]} : vector<16x128xf32> to vector<16x32xf32>
    %106 = vector.shape_cast %105 : vector<16x32xf32> to vector<2x8x32xf32>
    %107 = vector.extract_strided_slice %39 {offsets = [0, 64], sizes = [16, 32], strides = [1, 1]} : vector<16x128xf32> to vector<16x32xf32>
    %108 = vector.shape_cast %107 : vector<16x32xf32> to vector<2x8x32xf32>
    "tpu.trace_start"() <{level = 10 : i32, message = "bqd,bkd->bqk"}> : () -> ()
    %cst_38 = arith.constant dense<0.000000e+00> : vector<2x8x8xf32>
    %109 = tpu.matmul %104, %106, %cst_38 {dimension_numbers = #tpu.dot_dimension_numbers<[2], [2], [1], [1], [0, 0, 0, 1, 1, 1], [0], [0]>} : vector<2x8x32xf32>, vector<2x8x32xf32>, vector<2x8x8xf32> -> vector<2x8x8xf32>
    "tpu.trace_stop"() : () -> ()
    %110 = vector.shape_cast %45 : vector<8x8xf32> to vector<1x8x8xf32>
    %111 = vector.broadcast %110 : vector<1x8x8xf32> to vector<2x8x8xf32>
    %112 = arith.addf %109, %111 : vector<2x8x8xf32>
    %cst_39 = arith.constant dense<0xFF800000> : vector<2x8xf32>
    %113 = vector.multi_reduction <maximumf>, %112, %cst_39 [2] : vector<2x8x8xf32> to vector<2x8xf32>
    %114 = vector.shape_cast %113 : vector<2x8xf32> to vector<2x8x1xf32>
    %115 = vector.broadcast %114 : vector<2x8x1xf32> to vector<2x8x8xf32>
    %116 = arith.subf %112, %115 : vector<2x8x8xf32>
    %117 = math.exp %116 : vector<2x8x8xf32>
    %cst_40 = arith.constant dense<0.000000e+00> : vector<2x8xf32>
    %118 = vector.multi_reduction <add>, %117, %cst_40 [2] : vector<2x8x8xf32> to vector<2x8xf32>
    %119 = vector.shape_cast %118 : vector<2x8xf32> to vector<2x8x1xf32>
    %120 = vector.broadcast %119 : vector<2x8x1xf32> to vector<2x8x8xf32>
    %121 = arith.divf %117, %120 : vector<2x8x8xf32>
    "tpu.trace_start"() <{level = 10 : i32, message = "bqk,bkd->bqd"}> : () -> ()
    %cst_41 = arith.constant dense<0.000000e+00> : vector<2x8x32xf32>
    %122 = tpu.matmul %121, %108, %cst_41 {dimension_numbers = #tpu.dot_dimension_numbers<[2], [1], [1], [2], [0, 0, 0, 1, 1, 2], [0], [0]>} : vector<2x8x8xf32>, vector<2x8x32xf32>, vector<2x8x32xf32> -> vector<2x8x32xf32>
    "tpu.trace_stop"() : () -> ()
    %123 = vector.shape_cast %122 : vector<2x8x32xf32> to vector<16x32xf32>
    %124 = vector.extract_strided_slice %47 {offsets = [64, 0], sizes = [32, 128], strides = [1, 1]} : vector<128x128xf32> to vector<32x128xf32>
    %cst_42 = arith.constant dense<0.000000e+00> : vector<16x128xf32>
    %125 = tpu.matmul %123, %124, %cst_42 {dimension_numbers = #tpu.dot_dimension_numbers<[1], [0], [0], [1], [0, 0, 1, 1], [], []>} : vector<16x32xf32>, vector<32x128xf32>, vector<16x128xf32> -> vector<16x128xf32>
    %126 = arith.addf %100, %125 : vector<16x128xf32>
    %127 = vector.extract_strided_slice %37 {offsets = [0, 96], sizes = [16, 32], strides = [1, 1]} : vector<16x128xf32> to vector<16x32xf32>
    %cst_43 = arith.constant 0.176776692 : f32
    %128 = vector.broadcast %cst_43 : f32 to vector<16x32xf32>
    %129 = arith.mulf %127, %128 : vector<16x32xf32>
    %130 = vector.shape_cast %129 : vector<16x32xf32> to vector<2x8x32xf32>
    %131 = vector.extract_strided_slice %38 {offsets = [0, 96], sizes = [16, 32], strides = [1, 1]} : vector<16x128xf32> to vector<16x32xf32>
    %132 = vector.shape_cast %131 : vector<16x32xf32> to vector<2x8x32xf32>
    %133 = vector.extract_strided_slice %39 {offsets = [0, 96], sizes = [16, 32], strides = [1, 1]} : vector<16x128xf32> to vector<16x32xf32>
    %134 = vector.shape_cast %133 : vector<16x32xf32> to vector<2x8x32xf32>
    "tpu.trace_start"() <{level = 10 : i32, message = "bqd,bkd->bqk"}> : () -> ()
    %cst_44 = arith.constant dense<0.000000e+00> : vector<2x8x8xf32>
    %135 = tpu.matmul %130, %132, %cst_44 {dimension_numbers = #tpu.dot_dimension_numbers<[2], [2], [1], [1], [0, 0, 0, 1, 1, 1], [0], [0]>} : vector<2x8x32xf32>, vector<2x8x32xf32>, vector<2x8x8xf32> -> vector<2x8x8xf32>
    "tpu.trace_stop"() : () -> ()
    %136 = vector.shape_cast %45 : vector<8x8xf32> to vector<1x8x8xf32>
    %137 = vector.broadcast %136 : vector<1x8x8xf32> to vector<2x8x8xf32>
    %138 = arith.addf %135, %137 : vector<2x8x8xf32>
    %cst_45 = arith.constant dense<0xFF800000> : vector<2x8xf32>
    %139 = vector.multi_reduction <maximumf>, %138, %cst_45 [2] : vector<2x8x8xf32> to vector<2x8xf32>
    %140 = vector.shape_cast %139 : vector<2x8xf32> to vector<2x8x1xf32>
    %141 = vector.broadcast %140 : vector<2x8x1xf32> to vector<2x8x8xf32>
    %142 = arith.subf %138, %141 : vector<2x8x8xf32>
    %143 = math.exp %142 : vector<2x8x8xf32>
    %cst_46 = arith.constant dense<0.000000e+00> : vector<2x8xf32>
    %144 = vector.multi_reduction <add>, %143, %cst_46 [2] : vector<2x8x8xf32> to vector<2x8xf32>
    %145 = vector.shape_cast %144 : vector<2x8xf32> to vector<2x8x1xf32>
    %146 = vector.broadcast %145 : vector<2x8x1xf32> to vector<2x8x8xf32>
    %147 = arith.divf %143, %146 : vector<2x8x8xf32>
    "tpu.trace_start"() <{level = 10 : i32, message = "bqk,bkd->bqd"}> : () -> ()
    %cst_47 = arith.constant dense<0.000000e+00> : vector<2x8x32xf32>
    %148 = tpu.matmul %147, %134, %cst_47 {dimension_numbers = #tpu.dot_dimension_numbers<[2], [1], [1], [2], [0, 0, 0, 1, 1, 2], [0], [0]>} : vector<2x8x8xf32>, vector<2x8x32xf32>, vector<2x8x32xf32> -> vector<2x8x32xf32>
    "tpu.trace_stop"() : () -> ()
    %149 = vector.shape_cast %148 : vector<2x8x32xf32> to vector<16x32xf32>
    %150 = vector.extract_strided_slice %47 {offsets = [96, 0], sizes = [32, 128], strides = [1, 1]} : vector<128x128xf32> to vector<32x128xf32>
    %cst_48 = arith.constant dense<0.000000e+00> : vector<16x128xf32>
    %151 = tpu.matmul %149, %150, %cst_48 {dimension_numbers = #tpu.dot_dimension_numbers<[1], [0], [0], [1], [0, 0, 1, 1], [], []>} : vector<16x32xf32>, vector<32x128xf32>, vector<16x128xf32> -> vector<16x128xf32>
    %152 = arith.addf %126, %151 : vector<16x128xf32>
    %153 = arith.addf %3, %152 : vector<16x128xf32>
    %c0_49 = arith.constant 0 : index
    %c0_50 = arith.constant 0 : index
    %c0_51 = arith.constant 0 : index
    %154 = vector.load %arg7[%c0_49, %c0_50, %c0_51] : memref<1x1x128xf32, #tpu.memory_space<vmem>>, vector<1x1x128xf32>
    %155 = vector.shape_cast %154 : vector<1x1x128xf32> to vector<1x128xf32>
    %156 = vector.broadcast %155 : vector<1x128xf32> to vector<16x128xf32>
    %157 = arith.addf %153, %156 : vector<16x128xf32>
    %c0_52 = arith.constant 0 : index
    %c0_53 = arith.constant 0 : index
    %c0_54 = arith.constant 0 : index
    %158 = vector.load %arg8[%c0_52, %c0_53, %c0_54] : memref<1x1x128xf32, #tpu.memory_space<vmem>>, vector<1x1x128xf32>
    %159 = vector.shape_cast %158 : vector<1x1x128xf32> to vector<1x128xf32>
    %c0_55 = arith.constant 0 : index
    %c0_56 = arith.constant 0 : index
    %c0_57 = arith.constant 0 : index
    %160 = vector.load %arg9[%c0_55, %c0_56, %c0_57] : memref<1x1x128xf32, #tpu.memory_space<vmem>>, vector<1x1x128xf32>
    %161 = vector.shape_cast %160 : vector<1x1x128xf32> to vector<1x128xf32>
    %cst_58 = arith.constant dense<0.000000e+00> : vector<16xf32>
    %162 = vector.multi_reduction <add>, %157, %cst_58 [1] : vector<16x128xf32> to vector<16xf32>
    %163 = vector.shape_cast %162 : vector<16xf32> to vector<16x1xf32>
    %cst_59 = arith.constant 1.280000e+02 : f32
    %164 = vector.broadcast %cst_59 : f32 to vector<16x1xf32>
    %165 = arith.divf %163, %164 : vector<16x1xf32>
    %166 = vector.broadcast %165 : vector<16x1xf32> to vector<16x128xf32>
    %167 = arith.subf %157, %166 : vector<16x128xf32>
    %168 = arith.mulf %167, %167 : vector<16x128xf32>
    %cst_60 = arith.constant dense<0.000000e+00> : vector<16xf32>
    %169 = vector.multi_reduction <add>, %168, %cst_60 [1] : vector<16x128xf32> to vector<16xf32>
    %170 = vector.shape_cast %169 : vector<16xf32> to vector<16x1xf32>
    %cst_61 = arith.constant 1.280000e+02 : f32
    %171 = vector.broadcast %cst_61 : f32 to vector<16x1xf32>
    %172 = arith.divf %170, %171 : vector<16x1xf32>
    %173 = vector.broadcast %165 : vector<16x1xf32> to vector<16x128xf32>
    %174 = arith.subf %157, %173 : vector<16x128xf32>
    %cst_62 = arith.constant 9.99999974E-6 : f32
    %175 = vector.broadcast %cst_62 : f32 to vector<16x1xf32>
    %176 = arith.addf %172, %175 : vector<16x1xf32>
    %177 = math.rsqrt %176 : vector<16x1xf32>
    %178 = vector.broadcast %177 : vector<16x1xf32> to vector<16x128xf32>
    %179 = arith.mulf %174, %178 : vector<16x128xf32>
    %180 = vector.broadcast %159 : vector<1x128xf32> to vector<16x128xf32>
    %181 = arith.mulf %179, %180 : vector<16x128xf32>
    %182 = vector.broadcast %161 : vector<1x128xf32> to vector<16x128xf32>
    %183 = arith.addf %181, %182 : vector<16x128xf32>
    %c0_63 = arith.constant 0 : index
    %c0_64 = arith.constant 0 : index
    %c0_65 = arith.constant 0 : index
    %184 = vector.load %arg10[%c0_63, %c0_64, %c0_65] : memref<1x128x512xf32, #tpu.memory_space<vmem>>, vector<1x128x512xf32>
    %185 = vector.shape_cast %184 : vector<1x128x512xf32> to vector<128x512xf32>
    %cst_66 = arith.constant dense<0.000000e+00> : vector<16x512xf32>
    %186 = tpu.matmul %183, %185, %cst_66 {dimension_numbers = #tpu.dot_dimension_numbers<[1], [0], [0], [1], [0, 0, 1, 1], [], []>} : vector<16x128xf32>, vector<128x512xf32>, vector<16x512xf32> -> vector<16x512xf32>
    %c0_67 = arith.constant 0 : index
    %c0_68 = arith.constant 0 : index
    %c0_69 = arith.constant 0 : index
    %187 = vector.load %arg11[%c0_67, %c0_68, %c0_69] : memref<1x1x512xf32, #tpu.memory_space<vmem>>, vector<1x1x512xf32>
    %188 = vector.shape_cast %187 : vector<1x1x512xf32> to vector<1x512xf32>
    %189 = vector.broadcast %188 : vector<1x512xf32> to vector<16x512xf32>
    %190 = arith.addf %186, %189 : vector<16x512xf32>
    %cst_70 = arith.constant 5.000000e-01 : f32
    %191 = vector.broadcast %cst_70 : f32 to vector<16x512xf32>
    %192 = arith.mulf %191, %190 : vector<16x512xf32>
    %cst_71 = arith.constant 0.707106769 : f32
    %193 = vector.broadcast %cst_71 : f32 to vector<16x512xf32>
    %194 = arith.mulf %190, %193 : vector<16x512xf32>
    %195 = math.absf %194 : vector<16x512xf32>
    %cst_72 = arith.constant 0.327591091 : f32
    %196 = vector.broadcast %cst_72 : f32 to vector<16x512xf32>
    %197 = arith.mulf %196, %195 : vector<16x512xf32>
    %cst_73 = arith.constant 1.000000e+00 : f32
    %198 = vector.broadcast %cst_73 : f32 to vector<16x512xf32>
    %199 = arith.addf %198, %197 : vector<16x512xf32>
    %cst_74 = arith.constant 1.000000e+00 : f32
    %200 = vector.broadcast %cst_74 : f32 to vector<16x512xf32>
    %201 = arith.divf %200, %199 : vector<16x512xf32>
    %cst_75 = arith.constant 1.06140542 : f32
    %202 = vector.broadcast %cst_75 : f32 to vector<16x512xf32>
    %203 = arith.mulf %202, %201 : vector<16x512xf32>
    %cst_76 = arith.constant -1.45315206 : f32
    %204 = vector.broadcast %cst_76 : f32 to vector<16x512xf32>
    %205 = arith.addf %203, %204 : vector<16x512xf32>
    %206 = arith.mulf %205, %201 : vector<16x512xf32>
    %cst_77 = arith.constant 1.42141378 : f32
    %207 = vector.broadcast %cst_77 : f32 to vector<16x512xf32>
    %208 = arith.addf %206, %207 : vector<16x512xf32>
    %209 = arith.mulf %208, %201 : vector<16x512xf32>
    %cst_78 = arith.constant -0.284496725 : f32
    %210 = vector.broadcast %cst_78 : f32 to vector<16x512xf32>
    %211 = arith.addf %209, %210 : vector<16x512xf32>
    %212 = arith.mulf %211, %201 : vector<16x512xf32>
    %cst_79 = arith.constant 0.254829586 : f32
    %213 = vector.broadcast %cst_79 : f32 to vector<16x512xf32>
    %214 = arith.addf %212, %213 : vector<16x512xf32>
    %215 = arith.mulf %214, %201 : vector<16x512xf32>
    %cst_80 = arith.constant 0.000000e+00 : f32
    %216 = vector.broadcast %cst_80 : f32 to vector<16x512xf32>
    %217 = arith.subf %216, %195 : vector<16x512xf32>
    %218 = arith.mulf %217, %195 : vector<16x512xf32>
    %219 = math.exp %218 : vector<16x512xf32>
    %220 = arith.mulf %215, %219 : vector<16x512xf32>
    %cst_81 = arith.constant 1.000000e+00 : f32
    %221 = vector.broadcast %cst_81 : f32 to vector<16x512xf32>
    %222 = arith.subf %221, %220 : vector<16x512xf32>
    %cst_82 = arith.constant 0.000000e+00 : f32
    %223 = vector.broadcast %cst_82 : f32 to vector<16x512xf32>
    %224 = arith.cmpf oge, %194, %223 : vector<16x512xf32>
    %cst_83 = arith.constant 0.000000e+00 : f32
    %225 = vector.broadcast %cst_83 : f32 to vector<16x512xf32>
    %226 = arith.subf %225, %222 : vector<16x512xf32>
    %227 = arith.select %224, %222, %226 : vector<16x512xi1>, vector<16x512xf32>
    %cst_84 = arith.constant 1.000000e+00 : f32
    %228 = vector.broadcast %cst_84 : f32 to vector<16x512xf32>
    %229 = arith.addf %228, %227 : vector<16x512xf32>
    %230 = arith.mulf %192, %229 : vector<16x512xf32>
    %c0_85 = arith.constant 0 : index
    %c0_86 = arith.constant 0 : index
    %c0_87 = arith.constant 0 : index
    %231 = vector.load %arg12[%c0_85, %c0_86, %c0_87] : memref<1x512x128xf32, #tpu.memory_space<vmem>>, vector<1x512x128xf32>
    %232 = vector.shape_cast %231 : vector<1x512x128xf32> to vector<512x128xf32>
    %cst_88 = arith.constant dense<0.000000e+00> : vector<16x128xf32>
    %233 = tpu.matmul %230, %232, %cst_88 {dimension_numbers = #tpu.dot_dimension_numbers<[1], [0], [0], [1], [0, 0, 1, 1], [], []>} : vector<16x512xf32>, vector<512x128xf32>, vector<16x128xf32> -> vector<16x128xf32>
    %c0_89 = arith.constant 0 : index
    %c0_90 = arith.constant 0 : index
    %c0_91 = arith.constant 0 : index
    %234 = vector.load %arg13[%c0_89, %c0_90, %c0_91] : memref<1x1x128xf32, #tpu.memory_space<vmem>>, vector<1x1x128xf32>
    %235 = vector.shape_cast %234 : vector<1x1x128xf32> to vector<1x128xf32>
    %236 = vector.broadcast %235 : vector<1x128xf32> to vector<16x128xf32>
    %237 = arith.addf %233, %236 : vector<16x128xf32>
    %238 = arith.addf %157, %237 : vector<16x128xf32>
    %c0_92 = arith.constant 0 : index
    %c0_93 = arith.constant 0 : index
    %239 = vector.load %arg17[%c0_92, %c0_93] : memref<16x128xf32, #tpu.memory_space<vmem>>, vector<16x128xf32>
    tpu.vector_store %arg17[%c0_92, %c0_93], %238 {strides = array<i32>} : memref<16x128xf32, #tpu.memory_space<vmem>>, vector<16x128xf32>,
    %c1_i32 = arith.constant 1 : i32
    %240 = arith.cmpi eq, %arg0, %c1_i32 : i32
    %241 = arith.extui %240 : i1 to i32
    %c0_i32_94 = arith.constant 0 : i32
    %242 = arith.cmpi ne, %241, %c0_i32_94 : i32
    scf.if %242 {
      %c0_95 = arith.constant 0 : index
      %c0_96 = arith.constant 0 : index
      %243 = vector.load %arg14[%c0_95, %c0_96] : memref<1x128xf32, #tpu.memory_space<vmem>>, vector<1x128xf32>
      %244 = vector.shape_cast %243 : vector<1x128xf32> to vector<128xf32>
      %c0_97 = arith.constant 0 : index
      %c0_98 = arith.constant 0 : index
      %245 = vector.load %arg15[%c0_97, %c0_98] : memref<1x128xf32, #tpu.memory_space<vmem>>, vector<1x128xf32>
      %246 = vector.shape_cast %245 : vector<1x128xf32> to vector<128xf32>
      %cst_99 = arith.constant dense<0.000000e+00> : vector<16xf32>
      %247 = vector.multi_reduction <add>, %238, %cst_99 [1] : vector<16x128xf32> to vector<16xf32>
      %248 = vector.shape_cast %247 : vector<16xf32> to vector<16x1xf32>
      %cst_100 = arith.constant 1.280000e+02 : f32
      %249 = vector.broadcast %cst_100 : f32 to vector<16x1xf32>
      %250 = arith.divf %248, %249 : vector<16x1xf32>
      %251 = vector.broadcast %250 : vector<16x1xf32> to vector<16x128xf32>
      %252 = arith.subf %238, %251 : vector<16x128xf32>
      %253 = arith.mulf %252, %252 : vector<16x128xf32>
      %cst_101 = arith.constant dense<0.000000e+00> : vector<16xf32>
      %254 = vector.multi_reduction <add>, %253, %cst_101 [1] : vector<16x128xf32> to vector<16xf32>
      %255 = vector.shape_cast %254 : vector<16xf32> to vector<16x1xf32>
      %cst_102 = arith.constant 1.280000e+02 : f32
      %256 = vector.broadcast %cst_102 : f32 to vector<16x1xf32>
      %257 = arith.divf %255, %256 : vector<16x1xf32>
      %258 = vector.broadcast %250 : vector<16x1xf32> to vector<16x128xf32>
      %259 = arith.subf %238, %258 : vector<16x128xf32>
      %cst_103 = arith.constant 9.99999974E-6 : f32
      %260 = vector.broadcast %cst_103 : f32 to vector<16x1xf32>
      %261 = arith.addf %257, %260 : vector<16x1xf32>
      %262 = math.rsqrt %261 : vector<16x1xf32>
      %263 = vector.broadcast %262 : vector<16x1xf32> to vector<16x128xf32>
      %264 = arith.mulf %259, %263 : vector<16x128xf32>
      %265 = vector.shape_cast %244 : vector<128xf32> to vector<1x128xf32>
      %266 = vector.broadcast %265 : vector<1x128xf32> to vector<16x128xf32>
      %267 = arith.mulf %264, %266 : vector<16x128xf32>
      %268 = vector.shape_cast %246 : vector<128xf32> to vector<1x128xf32>
      %269 = vector.broadcast %268 : vector<1x128xf32> to vector<16x128xf32>
      %270 = arith.addf %267, %269 : vector<16x128xf32>
      %c0_104 = arith.constant 0 : index
      %c0_105 = arith.constant 0 : index
      %271 = vector.load %arg16[%c0_104, %c0_105] : memref<16x128xf32, #tpu.memory_space<vmem>>, vector<16x128xf32>
      tpu.vector_store %arg16[%c0_104, %c0_105], %270 {strides = array<i32>} : memref<16x128xf32, #tpu.memory_space<vmem>>, vector<16x128xf32>,
    } else {
    }
    return
  }
  func.func @transform_0(%arg0: i32) -> (i32, i32) {
    %c0_i32 = arith.constant 0 : i32
    %c0_i32_0 = arith.constant 0 : i32
    %c0_i32_1 = arith.constant 0 : i32
    return %c0_i32, %c0_i32_0 : i32, i32
  }
  func.func @transform_1(%arg0: i32) -> (i32, i32, i32) {
    %c0_i32 = arith.constant 0 : i32
    %c0_i32_0 = arith.constant 0 : i32
    %c0_i32_1 = arith.constant 0 : i32
    return %arg0, %c0_i32, %c0_i32_0 : i32, i32, i32
  }
  func.func @transform_2(%arg0: i32) -> (i32, i32, i32) {
    %c0_i32 = arith.constant 0 : i32
    %c0_i32_0 = arith.constant 0 : i32
    %c0_i32_1 = arith.constant 0 : i32
    return %arg0, %c0_i32, %c0_i32_0 : i32, i32, i32
  }
  func.func @transform_3(%arg0: i32) -> (i32, i32, i32) {
    %c0_i32 = arith.constant 0 : i32
    %c0_i32_0 = arith.constant 0 : i32
    %c0_i32_1 = arith.constant 0 : i32
    return %arg0, %c0_i32, %c0_i32_0 : i32, i32, i32
  }
  func.func @transform_4(%arg0: i32) -> (i32, i32, i32) {
    %c0_i32 = arith.constant 0 : i32
    %c0_i32_0 = arith.constant 0 : i32
    %c0_i32_1 = arith.constant 0 : i32
    return %arg0, %c0_i32, %c0_i32_0 : i32, i32, i32
  }
  func.func @transform_5(%arg0: i32) -> (i32, i32, i32) {
    %c0_i32 = arith.constant 0 : i32
    %c0_i32_0 = arith.constant 0 : i32
    %c0_i32_1 = arith.constant 0 : i32
    return %arg0, %c0_i32, %c0_i32_0 : i32, i32, i32
  }
  func.func @transform_6(%arg0: i32) -> (i32, i32, i32) {
    %c0_i32 = arith.constant 0 : i32
    %c0_i32_0 = arith.constant 0 : i32
    %c0_i32_1 = arith.constant 0 : i32
    return %arg0, %c0_i32, %c0_i32_0 : i32, i32, i32
  }
  func.func @transform_7(%arg0: i32) -> (i32, i32, i32) {
    %c0_i32 = arith.constant 0 : i32
    %c0_i32_0 = arith.constant 0 : i32
    %c0_i32_1 = arith.constant 0 : i32
    return %arg0, %c0_i32, %c0_i32_0 : i32, i32, i32
  }
  func.func @transform_8(%arg0: i32) -> (i32, i32, i32) {
    %c0_i32 = arith.constant 0 : i32
    %c0_i32_0 = arith.constant 0 : i32
    %c0_i32_1 = arith.constant 0 : i32
    return %arg0, %c0_i32, %c0_i32_0 : i32, i32, i32
  }
  func.func @transform_9(%arg0: i32) -> (i32, i32, i32) {
    %c0_i32 = arith.constant 0 : i32
    %c0_i32_0 = arith.constant 0 : i32
    %c0_i32_1 = arith.constant 0 : i32
    return %arg0, %c0_i32, %c0_i32_0 : i32, i32, i32
  }
  func.func @transform_10(%arg0: i32) -> (i32, i32, i32) {
    %c0_i32 = arith.constant 0 : i32
    %c0_i32_0 = arith.constant 0 : i32
    %c0_i32_1 = arith.constant 0 : i32
    return %arg0, %c0_i32, %c0_i32_0 : i32, i32, i32
  }
  func.func @transform_11(%arg0: i32) -> (i32, i32, i32) {
    %c0_i32 = arith.constant 0 : i32
    %c0_i32_0 = arith.constant 0 : i32
    %c0_i32_1 = arith.constant 0 : i32
    return %arg0, %c0_i32, %c0_i32_0 : i32, i32, i32
  }
  func.func @transform_12(%arg0: i32) -> (i32, i32, i32) {
    %c0_i32 = arith.constant 0 : i32
    %c0_i32_0 = arith.constant 0 : i32
    %c0_i32_1 = arith.constant 0 : i32
    return %arg0, %c0_i32, %c0_i32_0 : i32, i32, i32
  }
  func.func @transform_13(%arg0: i32) -> (i32, i32) {
    %c0_i32 = arith.constant 0 : i32
    %c0_i32_0 = arith.constant 0 : i32
    %c0_i32_1 = arith.constant 0 : i32
    return %c0_i32, %c0_i32_0 : i32, i32
  }
  func.func @transform_14(%arg0: i32) -> (i32, i32) {
    %c0_i32 = arith.constant 0 : i32
    %c0_i32_0 = arith.constant 0 : i32
    %c0_i32_1 = arith.constant 0 : i32
    return %c0_i32, %c0_i32_0 : i32, i32
  }
  func.func @transform_15(%arg0: i32) -> (i32, i32) {
    %c0_i32 = arith.constant 0 : i32
    %c0_i32_0 = arith.constant 0 : i32
    %c0_i32_1 = arith.constant 0 : i32
    return %c0_i32, %c0_i32_0 : i32, i32
  }
}

</mosaic_0001>

<llo_original>
// kernel: tpu_custom_call.1
$region0: #{tpu_custom_call.1}
  #allocation0 [shape = 'u32[]', space=smem, size = 0x4, offset = 0x4, fixed_abs, tag = 'smem constant byte address 0x4 - core index']
  #allocation1 [shape = 'u32[72,128]{1,0:T(1,128)}', space=vmem, size = 0x9000, scoped, tag = 'internal scratch']
  #allocation2 [shape = 'f32[16,128]{1,0:T(8,128)}', space=vmem, size = 0x2000, scoped, tag = 'scratch operand']
  %s0 = inlined_call_operand.hbm [shape: f32[16,128], index: 0, kind: input, shape index: {}]
  %s1 = inlined_call_operand.hbm [shape: f32[2,1,128], index: 1, kind: input, shape index: {}]
  %s2 = inlined_call_operand.hbm [shape: f32[2,1,128], index: 2, kind: input, shape index: {}]
  %s3 = inlined_call_operand.hbm [shape: f32[2,128,384], index: 3, kind: input, shape index: {}]
  %s4 = inlined_call_operand.hbm [shape: f32[2,1,384], index: 4, kind: input, shape index: {}]
  %s5 = inlined_call_operand.hbm [shape: f32[2,128,128], index: 5, kind: input, shape index: {}]
  %s6 = inlined_call_operand.hbm [shape: f32[2,1,128], index: 6, kind: input, shape index: {}]
  %s7 = inlined_call_operand.hbm [shape: f32[2,1,128], index: 7, kind: input, shape index: {}]
  %s8 = inlined_call_operand.hbm [shape: f32[2,1,128], index: 8, kind: input, shape index: {}]
  %s9 = inlined_call_operand.hbm [shape: f32[2,128,512], index: 9, kind: input, shape index: {}]
  %s10 = inlined_call_operand.vmem [shape: f32[2,1,512], index: 10, kind: input, shape index: {}]
  %s11 = inlined_call_operand.hbm [shape: f32[2,512,128], index: 11, kind: input, shape index: {}]
  %s12 = inlined_call_operand.vmem [shape: f32[2,1,128], index: 12, kind: input, shape index: {}]
  %s13 = inlined_call_operand.vmem [shape: f32[1,128], index: 13, kind: input, shape index: {}]
  %s14 = inlined_call_operand.vmem [shape: f32[1,128], index: 14, kind: input, shape index: {}]
  %s15 = inlined_call_operand.hbm [shape: f32[16,128], index: 15, kind: output, shape index: {}]
  %s16 = sld [smem:[#allocation0]]
  $region145: #{tpu_custom_call.1} parent=0
    _
  %s18 = ssub.s32 1, %s16
  %s19 = scalar_select 0, %s18, %s16
  $region1: #{tpu_custom_call.1} parent=0
    #allocation3 [shape = 'u8[8192]{0}', space=vmem, size = 0x2000, scoped, tag = 'input window, operand 0, single buffered']
    #allocation4 [shape = 's32[2]{0}', space=sflag, size = 0x8, scoped, tag = 'scoped memory for tpu_custom_call.1']
    #allocation5 [shape = 's32[2]{0}', space=sflag, size = 0x8, scoped, tag = 'scoped memory for tpu_custom_call.1']
    #allocation6 [shape = 'u8[1024]{0}', space=vmem, size = 0x400, scoped, tag = 'input window, operand 1']
    #allocation7 [shape = 's32[2]{0}', space=sflag, size = 0x8, scoped, tag = 'scoped memory for tpu_custom_call.1']
    #allocation8 [shape = 'u8[1024]{0}', space=vmem, size = 0x400, scoped, tag = 'input window, operand 2']
    #allocation9 [shape = 'u8[393216]{0}', space=vmem, size = 0x60000, scoped, tag = 'input window, operand 3']
    #allocation10 [shape = 's32[2]{0}', space=sflag, size = 0x8, scoped, tag = 'scoped memory for tpu_custom_call.1']
    #allocation11 [shape = 'u8[3072]{0}', space=vmem, size = 0xc00, scoped, tag = 'input window, operand 4']
    #allocation12 [shape = 'u8[131072]{0}', space=vmem, size = 0x20000, scoped, tag = 'input window, operand 5']
    #allocation13 [shape = 's32[2]{0}', space=sflag, size = 0x8, scoped, tag = 'scoped memory for tpu_custom_call.1']
    #allocation14 [shape = 'u8[1024]{0}', space=vmem, size = 0x400, scoped, tag = 'input window, operand 6']
    #allocation15 [shape = 'u8[1024]{0}', space=vmem, size = 0x400, scoped, tag = 'input window, operand 7']
    #allocation16 [shape = 's32[2]{0}', space=sflag, size = 0x8, scoped, tag = 'scoped memory for tpu_custom_call.1']
    #allocation17 [shape = 'u8[1024]{0}', space=vmem, size = 0x400, scoped, tag = 'input window, operand 8']
    #allocation18 [shape = 'u8[524288]{0}', space=vmem, size = 0x80000, scoped, tag = 'input window, operand 9']
    #allocation19 [shape = 's32[2]{0}', space=sflag, size = 0x8, scoped, tag = 'scoped memory for tpu_custom_call.1']
    #allocation20 [shape = 'u8[524288]{0}', space=vmem, size = 0x80000, scoped, tag = 'input window, operand 11']
    #allocation21 [shape = 'u8[8192]{0}', space=vmem, size = 0x2000, scoped, tag = 'output window, operand 0, single buffered']
    %20 = vsyncpa [#allocation4], 0
    %21 = vsyncpa [#allocation7], 0
    %s22 = scalar_lea.sflag [#allocation7], 1
    %23 = vsyncpa %s22, 0
    %24 = vsyncpa [#allocation10], 0
    %s25 = scalar_lea.sflag [#allocation10], 1
    %26 = vsyncpa %s25, 0
    %27 = vsyncpa [#allocation13], 0
    %s28 = scalar_lea.sflag [#allocation13], 1
    %29 = vsyncpa %s28, 0
    %30 = vsyncpa [#allocation16], 0
    %s31 = scalar_lea.sflag [#allocation16], 1
    %32 = vsyncpa %s31, 0
    %33 = vsyncpa [#allocation19], 0
    %s34 = scalar_lea.sflag [#allocation19], 1
    %35 = vsyncpa %s34, 0
    %36 = vsyncpa [#allocation5], 0
    loop: start=0, step=1, limit=4
    $region2: #{tpu_custom_call.1} parent=1 // loop_pre_header
      _
    $region3: #{tpu_custom_call.1} parent=1 // loop_header
      %s38 = sphi 0, %s42
      %p39 = scmp.ge.s32.totalorder %s38, 4
      %s46 = sphi 0, %s46
      %s48 = sphi 0, %s46
      %s49 = sphi 0, %s48
      %s63 = sphi 0, %s49
      %s69 = sphi 0, %s71
      %s72 = sphi 0, %s69
      %s73 = sphi 0, %s72
      %s89 = sphi 0, %s73
      %s95 = sphi 0, %s97
      %s98 = sphi 0, %s95
      %s99 = sphi 0, %s98
      %s115 = sphi 0, %s99
      %s121 = sphi 0, %s123
      %s124 = sphi 0, %s121
      %s125 = sphi 0, %s124
      %s141 = sphi 0, %s125
      %s147 = sphi 0, %s149
      %s150 = sphi 0, %s147
      %s151 = sphi 0, %s150
      %s167 = sphi 0, %s151
      %s173 = sphi 0, %s175
      %s176 = sphi 0, %s173
      %s177 = sphi 0, %s176
      %s193 = sphi 0, %s177
      %s199 = sphi 0, %s201
      %s202 = sphi 0, %s199
      %s203 = sphi 0, %s202
      %s219 = sphi 0, %s203
      %s225 = sphi 0, %s227
      %s228 = sphi 0, %s225
      %s229 = sphi 0, %s228
      %s245 = sphi 0, %s229
      %s251 = sphi 0, %s253
      %s254 = sphi 0, %s251
      %s255 = sphi 0, %s254
      %s271 = sphi 0, %s255
      %s277 = sphi 0, %s279
      %s280 = sphi 0, %s277
      %s281 = sphi 0, %s280
      %s297 = sphi 0, %s281
      %s303 = sphi 0, %s305
      %s306 = sphi 0, %s303
      %s307 = sphi 0, %s306
      %s323 = sphi 0, %s307
      %s329 = sphi 0, %s331
      %s332 = sphi 0, %s329
      %s333 = sphi 0, %s332
      %s349 = sphi 0, %s333
      %s355 = sphi 0, %s357
      %s358 = sphi 0, %s355
      %s359 = sphi 0, %s358
      %s375 = sphi 0, %s359
      %s379 = sphi 0, %s379
      %s381 = sphi 0, %s379
      %s382 = sphi 0, %s381
      %s396 = sphi 0, %s382
      %s400 = sphi 0, %s400
      %s402 = sphi 0, %s400
      %s403 = sphi 0, %s402
      %s417 = sphi 0, %s403
      %s421 = sphi 0, %s421
      %s423 = sphi 0, %s421
      %s424 = sphi 0, %s423
      %s438 = sphi 0, %s424
    $region4: #{tpu_custom_call.1} parent=1 // loop_header_branch
      %41 = sbr.rel (%p39) target = $region8
    $region5: #{tpu_custom_call.1} parent=1 // loop_body
      %s43 = ssub.s32 %s38, 1
      %s44 = ssub.s32 %s38, 2
      %s45 = sadd.s32 %s38, 1
      %s47 = sadd.s32 %s46, 1
      %p50 = scmp.eq.s32.totalorder %s38, 1
      %p51 = scmp.ne.s32.totalorder %s46, %s48
      %p52 = scmp.eq.s32.totalorder %s38, 0
      %p53 = por %p51, %p52
      %p54 = scmp.ne.s32.totalorder %s46, %s48
      %p55 = scmp.eq.s32.totalorder %s43, 1
      %p56 = por %p54, %p55
      %p57 = scmp.ne.s32.totalorder %s48, %s49
      %p58 = scmp.eq.s32.totalorder %s43, 0
      %p59 = por %p57, %p58
      %p60 = scmp.ne.s32.totalorder %s48, %s49
      %p61 = scmp.eq.s32.totalorder %s44, 1
      %p62 = por %p60, %p61
      %p64 = scmp.ne.s32.totalorder %s49, %s63
      %p65 = scmp.eq.s32.totalorder %s44, 0
      %p66 = por %p64, %p65
      %s67 = ssub.s32 %s38, %s45
      %p68 = scmp.eq.s32.totalorder %s67, 0
      %s70 = sadd.s32 %s69, 1
      %s71 = scalar_select %p68, %s69, %s70
      %p74 = pneg %p68
      %p75 = scmp.eq.s32.totalorder %s38, 1
      %p76 = por %p74, %p75
      %p77 = scmp.ne.s32.totalorder %s69, %s72
      %p78 = scmp.eq.s32.totalorder %s38, 0
      %p79 = por %p77, %p78
      %p80 = scmp.ne.s32.totalorder %s69, %s72
      %p81 = scmp.eq.s32.totalorder %s43, 1
      %p82 = por %p80, %p81
      %p83 = scmp.ne.s32.totalorder %s72, %s73
      %p84 = scmp.eq.s32.totalorder %s43, 0
      %p85 = por %p83, %p84
      %p86 = scmp.ne.s32.totalorder %s72, %s73
      %p87 = scmp.eq.s32.totalorder %s44, 1
      %p88 = por %p86, %p87
      %p90 = scmp.ne.s32.totalorder %s73, %s89
      %p91 = scmp.eq.s32.totalorder %s44, 0
      %p92 = por %p90, %p91
      %s93 = ssub.s32 %s38, %s45
      %p94 = scmp.eq.s32.totalorder %s93, 0
      %s96 = sadd.s32 %s95, 1
      %s97 = scalar_select %p94, %s95, %s96
      %p100 = pneg %p94
      %p101 = scmp.eq.s32.totalorder %s38, 1
      %p102 = por %p100, %p101
      %p103 = scmp.ne.s32.totalorder %s95, %s98
      %p104 = scmp.eq.s32.totalorder %s38, 0
      %p105 = por %p103, %p104
      %p106 = scmp.ne.s32.totalorder %s95, %s98
      %p107 = scmp.eq.s32.totalorder %s43, 1
      %p108 = por %p106, %p107
      %p109 = scmp.ne.s32.totalorder %s98, %s99
      %p110 = scmp.eq.s32.totalorder %s43, 0
      %p111 = por %p109, %p110
      %p112 = scmp.ne.s32.totalorder %s98, %s99
      %p113 = scmp.eq.s32.totalorder %s44, 1
      %p114 = por %p112, %p113
      %p116 = scmp.ne.s32.totalorder %s99, %s115
      %p117 = scmp.eq.s32.totalorder %s44, 0
      %p118 = por %p116, %p117
      %s119 = ssub.s32 %s38, %s45
      %p120 = scmp.eq.s32.totalorder %s119, 0
      %s122 = sadd.s32 %s121, 1
      %s123 = scalar_select %p120, %s121, %s122
      %p126 = pneg %p120
      %p127 = scmp.eq.s32.totalorder %s38, 1
      %p128 = por %p126, %p127
      %p129 = scmp.ne.s32.totalorder %s121, %s124
      %p130 = scmp.eq.s32.totalorder %s38, 0
      %p131 = por %p129, %p130
      %p132 = scmp.ne.s32.totalorder %s121, %s124
      %p133 = scmp.eq.s32.totalorder %s43, 1
      %p134 = por %p132, %p133
      %p135 = scmp.ne.s32.totalorder %s124, %s125
      %p136 = scmp.eq.s32.totalorder %s43, 0
      %p137 = por %p135, %p136
      %p138 = scmp.ne.s32.totalorder %s124, %s125
      %p139 = scmp.eq.s32.totalorder %s44, 1
      %p140 = por %p138, %p139
      %p142 = scmp.ne.s32.totalorder %s125, %s141
      %p143 = scmp.eq.s32.totalorder %s44, 0
      %p144 = por %p142, %p143
      %s145 = ssub.s32 %s38, %s45
      %p146 = scmp.eq.s32.totalorder %s145, 0
      %s148 = sadd.s32 %s147, 1
      %s149 = scalar_select %p146, %s147, %s148
      %p152 = pneg %p146
      %p153 = scmp.eq.s32.totalorder %s38, 1
      %p154 = por %p152, %p153
      %p155 = scmp.ne.s32.totalorder %s147, %s150
      %p156 = scmp.eq.s32.totalorder %s38, 0
      %p157 = por %p155, %p156
      %p158 = scmp.ne.s32.totalorder %s147, %s150
      %p159 = scmp.eq.s32.totalorder %s43, 1
      %p160 = por %p158, %p159
      %p161 = scmp.ne.s32.totalorder %s150, %s151
      %p162 = scmp.eq.s32.totalorder %s43, 0
      %p163 = por %p161, %p162
      %p164 = scmp.ne.s32.totalorder %s150, %s151
      %p165 = scmp.eq.s32.totalorder %s44, 1
      %p166 = por %p164, %p165
      %p168 = scmp.ne.s32.totalorder %s151, %s167
      %p169 = scmp.eq.s32.totalorder %s44, 0
      %p170 = por %p168, %p169
      %s171 = ssub.s32 %s38, %s45
      %p172 = scmp.eq.s32.totalorder %s171, 0
      %s174 = sadd.s32 %s173, 1
      %s175 = scalar_select %p172, %s173, %s174
      %p178 = pneg %p172
      %p179 = scmp.eq.s32.totalorder %s38, 1
      %p180 = por %p178, %p179
      %p181 = scmp.ne.s32.totalorder %s173, %s176
      %p182 = scmp.eq.s32.totalorder %s38, 0
      %p183 = por %p181, %p182
      %p184 = scmp.ne.s32.totalorder %s173, %s176
      %p185 = scmp.eq.s32.totalorder %s43, 1
      %p186 = por %p184, %p185
      %p187 = scmp.ne.s32.totalorder %s176, %s177
      %p188 = scmp.eq.s32.totalorder %s43, 0
      %p189 = por %p187, %p188
      %p190 = scmp.ne.s32.totalorder %s176, %s177
      %p191 = scmp.eq.s32.totalorder %s44, 1
      %p192 = por %p190, %p191
      %p194 = scmp.ne.s32.totalorder %s177, %s193
      %p195 = scmp.eq.s32.totalorder %s44, 0
      %p196 = por %p194, %p195
      %s197 = ssub.s32 %s38, %s45
      %p198 = scmp.eq.s32.totalorder %s197, 0
      %s200 = sadd.s32 %s199, 1
      %s201 = scalar_select %p198, %s199, %s200
      %p204 = pneg %p198
      %p205 = scmp.eq.s32.totalorder %s38, 1
      %p206 = por %p204, %p205
      %p207 = scmp.ne.s32.totalorder %s199, %s202
      %p208 = scmp.eq.s32.totalorder %s38, 0
      %p209 = por %p207, %p208
      %p210 = scmp.ne.s32.totalorder %s199, %s202
      %p211 = scmp.eq.s32.totalorder %s43, 1
      %p212 = por %p210, %p211
      %p213 = scmp.ne.s32.totalorder %s202, %s203
      %p214 = scmp.eq.s32.totalorder %s43, 0
      %p215 = por %p213, %p214
      %p216 = scmp.ne.s32.totalorder %s202, %s203
      %p217 = scmp.eq.s32.totalorder %s44, 1
      %p218 = por %p216, %p217
      %p220 = scmp.ne.s32.totalorder %s203, %s219
      %p221 = scmp.eq.s32.totalorder %s44, 0
      %p222 = por %p220, %p221
      %s223 = ssub.s32 %s38, %s45
      %p224 = scmp.eq.s32.totalorder %s223, 0
      %s226 = sadd.s32 %s225, 1
      %s227 = scalar_select %p224, %s225, %s226
      %p230 = pneg %p224
      %p231 = scmp.eq.s32.totalorder %s38, 1
      %p232 = por %p230, %p231
      %p233 = scmp.ne.s32.totalorder %s225, %s228
      %p234 = scmp.eq.s32.totalorder %s38, 0
      %p235 = por %p233, %p234
      %p236 = scmp.ne.s32.totalorder %s225, %s228
      %p237 = scmp.eq.s32.totalorder %s43, 1
      %p238 = por %p236, %p237
      %p239 = scmp.ne.s32.totalorder %s228, %s229
      %p240 = scmp.eq.s32.totalorder %s43, 0
      %p241 = por %p239, %p240
      %p242 = scmp.ne.s32.totalorder %s228, %s229
      %p243 = scmp.eq.s32.totalorder %s44, 1
      %p244 = por %p242, %p243
      %p246 = scmp.ne.s32.totalorder %s229, %s245
      %p247 = scmp.eq.s32.totalorder %s44, 0
      %p248 = por %p246, %p247
      %s249 = ssub.s32 %s38, %s45
      %p250 = scmp.eq.s32.totalorder %s249, 0
      %s252 = sadd.s32 %s251, 1
      %s253 = scalar_select %p250, %s251, %s252
      %p256 = pneg %p250
      %p257 = scmp.eq.s32.totalorder %s38, 1
      %p258 = por %p256, %p257
      %p259 = scmp.ne.s32.totalorder %s251, %s254
      %p260 = scmp.eq.s32.totalorder %s38, 0
      %p261 = por %p259, %p260
      %p262 = scmp.ne.s32.totalorder %s251, %s254
      %p263 = scmp.eq.s32.totalorder %s43, 1
      %p264 = por %p262, %p263
      %p265 = scmp.ne.s32.totalorder %s254, %s255
      %p266 = scmp.eq.s32.totalorder %s43, 0
      %p267 = por %p265, %p266
      %p268 = scmp.ne.s32.totalorder %s254, %s255
      %p269 = scmp.eq.s32.totalorder %s44, 1
      %p270 = por %p268, %p269
      %p272 = scmp.ne.s32.totalorder %s255, %s271
      %p273 = scmp.eq.s32.totalorder %s44, 0
      %p274 = por %p272, %p273
      %s275 = ssub.s32 %s38, %s45
      %p276 = scmp.eq.s32.totalorder %s275, 0
      %s278 = sadd.s32 %s277, 1
      %s279 = scalar_select %p276, %s277, %s278
      %p282 = pneg %p276
      %p283 = scmp.eq.s32.totalorder %s38, 1
      %p284 = por %p282, %p283
      %p285 = scmp.ne.s32.totalorder %s277, %s280
      %p286 = scmp.eq.s32.totalorder %s38, 0
      %p287 = por %p285, %p286
      %p288 = scmp.ne.s32.totalorder %s277, %s280
      %p289 = scmp.eq.s32.totalorder %s43, 1
      %p290 = por %p288, %p289
      %p291 = scmp.ne.s32.totalorder %s280, %s281
      %p292 = scmp.eq.s32.totalorder %s43, 0
      %p293 = por %p291, %p292
      %p294 = scmp.ne.s32.totalorder %s280, %s281
      %p295 = scmp.eq.s32.totalorder %s44, 1
      %p296 = por %p294, %p295
      %p298 = scmp.ne.s32.totalorder %s281, %s297
      %p299 = scmp.eq.s32.totalorder %s44, 0
      %p300 = por %p298, %p299
      %s301 = ssub.s32 %s38, %s45
      %p302 = scmp.eq.s32.totalorder %s301, 0
      %s304 = sadd.s32 %s303, 1
      %s305 = scalar_select %p302, %s303, %s304
      %p308 = pneg %p302
      %p309 = scmp.eq.s32.totalorder %s38, 1
      %p310 = por %p308, %p309
      %p311 = scmp.ne.s32.totalorder %s303, %s306
      %p312 = scmp.eq.s32.totalorder %s38, 0
      %p313 = por %p311, %p312
      %p314 = scmp.ne.s32.totalorder %s303, %s306
      %p315 = scmp.eq.s32.totalorder %s43, 1
      %p316 = por %p314, %p315
      %p317 = scmp.ne.s32.totalorder %s306, %s307
      %p318 = scmp.eq.s32.totalorder %s43, 0
      %p319 = por %p317, %p318
      %p320 = scmp.ne.s32.totalorder %s306, %s307
      %p321 = scmp.eq.s32.totalorder %s44, 1
      %p322 = por %p320, %p321
      %p324 = scmp.ne.s32.totalorder %s307, %s323
      %p325 = scmp.eq.s32.totalorder %s44, 0
      %p326 = por %p324, %p325
      %s327 = ssub.s32 %s38, %s45
      %p328 = scmp.eq.s32.totalorder %s327, 0
      %s330 = sadd.s32 %s329, 1
      %s331 = scalar_select %p328, %s329, %s330
      %p334 = pneg %p328
      %p335 = scmp.eq.s32.totalorder %s38, 1
      %p336 = por %p334, %p335
      %p337 = scmp.ne.s32.totalorder %s329, %s332
      %p338 = scmp.eq.s32.totalorder %s38, 0
      %p339 = por %p337, %p338
      %p340 = scmp.ne.s32.totalorder %s329, %s332
      %p341 = scmp.eq.s32.totalorder %s43, 1
      %p342 = por %p340, %p341
      %p343 = scmp.ne.s32.totalorder %s332, %s333
      %p344 = scmp.eq.s32.totalorder %s43, 0
      %p345 = por %p343, %p344
      %p346 = scmp.ne.s32.totalorder %s332, %s333
      %p347 = scmp.eq.s32.totalorder %s44, 1
      %p348 = por %p346, %p347
      %p350 = scmp.ne.s32.totalorder %s333, %s349
      %p351 = scmp.eq.s32.totalorder %s44, 0
      %p352 = por %p350, %p351
      %s353 = ssub.s32 %s38, %s45
      %p354 = scmp.eq.s32.totalorder %s353, 0
      %s356 = sadd.s32 %s355, 1
      %s357 = scalar_select %p354, %s355, %s356
      %p360 = pneg %p354
      %p361 = scmp.eq.s32.totalorder %s38, 1
      %p362 = por %p360, %p361
      %p363 = scmp.ne.s32.totalorder %s355, %s358
      %p364 = scmp.eq.s32.totalorder %s38, 0
      %p365 = por %p363, %p364
      %p366 = scmp.ne.s32.totalorder %s355, %s358
      %p367 = scmp.eq.s32.totalorder %s43, 1
      %p368 = por %p366, %p367
      %p369 = scmp.ne.s32.totalorder %s358, %s359
      %p370 = scmp.eq.s32.totalorder %s43, 0
      %p371 = por %p369, %p370
      %p372 = scmp.ne.s32.totalorder %s358, %s359
      %p373 = scmp.eq.s32.totalorder %s44, 1
      %p374 = por %p372, %p373
      %p376 = scmp.ne.s32.totalorder %s359, %s375
      %p377 = scmp.eq.s32.totalorder %s44, 0
      %p378 = por %p376, %p377
      %s380 = sadd.s32 %s379, 1
      %p383 = scmp.eq.s32.totalorder %s38, 1
      %p384 = scmp.ne.s32.totalorder %s379, %s381
      %p385 = scmp.eq.s32.totalorder %s38, 0
      %p386 = por %p384, %p385
      %p387 = scmp.ne.s32.totalorder %s379, %s381
      %p388 = scmp.eq.s32.totalorder %s43, 1
      %p389 = por %p387, %p388
      %p390 = scmp.ne.s32.totalorder %s381, %s382
      %p391 = scmp.eq.s32.totalorder %s43, 0
      %p392 = por %p390, %p391
      %p393 = scmp.ne.s32.totalorder %s381, %s382
      %p394 = scmp.eq.s32.totalorder %s44, 1
      %p395 = por %p393, %p394
      %p397 = scmp.ne.s32.totalorder %s382, %s396
      %p398 = scmp.eq.s32.totalorder %s44, 0
      %p399 = por %p397, %p398
      %s401 = sadd.s32 %s400, 1
      %p404 = scmp.eq.s32.totalorder %s38, 1
      %p405 = scmp.ne.s32.totalorder %s400, %s402
      %p406 = scmp.eq.s32.totalorder %s38, 0
      %p407 = por %p405, %p406
      %p408 = scmp.ne.s32.totalorder %s400, %s402
      %p409 = scmp.eq.s32.totalorder %s43, 1
      %p410 = por %p408, %p409
      %p411 = scmp.ne.s32.totalorder %s402, %s403
      %p412 = scmp.eq.s32.totalorder %s43, 0
      %p413 = por %p411, %p412
      %p414 = scmp.ne.s32.totalorder %s402, %s403
      %p415 = scmp.eq.s32.totalorder %s44, 1
      %p416 = por %p414, %p415
      %p418 = scmp.ne.s32.totalorder %s403, %s417
      %p419 = scmp.eq.s32.totalorder %s44, 0
      %p420 = por %p418, %p419
      %s422 = sadd.s32 %s421, 1
      %p425 = scmp.eq.s32.totalorder %s38, 1
      %p426 = scmp.ne.s32.totalorder %s421, %s423
      %p427 = scmp.eq.s32.totalorder %s38, 0
      %p428 = por %p426, %p427
      %p429 = scmp.ne.s32.totalorder %s421, %s423
      %p430 = scmp.eq.s32.totalorder %s43, 1
      %p431 = por %p429, %p430
      %p432 = scmp.ne.s32.totalorder %s423, %s424
      %p433 = scmp.eq.s32.totalorder %s43, 0
      %p434 = por %p432, %p433
      %p435 = scmp.ne.s32.totalorder %s423, %s424
      %p436 = scmp.eq.s32.totalorder %s44, 1
      %p437 = por %p435, %p436
      %p439 = scmp.ne.s32.totalorder %s424, %s438
      %p440 = scmp.eq.s32.totalorder %s44, 0
      %p441 = por %p439, %p440
      %p442 = scmp.le.s32.totalorder 1, %s38
      %p443 = scmp.lt.s32.totalorder %s38, 3
      %p444 = pnand %p442, %p443
      %p445 = pneg %p444
      // Predicated region
      $region9: #{tpu_custom_call.1} parent=5 // pred_check
        _
      $region10: #{tpu_custom_call.1} parent=5 // pred_check_branch
        %447 = sbr.rel (%p444) target = $region12
      $region11: #{tpu_custom_call.1} parent=5 // pred_region
        %s448 = ssub.s32 %s38, 1
        // Predicated region
        $region13: #{tpu_custom_call.1} parent=11 // pred_check
          %p449 = pneg %p59
        $region14: #{tpu_custom_call.1} parent=11 // pred_check_branch
          %451 = sbr.rel (%p449) target = $region16
        $region15: #{tpu_custom_call.1} parent=11 // pred_region
          %453 = vsyncadd [#allocation4], 0
          %s454 = sshll.u32 %s0, 4
          %s455 = int_to_ptr.hbm [resolvable:$true] %s454
          %s456 = sshll.u32 [#allocation3], 4
          %s457 = int_to_ptr.vmem [resolvable:$true] %s456
          %462 = dma.hbm_to_vmem [thread:$0]  %s455, 256, %s457, [#allocation4], 128, 128, 8
        $region16: #{tpu_custom_call.1} parent=11 // pred_fallthru
          _
        // Predicated region
        $region17: #{tpu_custom_call.1} parent=11 // pred_check
          %p463 = pneg %p392
        $region18: #{tpu_custom_call.1} parent=11 // pred_check_branch
          %465 = sbr.rel (%p463) target = $region20
        $region19: #{tpu_custom_call.1} parent=11 // pred_region
          _
        $region20: #{tpu_custom_call.1} parent=11 // pred_fallthru
          _
        // Predicated region
        $region21: #{tpu_custom_call.1} parent=11 // pred_check
          %p466 = pneg %p413
        $region22: #{tpu_custom_call.1} parent=11 // pred_check_branch
          %468 = sbr.rel (%p466) target = $region24
        $region23: #{tpu_custom_call.1} parent=11 // pred_region
          _
        $region24: #{tpu_custom_call.1} parent=11 // pred_fallthru
          _
      $region12: #{tpu_custom_call.1} parent=5 // pred_fallthru
        _
      %p469 = scmp.lt.s32.totalorder %s38, 2
      // Predicated region
      $region25: #{tpu_custom_call.1} parent=5 // pred_check
        %p470 = pneg %p469
      $region26: #{tpu_custom_call.1} parent=5 // pred_check_branch
        %472 = sbr.rel (%p470) target = $region28
      $region27: #{tpu_custom_call.1} parent=5 // pred_region
        // Predicated region
        $region29: #{tpu_custom_call.1} parent=27 // pred_check
          %p473 = pneg %p79
        $region30: #{tpu_custom_call.1} parent=27 // pred_check_branch
          %475 = sbr.rel (%p473) target = $region32
        $region31: #{tpu_custom_call.1} parent=27 // pred_region
          %s476 = sand.u32 %s38, 1
          %s477 = scalar_lea.sflag [#allocation7], %s476
          %s478 = sand.u32 %s69, 1
          %s479 = scalar_lea.vmem [#allocation6], %s478
          %481 = vsyncadd %s477, 0
          %s482 = scalar_lea.hbm %s1, %s38
          %s484 = sshll.u32 %s482, 4
          %s485 = int_to_ptr.hbm [resolvable:$true] %s484
          %s486 = sshll.u32 %s479, 4
          %s487 = int_to_ptr.vmem [resolvable:$true] %s486
          %489 = dma.hbm_to_vmem [thread:$0]  %s485, 16, %s487, %s477
        $region32: #{tpu_custom_call.1} parent=27 // pred_fallthru
          _
        // Predicated region
        $region33: #{tpu_custom_call.1} parent=27 // pred_check
          %p490 = pneg %p105
        $region34: #{tpu_custom_call.1} parent=27 // pred_check_branch
          %492 = sbr.rel (%p490) target = $region36
        $region35: #{tpu_custom_call.1} parent=27 // pred_region
          %s493 = sand.u32 %s38, 1
          %s494 = scalar_lea.sflag [#allocation7], %s493
          %s495 = sand.u32 %s95, 1
          %s496 = scalar_lea.vmem [#allocation8], %s495
          %498 = vsyncadd %s494, 0
          %s499 = scalar_lea.hbm %s2, %s38
          %s501 = sshll.u32 %s499, 4
          %s502 = int_to_ptr.hbm [resolvable:$true] %s501
          %s503 = sshll.u32 %s496, 4
          %s504 = int_to_ptr.vmem [resolvable:$true] %s503
          %506 = dma.hbm_to_vmem [thread:$0]  %s502, 16, %s504, %s494
        $region36: #{tpu_custom_call.1} parent=27 // pred_fallthru
          _
        // Predicated region
        $region37: #{tpu_custom_call.1} parent=27 // pred_check
          %p507 = pneg %p131
        $region38: #{tpu_custom_call.1} parent=27 // pred_check_branch
          %509 = sbr.rel (%p507) target = $region40
        $region39: #{tpu_custom_call.1} parent=27 // pred_region
          %s510 = sand.u32 %s38, 1
          %s511 = scalar_lea.sflag [#allocation10], %s510
          %s512 = sand.u32 %s121, 1
          %s513 = smul.addr %s512, 384
          %s514 = scalar_lea.vmem [#allocation9], %s513
          %516 = vsyncadd %s511, 0
          %s517 = smul.addr %s38, 48
          %s518 = smul.addr %s517, 8
          %s519 = scalar_lea.hbm %s3, %s518
          %s520 = sshll.u32 %s519, 4
          %s521 = int_to_ptr.hbm [resolvable:$true] %s520
          %s522 = sshll.u32 %s514, 4
          %s523 = int_to_ptr.vmem [resolvable:$true] %s522
          %528 = dma.hbm_to_vmem [thread:$0]  %s521, 6144, %s523, %s511, 384, 384, 24
        $region40: #{tpu_custom_call.1} parent=27 // pred_fallthru
          _
        // Predicated region
        $region41: #{tpu_custom_call.1} parent=27 // pred_check
          %p529 = pneg %p157
        $region42: #{tpu_custom_call.1} parent=27 // pred_check_branch
          %531 = sbr.rel (%p529) target = $region44
        $region43: #{tpu_custom_call.1} parent=27 // pred_region
          %s532 = sand.u32 %s38, 1
          %s533 = scalar_lea.sflag [#allocation10], %s532
          %s534 = sand.u32 %s147, 1
          %s535 = smul.addr %s534, 3
          %s536 = scalar_lea.vmem [#allocation11], %s535
          %538 = vsyncadd %s533, 0
          %s539 = smul.addr %s38, 3
          %s540 = scalar_lea.hbm %s4, %s539
          %s542 = sshll.u32 %s540, 4
          %s543 = int_to_ptr.hbm [resolvable:$true] %s542
          %s544 = sshll.u32 %s536, 4
          %s545 = int_to_ptr.vmem [resolvable:$true] %s544
          %547 = dma.hbm_to_vmem [thread:$0]  %s543, 48, %s545, %s533
        $region44: #{tpu_custom_call.1} parent=27 // pred_fallthru
          _
        // Predicated region
        $region45: #{tpu_custom_call.1} parent=27 // pred_check
          %p548 = pneg %p183
        $region46: #{tpu_custom_call.1} parent=27 // pred_check_branch
          %550 = sbr.rel (%p548) target = $region48
        $region47: #{tpu_custom_call.1} parent=27 // pred_region
          %s551 = sand.u32 %s38, 1
          %s552 = scalar_lea.sflag [#allocation13], %s551
          %s553 = sand.u32 %s173, 1
          %s554 = smul.addr %s553, 128
          %s555 = scalar_lea.vmem [#allocation12], %s554
          %557 = vsyncadd %s552, 0
          %s558 = smul.addr %s38, 16
          %s559 = smul.addr %s558, 8
          %s560 = scalar_lea.hbm %s5, %s559
          %s561 = sshll.u32 %s560, 4
          %s562 = int_to_ptr.hbm [resolvable:$true] %s561
          %s563 = sshll.u32 %s555, 4
          %s564 = int_to_ptr.vmem [resolvable:$true] %s563
          %569 = dma.hbm_to_vmem [thread:$0]  %s562, 2048, %s564, %s552, 128, 128, 8
        $region48: #{tpu_custom_call.1} parent=27 // pred_fallthru
          _
        // Predicated region
        $region49: #{tpu_custom_call.1} parent=27 // pred_check
          %p570 = pneg %p209
        $region50: #{tpu_custom_call.1} parent=27 // pred_check_branch
          %572 = sbr.rel (%p570) target = $region52
        $region51: #{tpu_custom_call.1} parent=27 // pred_region
          %s573 = sand.u32 %s38, 1
          %s574 = scalar_lea.sflag [#allocation13], %s573
          %s575 = sand.u32 %s199, 1
          %s576 = scalar_lea.vmem [#allocation14], %s575
          %578 = vsyncadd %s574, 0
          %s579 = scalar_lea.hbm %s6, %s38
          %s581 = sshll.u32 %s579, 4
          %s582 = int_to_ptr.hbm [resolvable:$true] %s581
          %s583 = sshll.u32 %s576, 4
          %s584 = int_to_ptr.vmem [resolvable:$true] %s583
          %586 = dma.hbm_to_vmem [thread:$0]  %s582, 16, %s584, %s574
        $region52: #{tpu_custom_call.1} parent=27 // pred_fallthru
          _
        // Predicated region
        $region53: #{tpu_custom_call.1} parent=27 // pred_check
          %p587 = pneg %p235
        $region54: #{tpu_custom_call.1} parent=27 // pred_check_branch
          %589 = sbr.rel (%p587) target = $region56
        $region55: #{tpu_custom_call.1} parent=27 // pred_region
          %s590 = sand.u32 %s38, 1
          %s591 = scalar_lea.sflag [#allocation16], %s590
          %s592 = sand.u32 %s225, 1
          %s593 = scalar_lea.vmem [#allocation15], %s592
          %595 = vsyncadd %s591, 0
          %s596 = scalar_lea.hbm %s7, %s38
          %s598 = sshll.u32 %s596, 4
          %s599 = int_to_ptr.hbm [resolvable:$true] %s598
          %s600 = sshll.u32 %s593, 4
          %s601 = int_to_ptr.vmem [resolvable:$true] %s600
          %603 = dma.hbm_to_vmem [thread:$0]  %s599, 16, %s601, %s591
        $region56: #{tpu_custom_call.1} parent=27 // pred_fallthru
          _
        // Predicated region
        $region57: #{tpu_custom_call.1} parent=27 // pred_check
          %p604 = pneg %p261
        $region58: #{tpu_custom_call.1} parent=27 // pred_check_branch
          %606 = sbr.rel (%p604) target = $region60
        $region59: #{tpu_custom_call.1} parent=27 // pred_region
          %s607 = sand.u32 %s38, 1
          %s608 = scalar_lea.sflag [#allocation16], %s607
          %s609 = sand.u32 %s251, 1
          %s610 = scalar_lea.vmem [#allocation17], %s609
          %612 = vsyncadd %s608, 0
          %s613 = scalar_lea.hbm %s8, %s38
          %s615 = sshll.u32 %s613, 4
          %s616 = int_to_ptr.hbm [resolvable:$true] %s615
          %s617 = sshll.u32 %s610, 4
          %s618 = int_to_ptr.vmem [resolvable:$true] %s617
          %620 = dma.hbm_to_vmem [thread:$0]  %s616, 16, %s618, %s608
        $region60: #{tpu_custom_call.1} parent=27 // pred_fallthru
          _
        // Predicated region
        $region61: #{tpu_custom_call.1} parent=27 // pred_check
          %p621 = pneg %p287
        $region62: #{tpu_custom_call.1} parent=27 // pred_check_branch
          %623 = sbr.rel (%p621) target = $region64
        $region63: #{tpu_custom_call.1} parent=27 // pred_region
          %s624 = sand.u32 %s38, 1
          %s625 = scalar_lea.sflag [#allocation19], %s624
          %s626 = sand.u32 %s277, 1
          %s627 = smul.addr %s626, 512
          %s628 = scalar_lea.vmem [#allocation18], %s627
          %630 = vsyncadd %s625, 0
          %s631 = smul.addr %s38, 64
          %s632 = smul.addr %s631, 8
          %s633 = scalar_lea.hbm %s9, %s632
          %s634 = sshll.u32 %s633, 4
          %s635 = int_to_ptr.hbm [resolvable:$true] %s634
          %s636 = sshll.u32 %s628, 4
          %s637 = int_to_ptr.vmem [resolvable:$true] %s636
          %642 = dma.hbm_to_vmem [thread:$0]  %s635, 8192, %s637, %s625, 512, 512, 32
        $region64: #{tpu_custom_call.1} parent=27 // pred_fallthru
          _
        // Predicated region
        $region65: #{tpu_custom_call.1} parent=27 // pred_check
          %p643 = pneg %p313
        $region66: #{tpu_custom_call.1} parent=27 // pred_check_branch
          %645 = sbr.rel (%p643) target = $region68
        $region67: #{tpu_custom_call.1} parent=27 // pred_region
          %p646 = scmp.lt.s32.totalorder %s38, 1
          %s647 = scalar_select %p646, %s38, 1
          %s648 = smul.addr %s647, 4
          %s649 = scalar_lea.vmem %s10, %s648
        $region68: #{tpu_custom_call.1} parent=27 // pred_fallthru
          _
        // Predicated region
        $region69: #{tpu_custom_call.1} parent=27 // pred_check
          %p650 = pneg %p339
        $region70: #{tpu_custom_call.1} parent=27 // pred_check_branch
          %652 = sbr.rel (%p650) target = $region72
        $region71: #{tpu_custom_call.1} parent=27 // pred_region
          %s653 = sand.u32 %s38, 1
          %s654 = scalar_lea.sflag [#allocation19], %s653
          %s655 = sand.u32 %s329, 1
          %s656 = smul.addr %s655, 512
          %s657 = scalar_lea.vmem [#allocation20], %s656
          %659 = vsyncadd %s654, 0
          %s660 = smul.addr %s38, 64
          %s661 = smul.addr %s660, 8
          %s662 = scalar_lea.hbm %s11, %s661
          %s663 = sshll.u32 %s662, 4
          %s664 = int_to_ptr.hbm [resolvable:$true] %s663
          %s665 = sshll.u32 %s657, 4
          %s666 = int_to_ptr.vmem [resolvable:$true] %s665
          %671 = dma.hbm_to_vmem [thread:$0]  %s664, 8192, %s666, %s654, 128, 128, 8
        $region72: #{tpu_custom_call.1} parent=27 // pred_fallthru
          _
        // Predicated region
        $region73: #{tpu_custom_call.1} parent=27 // pred_check
          %p672 = pneg %p365
        $region74: #{tpu_custom_call.1} parent=27 // pred_check_branch
          %674 = sbr.rel (%p672) target = $region76
        $region75: #{tpu_custom_call.1} parent=27 // pred_region
          %p675 = scmp.lt.s32.totalorder %s38, 1
          %s676 = scalar_select %p675, %s38, 1
          %s677 = scalar_lea.vmem %s12, %s676
        $region76: #{tpu_custom_call.1} parent=27 // pred_fallthru
          _
      $region28: #{tpu_custom_call.1} parent=5 // pred_fallthru
        _
      %p678 = scmp.le.s32.totalorder 1, %s38
      %p679 = scmp.lt.s32.totalorder %s38, 3
      %p680 = pnand %p678, %p679
      %p681 = pneg %p680
      // Predicated region
      $region77: #{tpu_custom_call.1} parent=5 // pred_check
        _
      $region78: #{tpu_custom_call.1} parent=5 // pred_check_branch
        %683 = sbr.rel (%p680) target = $region80
      $region79: #{tpu_custom_call.1} parent=5 // pred_region
        %s684 = ssub.s32 %s38, 1
        // Predicated region
        $region81: #{tpu_custom_call.1} parent=79 // pred_check
          %p685 = pneg %p59
        $region82: #{tpu_custom_call.1} parent=79 // pred_check_branch
          %687 = sbr.rel (%p685) target = $region84
        $region83: #{tpu_custom_call.1} parent=79 // pred_region
          %689 = dma.done [#allocation4], 256
        $region84: #{tpu_custom_call.1} parent=79 // pred_fallthru
          _
        %s690 = sand.u32 %s43, 1
        %s691 = scalar_lea.sflag [#allocation7], %s690
        %s692 = sand.u32 %s72, 1
        %s693 = scalar_lea.vmem [#allocation6], %s692
        // Predicated region
        $region85: #{tpu_custom_call.1} parent=79 // pred_check
          %p694 = pneg %p85
        $region86: #{tpu_custom_call.1} parent=79 // pred_check_branch
          %696 = sbr.rel (%p694) target = $region88
        $region87: #{tpu_custom_call.1} parent=79 // pred_region
          %698 = dma.done %s691, 16
        $region88: #{tpu_custom_call.1} parent=79 // pred_fallthru
          _
        %s699 = sand.u32 %s43, 1
        %s700 = scalar_lea.sflag [#allocation7], %s699
        %s701 = sand.u32 %s98, 1
        %s702 = scalar_lea.vmem [#allocation8], %s701
        // Predicated region
        $region89: #{tpu_custom_call.1} parent=79 // pred_check
          %p703 = pneg %p111
        $region90: #{tpu_custom_call.1} parent=79 // pred_check_branch
          %705 = sbr.rel (%p703) target = $region92
        $region91: #{tpu_custom_call.1} parent=79 // pred_region
          %707 = dma.done %s700, 16
        $region92: #{tpu_custom_call.1} parent=79 // pred_fallthru
          _
        %s708 = sand.u32 %s43, 1
        %s709 = scalar_lea.sflag [#allocation10], %s708
        %s710 = sand.u32 %s124, 1
        %s711 = smul.addr %s710, 384
        %s712 = scalar_lea.vmem [#allocation9], %s711
        // Predicated region
        $region93: #{tpu_custom_call.1} parent=79 // pred_check
          %p713 = pneg %p137
        $region94: #{tpu_custom_call.1} parent=79 // pred_check_branch
          %715 = sbr.rel (%p713) target = $region96
        $region95: #{tpu_custom_call.1} parent=79 // pred_region
          %717 = dma.done %s709, 6144
        $region96: #{tpu_custom_call.1} parent=79 // pred_fallthru
          _
        %s718 = sand.u32 %s43, 1
        %s719 = scalar_lea.sflag [#allocation10], %s718
        %s720 = sand.u32 %s150, 1
        %s721 = smul.addr %s720, 3
        %s722 = scalar_lea.vmem [#allocation11], %s721
        // Predicated region
        $region97: #{tpu_custom_call.1} parent=79 // pred_check
          %p723 = pneg %p163
        $region98: #{tpu_custom_call.1} parent=79 // pred_check_branch
          %725 = sbr.rel (%p723) target = $region100
        $region99: #{tpu_custom_call.1} parent=79 // pred_region
          %727 = dma.done %s719, 48
        $region100: #{tpu_custom_call.1} parent=79 // pred_fallthru
          _
        %s728 = sand.u32 %s43, 1
        %s729 = scalar_lea.sflag [#allocation13], %s728
        %s730 = sand.u32 %s176, 1
        %s731 = smul.addr %s730, 128
        %s732 = scalar_lea.vmem [#allocation12], %s731
        // Predicated region
        $region101: #{tpu_custom_call.1} parent=79 // pred_check
          %p733 = pneg %p189
        $region102: #{tpu_custom_call.1} parent=79 // pred_check_branch
          %735 = sbr.rel (%p733) target = $region104
        $region103: #{tpu_custom_call.1} parent=79 // pred_region
          %737 = dma.done %s729, 2048
        $region104: #{tpu_custom_call.1} parent=79 // pred_fallthru
          _
        %s738 = sand.u32 %s43, 1
        %s739 = scalar_lea.sflag [#allocation13], %s738
        %s740 = sand.u32 %s202, 1
        %s741 = scalar_lea.vmem [#allocation14], %s740
        // Predicated region
        $region105: #{tpu_custom_call.1} parent=79 // pred_check
          %p742 = pneg %p215
        $region106: #{tpu_custom_call.1} parent=79 // pred_check_branch
          %744 = sbr.rel (%p742) target = $region108
        $region107: #{tpu_custom_call.1} parent=79 // pred_region
          %746 = dma.done %s739, 16
        $region108: #{tpu_custom_call.1} parent=79 // pred_fallthru
          _
        %s747 = sand.u32 %s43, 1
        %s748 = scalar_lea.sflag [#allocation16], %s747
        %s749 = sand.u32 %s228, 1
        %s750 = scalar_lea.vmem [#allocation15], %s749
        // Predicated region
        $region109: #{tpu_custom_call.1} parent=79 // pred_check
          %p751 = pneg %p241
        $region110: #{tpu_custom_call.1} parent=79 // pred_check_branch
          %753 = sbr.rel (%p751) target = $region112
        $region111: #{tpu_custom_call.1} parent=79 // pred_region
          %755 = dma.done %s748, 16
        $region112: #{tpu_custom_call.1} parent=79 // pred_fallthru
          _
        %s756 = sand.u32 %s43, 1
        %s757 = scalar_lea.sflag [#allocation16], %s756
        %s758 = sand.u32 %s254, 1
        %s759 = scalar_lea.vmem [#allocation17], %s758
        // Predicated region
        $region113: #{tpu_custom_call.1} parent=79 // pred_check
          %p760 = pneg %p267
        $region114: #{tpu_custom_call.1} parent=79 // pred_check_branch
          %762 = sbr.rel (%p760) target = $region116
        $region115: #{tpu_custom_call.1} parent=79 // pred_region
          %764 = dma.done %s757, 16
        $region116: #{tpu_custom_call.1} parent=79 // pred_fallthru
          _
        %s765 = sand.u32 %s43, 1
        %s766 = scalar_lea.sflag [#allocation19], %s765
        %s767 = sand.u32 %s280, 1
        %s768 = smul.addr %s767, 512
        %s769 = scalar_lea.vmem [#allocation18], %s768
        // Predicated region
        $region117: #{tpu_custom_call.1} parent=79 // pred_check
          %p770 = pneg %p293
        $region118: #{tpu_custom_call.1} parent=79 // pred_check_branch
          %772 = sbr.rel (%p770) target = $region120
        $region119: #{tpu_custom_call.1} parent=79 // pred_region
          %774 = dma.done %s766, 8192
        $region120: #{tpu_custom_call.1} parent=79 // pred_fallthru
          _
        %s775 = sand.u32 %s43, 1
        %s776 = scalar_lea.sflag [#allocation19], %s775
        %s777 = sand.u32 %s332, 1
        %s778 = smul.addr %s777, 512
        %s779 = scalar_lea.vmem [#allocation20], %s778
        // Predicated region
        $region121: #{tpu_custom_call.1} parent=79 // pred_check
          %p780 = pneg %p345
        $region122: #{tpu_custom_call.1} parent=79 // pred_check_branch
          %782 = sbr.rel (%p780) target = $region124
        $region123: #{tpu_custom_call.1} parent=79 // pred_region
          %784 = dma.done %s776, 8192
        $region124: #{tpu_custom_call.1} parent=79 // pred_fallthru
          _
        %p785 = pneg %p59
        %p786 = pneg %p56
        %s787 = sand.u32 %s43, 1
        %s788 = scalar_lea.sflag [#allocation7], %s787
        %s789 = sand.u32 %s72, 1
        %s790 = scalar_lea.vmem [#allocation6], %s789
        %p791 = pneg %p85
        %p792 = pneg %p82
        %s793 = sand.u32 %s43, 1
        %s794 = scalar_lea.sflag [#allocation7], %s793
        %s795 = sand.u32 %s98, 1
        %s796 = scalar_lea.vmem [#allocation8], %s795
        %p797 = pneg %p111
        %p798 = pneg %p108
        %s799 = sand.u32 %s43, 1
        %s800 = scalar_lea.sflag [#allocation10], %s799
        %s801 = sand.u32 %s124, 1
        %s802 = smul.addr %s801, 384
        %s803 = scalar_lea.vmem [#allocation9], %s802
        %p804 = pneg %p137
        %p805 = pneg %p134
        %s806 = sand.u32 %s43, 1
        %s807 = scalar_lea.sflag [#allocation10], %s806
        %s808 = sand.u32 %s150, 1
        %s809 = smul.addr %s808, 3
        %s810 = scalar_lea.vmem [#allocation11], %s809
        %p811 = pneg %p163
        %p812 = pneg %p160
        %s813 = sand.u32 %s43, 1
        %s814 = scalar_lea.sflag [#allocation13], %s813
        %s815 = sand.u32 %s176, 1
        %s816 = smul.addr %s815, 128
        %s817 = scalar_lea.vmem [#allocation12], %s816
        %p818 = pneg %p189
        %p819 = pneg %p186
        %s820 = sand.u32 %s43, 1
        %s821 = scalar_lea.sflag [#allocation13], %s820
        %s822 = sand.u32 %s202, 1
        %s823 = scalar_lea.vmem [#allocation14], %s822
        %p824 = pneg %p215
        %p825 = pneg %p212
        %s826 = sand.u32 %s43, 1
        %s827 = scalar_lea.sflag [#allocation16], %s826
        %s828 = sand.u32 %s228, 1
        %s829 = scalar_lea.vmem [#allocation15], %s828
        %p830 = pneg %p241
        %p831 = pneg %p238
        %s832 = sand.u32 %s43, 1
        %s833 = scalar_lea.sflag [#allocation16], %s832
        %s834 = sand.u32 %s254, 1
        %s835 = scalar_lea.vmem [#allocation17], %s834
        %p836 = pneg %p267
        %p837 = pneg %p264
        %s838 = sand.u32 %s43, 1
        %s839 = scalar_lea.sflag [#allocation19], %s838
        %s840 = sand.u32 %s280, 1
        %s841 = smul.addr %s840, 512
        %s842 = scalar_lea.vmem [#allocation18], %s841
        %p843 = pneg %p293
        %p844 = pneg %p290
        %p845 = scmp.lt.s32.totalorder %s43, 1
        %s846 = scalar_select %p845, %s43, 1
        %s847 = smul.addr %s846, 4
        %s848 = scalar_lea.vmem %s10, %s847
        %p849 = pneg %p319
        %p850 = pneg %p316
        %s851 = sand.u32 %s43, 1
        %s852 = scalar_lea.sflag [#allocation19], %s851
        %s853 = sand.u32 %s332, 1
        %s854 = smul.addr %s853, 512
        %s855 = scalar_lea.vmem [#allocation20], %s854
        %p856 = pneg %p345
        %p857 = pneg %p342
        %p858 = scmp.lt.s32.totalorder %s43, 1
        %s859 = scalar_select %p858, %s43, 1
        %s860 = scalar_lea.vmem %s12, %s859
        %p861 = pneg %p371
        %p862 = pneg %p368
        %p863 = pneg %p392
        %p864 = pneg %p389
        %p865 = pneg %p413
        %p866 = pneg %p410
        %p867 = pneg %p434
        %p868 = pneg %p431
        %p869 = scmp.lt.s32.totalorder %s43, 1
        %s870 = scalar_select %p869, %s43, 1
        %s871 = smul.addr %s870, 4
        %s872 = scalar_lea.vmem %s10, %s871
        %p873 = scmp.lt.s32.totalorder %s43, 1
        %s874 = scalar_select %p873, %s43, 1
        %s875 = scalar_lea.vmem %s12, %s874
        %p876 = scmp.eq.s32.totalorder %s43, 0
        // Predicated region
        $region125: #{tpu_custom_call.1} parent=79 // pred_check
          %p877 = pneg %p876
        $region126: #{tpu_custom_call.1} parent=79 // pred_check_branch
          %879 = sbr.rel (%p877) target = $region128
        $region127: #{tpu_custom_call.1} parent=79 // pred_region
          %v880 = vld [vmem:[#allocation3] sm:$0xff]
          %v881 = vld [vmem:[#allocation3 + $0x8] sm:$0xff]
          %882 = vst [vmem:[#allocation2] sm:$0xff] %v880
          %883 = vst [vmem:[#allocation2 + $0x8] sm:$0xff] %v881
        $region128: #{tpu_custom_call.1} parent=79 // pred_fallthru
          _
        %v884 = vld [vmem:[#allocation2] sm:$0xff]
        %v885 = vld [vmem:[#allocation2 + $0x8] sm:$0xff]
        %v886 = vld [vmem:[%s693] sm:$0x1]
        %v887 = vld [vmem:[%s702] sm:$0x1]
        %888 = vadd.xlane.f32.xlu0 %v884
        %v889 = vpop.xlane.xlu0 %888
        %890 = vadd.xlane.f32.xlu0 %v885
        %v891 = vpop.xlane.xlu0 %890
        %v892 = vrcp.pop 128.0
        %v893 = vmul.f32 128.0, %v892
        %v894 = vsub.f32 1.0, %v893
        %v895 = vmul.f32 %v892, %v894
        %v896 = vadd.f32 %v892, %v895
        %vm897 = vweird.f32 %v892
        %v898 = vsel %vm897, %v892, %v896
        %v899 = vmul.f32 %v889, %v898
        %v900 = vmul.f32 %v891, %v898
        %v901 = vsub.f32 %v884, %v899
        %v902 = vsub.f32 %v885, %v900
        %v903 = vmul.f32 %v901, %v901
        %v904 = vmul.f32 %v902, %v902
        %905 = vadd.xlane.f32.xlu0 %v903
        %v906 = vpop.xlane.xlu0 %905
        %907 = vadd.xlane.f32.xlu0 %v904
        %v908 = vpop.xlane.xlu0 %907
        %v909 = vmul.f32 %v906, %v898
        %v910 = vmul.f32 %v908, %v898
        %v911 = vadd.f32 %v909, 1e-05
        %v912 = vadd.f32 %v910, 1e-05
        %v913 = vrsqrt.pop %v911
        %v914 = vmul.f32 %v913, %v911
        %v915 = vmul.f32 %v914, %v913
        %v916 = vmul.f32 0.5, %v915
        %v917 = vsub.f32 1.5, %v916
        %v918 = vmul.f32 %v913, %v917
        %vm919 = vweird.f32 %v911
        %vm920 = vweird.f32 %v913
        %vm921 = vmor %vm919, %vm920
        %v922 = vsel %vm921, %v913, %v918
        %v923 = vrsqrt.pop %v912
        %v924 = vmul.f32 %v923, %v912
        %v925 = vmul.f32 %v924, %v923
        %v926 = vmul.f32 0.5, %v925
        %v927 = vsub.f32 1.5, %v926
        %v928 = vmul.f32 %v923, %v927
        %vm929 = vweird.f32 %v912
        %vm930 = vweird.f32 %v923
        %vm931 = vmor %vm929, %vm930
        %v932 = vsel %vm931, %v923, %v928
        %v933 = vmul.f32 %v901, %v922
        %v934 = vmul.f32 %v902, %v932
        %v936 = vperm.slane %v886, 0
        %v938 = vmul.f32 %v933, %v936
        %v939 = vmul.f32 %v934, %v936
        %v941 = vperm.slane %v887, 0
        %v943 = vadd.f32 %v938, %v941
        %v944 = vadd.f32 %v939, %v941
        %v945 = vld [vmem:[%s712] sm:$0xff]
        %v946 = vld [vmem:[%s712 + $0x8] sm:$0xff]
        %v947 = vld [vmem:[%s712 + $0x10] sm:$0xff]
        %v948 = vld [vmem:[%s712 + $0x18] sm:$0xff]
        %v949 = vld [vmem:[%s712 + $0x20] sm:$0xff]
        %v950 = vld [vmem:[%s712 + $0x28] sm:$0xff]
        %v951 = vld [vmem:[%s712 + $0x30] sm:$0xff]
        %v952 = vld [vmem:[%s712 + $0x38] sm:$0xff]
        %v953 = vld [vmem:[%s712 + $0x40] sm:$0xff]
        %v954 = vld [vmem:[%s712 + $0x48] sm:$0xff]
        %v955 = vld [vmem:[%s712 + $0x50] sm:$0xff]
        %v956 = vld [vmem:[%s712 + $0x58] sm:$0xff]
        %v957 = vld [vmem:[%s712 + $0x60] sm:$0xff]
        %v958 = vld [vmem:[%s712 + $0x68] sm:$0xff]
        %v959 = vld [vmem:[%s712 + $0x70] sm:$0xff]
        %v960 = vld [vmem:[%s712 + $0x78] sm:$0xff]
        %v961 = vld [vmem:[%s712 + $0x80] sm:$0xff]
        %v962 = vld [vmem:[%s712 + $0x88] sm:$0xff]
        %v963 = vld [vmem:[%s712 + $0x90] sm:$0xff]
        %v964 = vld [vmem:[%s712 + $0x98] sm:$0xff]
        %v965 = vld [vmem:[%s712 + $0xa0] sm:$0xff]
        %v966 = vld [vmem:[%s712 + $0xa8] sm:$0xff]
        %v967 = vld [vmem:[%s712 + $0xb0] sm:$0xff]
        %v968 = vld [vmem:[%s712 + $0xb8] sm:$0xff]
        %v969 = vld [vmem:[%s712 + $0xc0] sm:$0xff]
        %v970 = vld [vmem:[%s712 + $0xc8] sm:$0xff]
        %v971 = vld [vmem:[%s712 + $0xd0] sm:$0xff]
        %v972 = vld [vmem:[%s712 + $0xd8] sm:$0xff]
        %v973 = vld [vmem:[%s712 + $0xe0] sm:$0xff]
        %v974 = vld [vmem:[%s712 + $0xe8] sm:$0xff]
        %v975 = vld [vmem:[%s712 + $0xf0] sm:$0xff]
        %v976 = vld [vmem:[%s712 + $0xf8] sm:$0xff]
        %v977 = vld [vmem:[%s712 + $0x100] sm:$0xff]
        %v978 = vld [vmem:[%s712 + $0x108] sm:$0xff]
        %v979 = vld [vmem:[%s712 + $0x110] sm:$0xff]
        %v980 = vld [vmem:[%s712 + $0x118] sm:$0xff]
        %v981 = vld [vmem:[%s712 + $0x120] sm:$0xff]
        %v982 = vld [vmem:[%s712 + $0x128] sm:$0xff]
        %v983 = vld [vmem:[%s712 + $0x130] sm:$0xff]
        %v984 = vld [vmem:[%s712 + $0x138] sm:$0xff]
        %v985 = vld [vmem:[%s712 + $0x140] sm:$0xff]
        %v986 = vld [vmem:[%s712 + $0x148] sm:$0xff]
        %v987 = vld [vmem:[%s712 + $0x150] sm:$0xff]
        %v988 = vld [vmem:[%s712 + $0x158] sm:$0xff]
        %v989 = vld [vmem:[%s712 + $0x160] sm:$0xff]
        %v990 = vld [vmem:[%s712 + $0x168] sm:$0xff]
        %v991 = vld [vmem:[%s712 + $0x170] sm:$0xff]
        %v992 = vld [vmem:[%s712 + $0x178] sm:$0xff]
        %v993 = vld [vmem:[%s722] sm:$0x7]
        %v995 = vperm.slane %v993, 0
        %v996 = vperm.slane %v993, 1
        %v997 = vperm.slane %v993, 2
        %1001 = vmatpush.msra.mxu0 %v990
        %1002 = vmatpush.msra.mxu0 %v987
        %1003 = vmatpush.msra.mxu0 %v984
        %1004 = vmatpush.msra.mxu0 %v981
        %1005 = vmatpush.msra.mxu0 %v978
        %1006 = vmatpush.msra.mxu0 %v975
        %1007 = vmatpush.msra.mxu0 %v972
        %1008 = vmatpush.msra.mxu0 %v969
        %1009 = vmatpush.msra.mxu0 %v966
        %1010 = vmatpush.msra.mxu0 %v963
        %1011 = vmatpush.msra.mxu0 %v960
        %1012 = vmatpush.msra.mxu0 %v957
        %1013 = vmatpush.msra.mxu0 %v954
        %1014 = vmatpush.msra.mxu0 %v951
        %1015 = vmatpush.msra.mxu0 %v948
        %1016 = vmatpush.msra.mxu0 %v945
        %1017 = vmatmul.f32.gmra.mxu0 %v943
        %v1018 = vpop.f32.mrf.mxu0
        %v1019 = vadd.f32 %v995, %v1018
        %1020 = vmatmul.f32.gmra.mxu0 %v944
        %v1021 = vpop.f32.mrf.mxu0
        %v1022 = vadd.f32 %v995, %v1021
        %1023 = vdwg.mxu0
        %1024 = vmatpush.msra.mxu0 %v991
        %1025 = vmatpush.msra.mxu0 %v988
        %1026 = vmatpush.msra.mxu0 %v985
        %1027 = vmatpush.msra.mxu0 %v982
        %1028 = vmatpush.msra.mxu0 %v979
        %1029 = vmatpush.msra.mxu0 %v976
        %1030 = vmatpush.msra.mxu0 %v973
        %1031 = vmatpush.msra.mxu0 %v970
        %1032 = vmatpush.msra.mxu0 %v967
        %1033 = vmatpush.msra.mxu0 %v964
        %1034 = vmatpush.msra.mxu0 %v961
        %1035 = vmatpush.msra.mxu0 %v958
        %1036 = vmatpush.msra.mxu0 %v955
        %1037 = vmatpush.msra.mxu0 %v952
        %1038 = vmatpush.msra.mxu0 %v949
        %1039 = vmatpush.msra.mxu0 %v946
        %1040 = vmatmul.f32.gmra.mxu0 %v943
        %v1041 = vpop.f32.mrf.mxu0
        %v1042 = vadd.f32 %v996, %v1041
        %1043 = vmatmul.f32.gmra.mxu0 %v944
        %v1044 = vpop.f32.mrf.mxu0
        %v1045 = vadd.f32 %v996, %v1044
        %1046 = vdwg.mxu0
        %1047 = vmatpush.msra.mxu0 %v992
        %1048 = vmatpush.msra.mxu0 %v989
        %1049 = vmatpush.msra.mxu0 %v986
        %1050 = vmatpush.msra.mxu0 %v983
        %1051 = vmatpush.msra.mxu0 %v980
        %1052 = vmatpush.msra.mxu0 %v977
        %1053 = vmatpush.msra.mxu0 %v974
        %1054 = vmatpush.msra.mxu0 %v971
        %1055 = vmatpush.msra.mxu0 %v968
        %1056 = vmatpush.msra.mxu0 %v965
        %1057 = vmatpush.msra.mxu0 %v962
        %1058 = vmatpush.msra.mxu0 %v959
        %1059 = vmatpush.msra.mxu0 %v956
        %1060 = vmatpush.msra.mxu0 %v953
        %1061 = vmatpush.msra.mxu0 %v950
        %1062 = vmatpush.msra.mxu0 %v947
        %1063 = vmatmul.f32.gmra.mxu0 %v943
        %v1064 = vpop.f32.mrf.mxu0
        %v1065 = vadd.f32 %v997, %v1064
        %1066 = vmatmul.f32.gmra.mxu0 %v944
        %v1067 = vpop.f32.mrf.mxu0
        %v1068 = vadd.f32 %v997, %v1067
        %1069 = vdwg.mxu0
        %v1070 = vlaneseq
        %v1071 = vshrl.u32 %v1070, 7
        %v1072 = vlaneseq
        %v1073 = vand.u32 %v1072, 127
        %vm1074 = vcmp.gt.s32.totalorder %v1073, %v1071
        %v1075 = vsel %vm1074, -1e+09, 0.0
        %v1076 = vld [vmem:[%s732] sm:$0xff]
        %v1077 = vld [vmem:[%s732 + $0x8] sm:$0xff]
        %v1078 = vld [vmem:[%s732 + $0x10] sm:$0xff]
        %v1079 = vld [vmem:[%s732 + $0x18] sm:$0xff]
        %v1080 = vld [vmem:[%s732 + $0x20] sm:$0xff]
        %v1081 = vld [vmem:[%s732 + $0x28] sm:$0xff]
        %v1082 = vld [vmem:[%s732 + $0x30] sm:$0xff]
        %v1083 = vld [vmem:[%s732 + $0x38] sm:$0xff]
        %v1084 = vld [vmem:[%s732 + $0x40] sm:$0xff]
        %v1085 = vld [vmem:[%s732 + $0x48] sm:$0xff]
        %v1086 = vld [vmem:[%s732 + $0x50] sm:$0xff]
        %v1087 = vld [vmem:[%s732 + $0x58] sm:$0xff]
        %v1088 = vld [vmem:[%s732 + $0x60] sm:$0xff]
        %v1089 = vld [vmem:[%s732 + $0x68] sm:$0xff]
        %v1090 = vld [vmem:[%s732 + $0x70] sm:$0xff]
        %v1091 = vld [vmem:[%s732 + $0x78] sm:$0xff]
        %v1092 = vmul.f32 %v1019, 0.17677669
        %v1093 = vmul.f32 %v1022, 0.17677669
        %vm1094 = vcmask 261120
        %v1096 = vsel %vm1094, %v1092, 0
        %v1099 = vsel %vm1094, %v1042, 0
        %1101 = vmatpush.xpose.msra.mxu0 0.0
        %1102 = vmatpush.xpose.msra.mxu0 0.0
        %1103 = vmatpush.xpose.msra.mxu0 0.0
        %1104 = vmatpush.xpose.msra.mxu0 0.0
        %1105 = vmatpush.xpose.msra.mxu0 0.0
        %1106 = vmatpush.xpose.msra.mxu0 0.0
        %1107 = vmatpush.xpose.msra.mxu0 0.0
        %1108 = vmatpush.xpose.msra.mxu0 0.0
        %1109 = vmatpush.xpose.msra.mxu0 0.0
        %1110 = vmatpush.xpose.msra.mxu0 0.0
        %1111 = vmatpush.xpose.msra.mxu0 0.0
        %1112 = vmatpush.xpose.msra.mxu0 0.0
        %1113 = vmatpush.xpose.msra.mxu0 0.0
        %1114 = vmatpush.xpose.msra.mxu0 0.0
        %1115 = vmatpush.xpose.msra.mxu0 0.0
        %1116 = vmatpush.xpose.msra.mxu0 %v1099
        %1117 = vmatmul.f32.gmra.mxu0 %v1096
        %v1118 = vpop.f32.mrf.mxu0
        %v1119 = vadd.f32 %v1075, %v1118
        %1120 = vdwg.mxu0
        %v1122 = vsel %vm1094, %v1093, 0
        %v1125 = vsel %vm1094, %v1045, 0
        %1127 = vmatpush.xpose.msra.mxu0 0.0
        %1128 = vmatpush.xpose.msra.mxu0 0.0
        %1129 = vmatpush.xpose.msra.mxu0 0.0
        %1130 = vmatpush.xpose.msra.mxu0 0.0
        %1131 = vmatpush.xpose.msra.mxu0 0.0
        %1132 = vmatpush.xpose.msra.mxu0 0.0
        %1133 = vmatpush.xpose.msra.mxu0 0.0
        %1134 = vmatpush.xpose.msra.mxu0 0.0
        %1135 = vmatpush.xpose.msra.mxu0 0.0
        %1136 = vmatpush.xpose.msra.mxu0 0.0
        %1137 = vmatpush.xpose.msra.mxu0 0.0
        %1138 = vmatpush.xpose.msra.mxu0 0.0
        %1139 = vmatpush.xpose.msra.mxu0 0.0
        %1140 = vmatpush.xpose.msra.mxu0 0.0
        %1141 = vmatpush.xpose.msra.mxu0 0.0
        %1142 = vmatpush.xpose.msra.mxu0 %v1125
        %1143 = vmatmul.f32.gmra.mxu0 %v1122
        %v1144 = vpop.f32.mrf.mxu0
        %v1145 = vadd.f32 %v1075, %v1144
        %1146 = vdwg.mxu0
        %vm1147 = vcmask 64512
        %v1148 = vsel %vm1147, %v1119, -inf
        %1149 = vmax.xlane.f32.xlu0 %v1148
        %v1150 = vpop.xlane.xlu0 %1149
        %v1151 = vsel %vm1147, %v1145, -inf
        %1152 = vmax.xlane.f32.xlu0 %v1151
        %v1153 = vpop.xlane.xlu0 %1152
        %v1154 = vsub.f32 %v1119, %v1150
        %v1155 = vsub.f32 %v1145, %v1153
        %v1156 = vmul.f32 %v1154, 1.442695
        %v1157 = vpow.pop %v1156
        %v1158 = vmul.f32 %v1155, 1.442695
        %v1159 = vpow.pop %v1158
        %v1160 = vsel %vm1147, %v1157, 0.0
        %1161 = vadd.xlane.f32.xlu0 %v1160
        %v1162 = vpop.xlane.xlu0 %1161
        %v1163 = vsel %vm1147, %v1159, 0.0
        %1164 = vadd.xlane.f32.xlu0 %v1163
        %v1165 = vpop.xlane.xlu0 %1164
        %v1166 = vrcp.pop %v1162
        %v1167 = vmul.f32 %v1162, %v1166
        %v1168 = vsub.f32 1.0, %v1167
        %v1169 = vmul.f32 %v1166, %v1168
        %v1170 = vadd.f32 %v1166, %v1169
        %vm1171 = vweird.f32 %v1162
        %vm1172 = vweird.f32 %v1166
        %vm1173 = vmor %vm1171, %vm1172
        %v1174 = vsel %vm1173, %v1166, %v1170
        %v1175 = vand.u32 2147483647, %v1162
        %vm1176 = vcmp.eq.f32.partialorder %v1175, 8.507059e+37
        %v1177 = vand.u32 %v1162, 2147483648
        %v1178 = vor.u32 1.1754944e-38, %v1177
        %v1179 = vsel %vm1176, %v1178, %v1174
        %v1180 = vmul.f32 %v1157, %v1179
        %v1181 = vrcp.pop %v1165
        %v1182 = vmul.f32 %v1165, %v1181
        %v1183 = vsub.f32 1.0, %v1182
        %v1184 = vmul.f32 %v1181, %v1183
        %v1185 = vadd.f32 %v1181, %v1184
        %vm1186 = vweird.f32 %v1165
        %vm1187 = vweird.f32 %v1181
        %vm1188 = vmor %vm1186, %vm1187
        %v1189 = vsel %vm1188, %v1181, %v1185
        %v1190 = vand.u32 2147483647, %v1165
        %vm1191 = vcmp.eq.f32.partialorder %v1190, 8.507059e+37
        %v1192 = vand.u32 %v1165, 2147483648
        %v1193 = vor.u32 1.1754944e-38, %v1192
        %v1194 = vsel %vm1191, %v1193, %v1189
        %v1195 = vmul.f32 %v1159, %v1194
        %v1197 = vsel %vm1147, %v1180, 0
        %1199 = vmatpush.msra.mxu0 0.0
        %1200 = vmatpush.msra.mxu0 0.0
        %1201 = vmatpush.msra.mxu0 0.0
        %1202 = vmatpush.msra.mxu0 0.0
        %1203 = vmatpush.msra.mxu0 0.0
        %1204 = vmatpush.msra.mxu0 0.0
        %1205 = vmatpush.msra.mxu0 0.0
        %1206 = vmatpush.msra.mxu0 0.0
        %1207 = vmatpush.msra.mxu0 0.0
        %1208 = vmatpush.msra.mxu0 0.0
        %1209 = vmatpush.msra.mxu0 0.0
        %1210 = vmatpush.msra.mxu0 0.0
        %1211 = vmatpush.msra.mxu0 0.0
        %1212 = vmatpush.msra.mxu0 0.0
        %1213 = vmatpush.msra.mxu0 0.0
        %1214 = vmatpush.msra.mxu0 %v1065
        %1215 = vmatmul.f32.gmra.mxu0 %v1197
        %v1216 = vpop.f32.mrf.mxu0
        %v1217 = vadd.f32 0.0, %v1216
        %1218 = vdwg.mxu0
        %v1220 = vsel %vm1147, %v1195, 0
        %1222 = vmatpush.msra.mxu0 0.0
        %1223 = vmatpush.msra.mxu0 0.0
        %1224 = vmatpush.msra.mxu0 0.0
        %1225 = vmatpush.msra.mxu0 0.0
        %1226 = vmatpush.msra.mxu0 0.0
        %1227 = vmatpush.msra.mxu0 0.0
        %1228 = vmatpush.msra.mxu0 0.0
        %1229 = vmatpush.msra.mxu0 0.0
        %1230 = vmatpush.msra.mxu0 0.0
        %1231 = vmatpush.msra.mxu0 0.0
        %1232 = vmatpush.msra.mxu0 0.0
        %1233 = vmatpush.msra.mxu0 0.0
        %1234 = vmatpush.msra.mxu0 0.0
        %1235 = vmatpush.msra.mxu0 0.0
        %1236 = vmatpush.msra.mxu0 0.0
        %1237 = vmatpush.msra.mxu0 %v1068
        %1238 = vmatmul.f32.gmra.mxu0 %v1220
        %v1239 = vpop.f32.mrf.mxu0
        %v1240 = vadd.f32 0.0, %v1239
        %1241 = vdwg.mxu0
        %1242 = vrot.lane.b32.xlu0 %v1092, 96
        %v1243 = vpop.permute.xlu0 %1242
        %1244 = vrot.lane.b32.xlu0 %v1042, 96
        %v1245 = vpop.permute.xlu0 %1244
        %v1246 = vsel %vm1094, %v1243, 0
        %v1248 = vsel %vm1094, %v1245, 0
        %1250 = vmatpush.xpose.msra.mxu0 0.0
        %1251 = vmatpush.xpose.msra.mxu0 0.0
        %1252 = vmatpush.xpose.msra.mxu0 0.0
        %1253 = vmatpush.xpose.msra.mxu0 0.0
        %1254 = vmatpush.xpose.msra.mxu0 0.0
        %1255 = vmatpush.xpose.msra.mxu0 0.0
        %1256 = vmatpush.xpose.msra.mxu0 0.0
        %1257 = vmatpush.xpose.msra.mxu0 0.0
        %1258 = vmatpush.xpose.msra.mxu0 0.0
        %1259 = vmatpush.xpose.msra.mxu0 0.0
        %1260 = vmatpush.xpose.msra.mxu0 0.0
        %1261 = vmatpush.xpose.msra.mxu0 0.0
        %1262 = vmatpush.xpose.msra.mxu0 0.0
        %1263 = vmatpush.xpose.msra.mxu0 0.0
        %1264 = vmatpush.xpose.msra.mxu0 0.0
        %1265 = vmatpush.xpose.msra.mxu0 %v1248
        %1266 = vmatmul.f32.gmra.mxu0 %v1246
        %v1267 = vpop.f32.mrf.mxu0
        %v1268 = vadd.f32 %v1075, %v1267
        %1269 = vdwg.mxu0
        %1270 = vrot.lane.b32.xlu0 %v1093, 96
        %v1271 = vpop.permute.xlu0 %1270
        %1272 = vrot.lane.b32.xlu0 %v1045, 96
        %v1273 = vpop.permute.xlu0 %1272
        %v1274 = vsel %vm1094, %v1271, 0
        %v1276 = vsel %vm1094, %v1273, 0
        %1278 = vmatpush.xpose.msra.mxu0 0.0
        %1279 = vmatpush.xpose.msra.mxu0 0.0
        %1280 = vmatpush.xpose.msra.mxu0 0.0
        %1281 = vmatpush.xpose.msra.mxu0 0.0
        %1282 = vmatpush.xpose.msra.mxu0 0.0
        %1283 = vmatpush.xpose.msra.mxu0 0.0
        %1284 = vmatpush.xpose.msra.mxu0 0.0
        %1285 = vmatpush.xpose.msra.mxu0 0.0
        %1286 = vmatpush.xpose.msra.mxu0 0.0
        %1287 = vmatpush.xpose.msra.mxu0 0.0
        %1288 = vmatpush.xpose.msra.mxu0 0.0
        %1289 = vmatpush.xpose.msra.mxu0 0.0
        %1290 = vmatpush.xpose.msra.mxu0 0.0
        %1291 = vmatpush.xpose.msra.mxu0 0.0
        %1292 = vmatpush.xpose.msra.mxu0 0.0
        %1293 = vmatpush.xpose.msra.mxu0 %v1276
        %1294 = vmatmul.f32.gmra.mxu0 %v1274
        %v1295 = vpop.f32.mrf.mxu0
        %v1296 = vadd.f32 %v1075, %v1295
        %1297 = vdwg.mxu0
        %v1298 = vsel %vm1147, %v1268, -inf
        %1299 = vmax.xlane.f32.xlu0 %v1298
        %v1300 = vpop.xlane.xlu0 %1299
        %v1301 = vsel %vm1147, %v1296, -inf
        %1302 = vmax.xlane.f32.xlu0 %v1301
        %v1303 = vpop.xlane.xlu0 %1302
        %v1304 = vsub.f32 %v1268, %v1300
        %v1305 = vsub.f32 %v1296, %v1303
        %v1306 = vmul.f32 %v1304, 1.442695
        %v1307 = vpow.pop %v1306
        %v1308 = vmul.f32 %v1305, 1.442695
        %v1309 = vpow.pop %v1308
        %v1310 = vsel %vm1147, %v1307, 0.0
        %1311 = vadd.xlane.f32.xlu0 %v1310
        %v1312 = vpop.xlane.xlu0 %1311
        %v1313 = vsel %vm1147, %v1309, 0.0
        %1314 = vadd.xlane.f32.xlu0 %v1313
        %v1315 = vpop.xlane.xlu0 %1314
        %v1316 = vrcp.pop %v1312
        %v1317 = vmul.f32 %v1312, %v1316
        %v1318 = vsub.f32 1.0, %v1317
        %v1319 = vmul.f32 %v1316, %v1318
        %v1320 = vadd.f32 %v1316, %v1319
        %vm1321 = vweird.f32 %v1312
        %vm1322 = vweird.f32 %v1316
        %vm1323 = vmor %vm1321, %vm1322
        %v1324 = vsel %vm1323, %v1316, %v1320
        %v1325 = vand.u32 2147483647, %v1312
        %vm1326 = vcmp.eq.f32.partialorder %v1325, 8.507059e+37
        %v1327 = vand.u32 %v1312, 2147483648
        %v1328 = vor.u32 1.1754944e-38, %v1327
        %v1329 = vsel %vm1326, %v1328, %v1324
        %v1330 = vmul.f32 %v1307, %v1329
        %v1331 = vrcp.pop %v1315
        %v1332 = vmul.f32 %v1315, %v1331
        %v1333 = vsub.f32 1.0, %v1332
        %v1334 = vmul.f32 %v1331, %v1333
        %v1335 = vadd.f32 %v1331, %v1334
        %vm1336 = vweird.f32 %v1315
        %vm1337 = vweird.f32 %v1331
        %vm1338 = vmor %vm1336, %vm1337
        %v1339 = vsel %vm1338, %v1331, %v1335
        %v1340 = vand.u32 2147483647, %v1315
        %vm1341 = vcmp.eq.f32.partialorder %v1340, 8.507059e+37
        %v1342 = vand.u32 %v1315, 2147483648
        %v1343 = vor.u32 1.1754944e-38, %v1342
        %v1344 = vsel %vm1341, %v1343, %v1339
        %v1345 = vmul.f32 %v1309, %v1344
        %1347 = vrot.lane.b32.xlu0 %v1065, 96
        %v1348 = vpop.permute.xlu0 %1347
        %v1351 = vsel %vm1147, %v1330, 0
        %1353 = vmatpush.msra.mxu0 0.0
        %1354 = vmatpush.msra.mxu0 0.0
        %1355 = vmatpush.msra.mxu0 0.0
        %1356 = vmatpush.msra.mxu0 0.0
        %1357 = vmatpush.msra.mxu0 0.0
        %1358 = vmatpush.msra.mxu0 0.0
        %1359 = vmatpush.msra.mxu0 0.0
        %1360 = vmatpush.msra.mxu0 0.0
        %1361 = vmatpush.msra.mxu0 0.0
        %1362 = vmatpush.msra.mxu0 0.0
        %1363 = vmatpush.msra.mxu0 0.0
        %1364 = vmatpush.msra.mxu0 0.0
        %1365 = vmatpush.msra.mxu0 0.0
        %1366 = vmatpush.msra.mxu0 0.0
        %1367 = vmatpush.msra.mxu0 0.0
        %1368 = vmatpush.msra.mxu0 %v1348
        %1369 = vmatmul.f32.gmra.mxu0 %v1351
        %v1370 = vpop.f32.mrf.mxu0
        %v1371 = vadd.f32 0.0, %v1370
        %1372 = vdwg.mxu0
        %1374 = vrot.lane.b32.xlu0 %v1068, 96
        %v1375 = vpop.permute.xlu0 %1374
        %v1378 = vsel %vm1147, %v1345, 0
        %1380 = vmatpush.msra.mxu0 0.0
        %1381 = vmatpush.msra.mxu0 0.0
        %1382 = vmatpush.msra.mxu0 0.0
        %1383 = vmatpush.msra.mxu0 0.0
        %1384 = vmatpush.msra.mxu0 0.0
        %1385 = vmatpush.msra.mxu0 0.0
        %1386 = vmatpush.msra.mxu0 0.0
        %1387 = vmatpush.msra.mxu0 0.0
        %1388 = vmatpush.msra.mxu0 0.0
        %1389 = vmatpush.msra.mxu0 0.0
        %1390 = vmatpush.msra.mxu0 0.0
        %1391 = vmatpush.msra.mxu0 0.0
        %1392 = vmatpush.msra.mxu0 0.0
        %1393 = vmatpush.msra.mxu0 0.0
        %1394 = vmatpush.msra.mxu0 0.0
        %1395 = vmatpush.msra.mxu0 %v1375
        %1396 = vmatmul.f32.gmra.mxu0 %v1378
        %v1397 = vpop.f32.mrf.mxu0
        %v1398 = vadd.f32 0.0, %v1397
        %1399 = vdwg.mxu0
        %v1401 = vsel %vm1094, %v1371, 0
        %v1404 = vsel %vm1094, %v1398, 0
        %1406 = vmatpush.msra.mxu0 0.0
        %1407 = vmatpush.msra.mxu0 0.0
        %1408 = vmatpush.msra.mxu0 0.0
        %1409 = vmatpush.msra.mxu0 0.0
        %1410 = vmatpush.msra.mxu0 0.0
        %1411 = vmatpush.msra.mxu0 0.0
        %1412 = vmatpush.msra.mxu0 0.0
        %1413 = vmatpush.msra.mxu0 0.0
        %1414 = vmatpush.msra.mxu0 0.0
        %1415 = vmatpush.msra.mxu0 0.0
        %1416 = vmatpush.msra.mxu0 0.0
        %1417 = vmatpush.msra.mxu0 0.0
        %1418 = vmatpush.msra.mxu0 %v1083
        %1419 = vmatpush.msra.mxu0 %v1082
        %1420 = vmatpush.msra.mxu0 %v1081
        %1421 = vmatpush.msra.mxu0 %v1080
        %1422 = vmatmul.f32.gmra.mxu0 %v1401
        %v1423 = vpop.f32.mrf.mxu0
        %v1424 = vadd.f32 0.0, %v1423
        %1425 = vmatmul.f32.gmra.mxu0 %v1404
        %v1426 = vpop.f32.mrf.mxu0
        %v1427 = vadd.f32 0.0, %v1426
        %1428 = vdwg.mxu0
        %v1430 = vsel %vm1094, %v1217, 0
        %v1433 = vsel %vm1094, %v1240, 0
        %1435 = vmatpush.msra.mxu0 0.0
        %1436 = vmatpush.msra.mxu0 0.0
        %1437 = vmatpush.msra.mxu0 0.0
        %1438 = vmatpush.msra.mxu0 0.0
        %1439 = vmatpush.msra.mxu0 0.0
        %1440 = vmatpush.msra.mxu0 0.0
        %1441 = vmatpush.msra.mxu0 0.0
        %1442 = vmatpush.msra.mxu0 0.0
        %1443 = vmatpush.msra.mxu0 0.0
        %1444 = vmatpush.msra.mxu0 0.0
        %1445 = vmatpush.msra.mxu0 0.0
        %1446 = vmatpush.msra.mxu0 0.0
        %1447 = vmatpush.msra.mxu0 %v1079
        %1448 = vmatpush.msra.mxu0 %v1078
        %1449 = vmatpush.msra.mxu0 %v1077
        %1450 = vmatpush.msra.mxu0 %v1076
        %1451 = vmatmul.f32.gmra.mxu0 %v1430
        %v1452 = vpop.f32.mrf.mxu0
        %v1453 = vadd.f32 %v1424, %v1452
        %1454 = vmatmul.f32.gmra.mxu0 %v1433
        %v1455 = vpop.f32.mrf.mxu0
        %v1456 = vadd.f32 %v1427, %v1455
        %1457 = vdwg.mxu0
        %1458 = vrot.lane.b32.xlu0 %v1092, 64
        %v1459 = vpop.permute.xlu0 %1458
        %1460 = vrot.lane.b32.xlu0 %v1042, 64
        %v1461 = vpop.permute.xlu0 %1460
        %v1462 = vsel %vm1094, %v1459, 0
        %v1464 = vsel %vm1094, %v1461, 0
        %1466 = vmatpush.xpose.msra.mxu0 0.0
        %1467 = vmatpush.xpose.msra.mxu0 0.0
        %1468 = vmatpush.xpose.msra.mxu0 0.0
        %1469 = vmatpush.xpose.msra.mxu0 0.0
        %1470 = vmatpush.xpose.msra.mxu0 0.0
        %1471 = vmatpush.xpose.msra.mxu0 0.0
        %1472 = vmatpush.xpose.msra.mxu0 0.0
        %1473 = vmatpush.xpose.msra.mxu0 0.0
        %1474 = vmatpush.xpose.msra.mxu0 0.0
        %1475 = vmatpush.xpose.msra.mxu0 0.0
        %1476 = vmatpush.xpose.msra.mxu0 0.0
        %1477 = vmatpush.xpose.msra.mxu0 0.0
        %1478 = vmatpush.xpose.msra.mxu0 0.0
        %1479 = vmatpush.xpose.msra.mxu0 0.0
        %1480 = vmatpush.xpose.msra.mxu0 0.0
        %1481 = vmatpush.xpose.msra.mxu0 %v1464
        %1482 = vmatmul.f32.gmra.mxu0 %v1462
        %v1483 = vpop.f32.mrf.mxu0
        %v1484 = vadd.f32 %v1075, %v1483
        %1485 = vdwg.mxu0
        %1486 = vrot.lane.b32.xlu0 %v1093, 64
        %v1487 = vpop.permute.xlu0 %1486
        %1488 = vrot.lane.b32.xlu0 %v1045, 64
        %v1489 = vpop.permute.xlu0 %1488
        %v1490 = vsel %vm1094, %v1487, 0
        %v1492 = vsel %vm1094, %v1489, 0
        %1494 = vmatpush.xpose.msra.mxu0 0.0
        %1495 = vmatpush.xpose.msra.mxu0 0.0
        %1496 = vmatpush.xpose.msra.mxu0 0.0
        %1497 = vmatpush.xpose.msra.mxu0 0.0
        %1498 = vmatpush.xpose.msra.mxu0 0.0
        %1499 = vmatpush.xpose.msra.mxu0 0.0
        %1500 = vmatpush.xpose.msra.mxu0 0.0
        %1501 = vmatpush.xpose.msra.mxu0 0.0
        %1502 = vmatpush.xpose.msra.mxu0 0.0
        %1503 = vmatpush.xpose.msra.mxu0 0.0
        %1504 = vmatpush.xpose.msra.mxu0 0.0
        %1505 = vmatpush.xpose.msra.mxu0 0.0
        %1506 = vmatpush.xpose.msra.mxu0 0.0
        %1507 = vmatpush.xpose.msra.mxu0 0.0
        %1508 = vmatpush.xpose.msra.mxu0 0.0
        %1509 = vmatpush.xpose.msra.mxu0 %v1492
        %1510 = vmatmul.f32.gmra.mxu0 %v1490
        %v1511 = vpop.f32.mrf.mxu0
        %v1512 = vadd.f32 %v1075, %v1511
        %1513 = vdwg.mxu0
        %v1514 = vsel %vm1147, %v1484, -inf
        %1515 = vmax.xlane.f32.xlu0 %v1514
        %v1516 = vpop.xlane.xlu0 %1515
        %v1517 = vsel %vm1147, %v1512, -inf
        %1518 = vmax.xlane.f32.xlu0 %v1517
        %v1519 = vpop.xlane.xlu0 %1518
        %v1520 = vsub.f32 %v1484, %v1516
        %v1521 = vsub.f32 %v1512, %v1519
        %v1522 = vmul.f32 %v1520, 1.442695
        %v1523 = vpow.pop %v1522
        %v1524 = vmul.f32 %v1521, 1.442695
        %v1525 = vpow.pop %v1524
        %v1526 = vsel %vm1147, %v1523, 0.0
        %1527 = vadd.xlane.f32.xlu0 %v1526
        %v1528 = vpop.xlane.xlu0 %1527
        %v1529 = vsel %vm1147, %v1525, 0.0
        %1530 = vadd.xlane.f32.xlu0 %v1529
        %v1531 = vpop.xlane.xlu0 %1530
        %v1532 = vrcp.pop %v1528
        %v1533 = vmul.f32 %v1528, %v1532
        %v1534 = vsub.f32 1.0, %v1533
        %v1535 = vmul.f32 %v1532, %v1534
        %v1536 = vadd.f32 %v1532, %v1535
        %vm1537 = vweird.f32 %v1528
        %vm1538 = vweird.f32 %v1532
        %vm1539 = vmor %vm1537, %vm1538
        %v1540 = vsel %vm1539, %v1532, %v1536
        %v1541 = vand.u32 2147483647, %v1528
        %vm1542 = vcmp.eq.f32.partialorder %v1541, 8.507059e+37
        %v1543 = vand.u32 %v1528, 2147483648
        %v1544 = vor.u32 1.1754944e-38, %v1543
        %v1545 = vsel %vm1542, %v1544, %v1540
        %v1546 = vmul.f32 %v1523, %v1545
        %v1547 = vrcp.pop %v1531
        %v1548 = vmul.f32 %v1531, %v1547
        %v1549 = vsub.f32 1.0, %v1548
        %v1550 = vmul.f32 %v1547, %v1549
        %v1551 = vadd.f32 %v1547, %v1550
        %vm1552 = vweird.f32 %v1531
        %vm1553 = vweird.f32 %v1547
        %vm1554 = vmor %vm1552, %vm1553
        %v1555 = vsel %vm1554, %v1547, %v1551
        %v1556 = vand.u32 2147483647, %v1531
        %vm1557 = vcmp.eq.f32.partialorder %v1556, 8.507059e+37
        %v1558 = vand.u32 %v1531, 2147483648
        %v1559 = vor.u32 1.1754944e-38, %v1558
        %v1560 = vsel %vm1557, %v1559, %v1555
        %v1561 = vmul.f32 %v1525, %v1560
        %1562 = vrot.lane.b32.xlu0 %v1065, 64
        %v1563 = vpop.permute.xlu0 %1562
        %v1566 = vsel %vm1147, %v1546, 0
        %1568 = vmatpush.msra.mxu0 0.0
        %1569 = vmatpush.msra.mxu0 0.0
        %1570 = vmatpush.msra.mxu0 0.0
        %1571 = vmatpush.msra.mxu0 0.0
        %1572 = vmatpush.msra.mxu0 0.0
        %1573 = vmatpush.msra.mxu0 0.0
        %1574 = vmatpush.msra.mxu0 0.0
        %1575 = vmatpush.msra.mxu0 0.0
        %1576 = vmatpush.msra.mxu0 0.0
        %1577 = vmatpush.msra.mxu0 0.0
        %1578 = vmatpush.msra.mxu0 0.0
        %1579 = vmatpush.msra.mxu0 0.0
        %1580 = vmatpush.msra.mxu0 0.0
        %1581 = vmatpush.msra.mxu0 0.0
        %1582 = vmatpush.msra.mxu0 0.0
        %1583 = vmatpush.msra.mxu0 %v1563
        %1584 = vmatmul.f32.gmra.mxu0 %v1566
        %v1585 = vpop.f32.mrf.mxu0
        %v1586 = vadd.f32 0.0, %v1585
        %1587 = vdwg.mxu0
        %1588 = vrot.lane.b32.xlu0 %v1068, 64
        %v1589 = vpop.permute.xlu0 %1588
        %v1592 = vsel %vm1147, %v1561, 0
        %1594 = vmatpush.msra.mxu0 0.0
        %1595 = vmatpush.msra.mxu0 0.0
        %1596 = vmatpush.msra.mxu0 0.0
        %1597 = vmatpush.msra.mxu0 0.0
        %1598 = vmatpush.msra.mxu0 0.0
        %1599 = vmatpush.msra.mxu0 0.0
        %1600 = vmatpush.msra.mxu0 0.0
        %1601 = vmatpush.msra.mxu0 0.0
        %1602 = vmatpush.msra.mxu0 0.0
        %1603 = vmatpush.msra.mxu0 0.0
        %1604 = vmatpush.msra.mxu0 0.0
        %1605 = vmatpush.msra.mxu0 0.0
        %1606 = vmatpush.msra.mxu0 0.0
        %1607 = vmatpush.msra.mxu0 0.0
        %1608 = vmatpush.msra.mxu0 0.0
        %1609 = vmatpush.msra.mxu0 %v1589
        %1610 = vmatmul.f32.gmra.mxu0 %v1592
        %v1611 = vpop.f32.mrf.mxu0
        %v1612 = vadd.f32 0.0, %v1611
        %1613 = vdwg.mxu0
        %v1615 = vsel %vm1094, %v1586, 0
        %v1618 = vsel %vm1094, %v1612, 0
        %1620 = vmatpush.msra.mxu0 0.0
        %1621 = vmatpush.msra.mxu0 0.0
        %1622 = vmatpush.msra.mxu0 0.0
        %1623 = vmatpush.msra.mxu0 0.0
        %1624 = vmatpush.msra.mxu0 0.0
        %1625 = vmatpush.msra.mxu0 0.0
        %1626 = vmatpush.msra.mxu0 0.0
        %1627 = vmatpush.msra.mxu0 0.0
        %1628 = vmatpush.msra.mxu0 0.0
        %1629 = vmatpush.msra.mxu0 0.0
        %1630 = vmatpush.msra.mxu0 0.0
        %1631 = vmatpush.msra.mxu0 0.0
        %1632 = vmatpush.msra.mxu0 %v1087
        %1633 = vmatpush.msra.mxu0 %v1086
        %1634 = vmatpush.msra.mxu0 %v1085
        %1635 = vmatpush.msra.mxu0 %v1084
        %1636 = vmatmul.f32.gmra.mxu0 %v1615
        %v1637 = vpop.f32.mrf.mxu0
        %v1638 = vadd.f32 0.0, %v1637
        %1639 = vmatmul.f32.gmra.mxu0 %v1618
        %v1640 = vpop.f32.mrf.mxu0
        %v1641 = vadd.f32 0.0, %v1640
        %1642 = vdwg.mxu0
        %v1643 = vadd.f32 %v1453, %v1638
        %v1644 = vadd.f32 %v1456, %v1641
        %1645 = vrot.lane.b32.xlu0 %v1092, 32
        %v1646 = vpop.permute.xlu0 %1645
        %1647 = vrot.lane.b32.xlu0 %v1042, 32
        %v1648 = vpop.permute.xlu0 %1647
        %v1649 = vsel %vm1094, %v1646, 0
        %v1651 = vsel %vm1094, %v1648, 0
        %1653 = vmatpush.xpose.msra.mxu0 0.0
        %1654 = vmatpush.xpose.msra.mxu0 0.0
        %1655 = vmatpush.xpose.msra.mxu0 0.0
        %1656 = vmatpush.xpose.msra.mxu0 0.0
        %1657 = vmatpush.xpose.msra.mxu0 0.0
        %1658 = vmatpush.xpose.msra.mxu0 0.0
        %1659 = vmatpush.xpose.msra.mxu0 0.0
        %1660 = vmatpush.xpose.msra.mxu0 0.0
        %1661 = vmatpush.xpose.msra.mxu0 0.0
        %1662 = vmatpush.xpose.msra.mxu0 0.0
        %1663 = vmatpush.xpose.msra.mxu0 0.0
        %1664 = vmatpush.xpose.msra.mxu0 0.0
        %1665 = vmatpush.xpose.msra.mxu0 0.0
        %1666 = vmatpush.xpose.msra.mxu0 0.0
        %1667 = vmatpush.xpose.msra.mxu0 0.0
        %1668 = vmatpush.xpose.msra.mxu0 %v1651
        %1669 = vmatmul.f32.gmra.mxu0 %v1649
        %v1670 = vpop.f32.mrf.mxu0
        %v1671 = vadd.f32 %v1075, %v1670
        %1672 = vdwg.mxu0
        %1673 = vrot.lane.b32.xlu0 %v1093, 32
        %v1674 = vpop.permute.xlu0 %1673
        %1675 = vrot.lane.b32.xlu0 %v1045, 32
        %v1676 = vpop.permute.xlu0 %1675
        %v1677 = vsel %vm1094, %v1674, 0
        %v1679 = vsel %vm1094, %v1676, 0
        %1681 = vmatpush.xpose.msra.mxu0 0.0
        %1682 = vmatpush.xpose.msra.mxu0 0.0
        %1683 = vmatpush.xpose.msra.mxu0 0.0
        %1684 = vmatpush.xpose.msra.mxu0 0.0
        %1685 = vmatpush.xpose.msra.mxu0 0.0
        %1686 = vmatpush.xpose.msra.mxu0 0.0
        %1687 = vmatpush.xpose.msra.mxu0 0.0
        %1688 = vmatpush.xpose.msra.mxu0 0.0
        %1689 = vmatpush.xpose.msra.mxu0 0.0
        %1690 = vmatpush.xpose.msra.mxu0 0.0
        %1691 = vmatpush.xpose.msra.mxu0 0.0
        %1692 = vmatpush.xpose.msra.mxu0 0.0
        %1693 = vmatpush.xpose.msra.mxu0 0.0
        %1694 = vmatpush.xpose.msra.mxu0 0.0
        %1695 = vmatpush.xpose.msra.mxu0 0.0
        %1696 = vmatpush.xpose.msra.mxu0 %v1679
        %1697 = vmatmul.f32.gmra.mxu0 %v1677
        %v1698 = vpop.f32.mrf.mxu0
        %v1699 = vadd.f32 %v1075, %v1698
        %1700 = vdwg.mxu0
        %v1701 = vsel %vm1147, %v1671, -inf
        %1702 = vmax.xlane.f32.xlu0 %v1701
        %v1703 = vpop.xlane.xlu0 %1702
        %v1704 = vsel %vm1147, %v1699, -inf
        %1705 = vmax.xlane.f32.xlu0 %v1704
        %v1706 = vpop.xlane.xlu0 %1705
        %v1707 = vsub.f32 %v1671, %v1703
        %v1708 = vsub.f32 %v1699, %v1706
        %v1709 = vmul.f32 %v1707, 1.442695
        %v1710 = vpow.pop %v1709
        %v1711 = vmul.f32 %v1708, 1.442695
        %v1712 = vpow.pop %v1711
        %v1713 = vsel %vm1147, %v1710, 0.0
        %1714 = vadd.xlane.f32.xlu0 %v1713
        %v1715 = vpop.xlane.xlu0 %1714
        %v1716 = vsel %vm1147, %v1712, 0.0
        %1717 = vadd.xlane.f32.xlu0 %v1716
        %v1718 = vpop.xlane.xlu0 %1717
        %v1719 = vrcp.pop %v1715
        %v1720 = vmul.f32 %v1715, %v1719
        %v1721 = vsub.f32 1.0, %v1720
        %v1722 = vmul.f32 %v1719, %v1721
        %v1723 = vadd.f32 %v1719, %v1722
        %vm1724 = vweird.f32 %v1715
        %vm1725 = vweird.f32 %v1719
        %vm1726 = vmor %vm1724, %vm1725
        %v1727 = vsel %vm1726, %v1719, %v1723
        %v1728 = vand.u32 2147483647, %v1715
        %vm1729 = vcmp.eq.f32.partialorder %v1728, 8.507059e+37
        %v1730 = vand.u32 %v1715, 2147483648
        %v1731 = vor.u32 1.1754944e-38, %v1730
        %v1732 = vsel %vm1729, %v1731, %v1727
        %v1733 = vmul.f32 %v1710, %v1732
        %v1734 = vrcp.pop %v1718
        %v1735 = vmul.f32 %v1718, %v1734
        %v1736 = vsub.f32 1.0, %v1735
        %v1737 = vmul.f32 %v1734, %v1736
        %v1738 = vadd.f32 %v1734, %v1737
        %vm1739 = vweird.f32 %v1718
        %vm1740 = vweird.f32 %v1734
        %vm1741 = vmor %vm1739, %vm1740
        %v1742 = vsel %vm1741, %v1734, %v1738
        %v1743 = vand.u32 2147483647, %v1718
        %vm1744 = vcmp.eq.f32.partialorder %v1743, 8.507059e+37
        %v1745 = vand.u32 %v1718, 2147483648
        %v1746 = vor.u32 1.1754944e-38, %v1745
        %v1747 = vsel %vm1744, %v1746, %v1742
        %v1748 = vmul.f32 %v1712, %v1747
        %1749 = vrot.lane.b32.xlu0 %v1065, 32
        %v1750 = vpop.permute.xlu0 %1749
        %v1753 = vsel %vm1147, %v1733, 0
        %1755 = vmatpush.msra.mxu0 0.0
        %1756 = vmatpush.msra.mxu0 0.0
        %1757 = vmatpush.msra.mxu0 0.0
        %1758 = vmatpush.msra.mxu0 0.0
        %1759 = vmatpush.msra.mxu0 0.0
        %1760 = vmatpush.msra.mxu0 0.0
        %1761 = vmatpush.msra.mxu0 0.0
        %1762 = vmatpush.msra.mxu0 0.0
        %1763 = vmatpush.msra.mxu0 0.0
        %1764 = vmatpush.msra.mxu0 0.0
        %1765 = vmatpush.msra.mxu0 0.0
        %1766 = vmatpush.msra.mxu0 0.0
        %1767 = vmatpush.msra.mxu0 0.0
        %1768 = vmatpush.msra.mxu0 0.0
        %1769 = vmatpush.msra.mxu0 0.0
        %1770 = vmatpush.msra.mxu0 %v1750
        %1771 = vmatmul.f32.gmra.mxu0 %v1753
        %v1772 = vpop.f32.mrf.mxu0
        %v1773 = vadd.f32 0.0, %v1772
        %1774 = vdwg.mxu0
        %1775 = vrot.lane.b32.xlu0 %v1068, 32
        %v1776 = vpop.permute.xlu0 %1775
        %v1779 = vsel %vm1147, %v1748, 0
        %1781 = vmatpush.msra.mxu0 0.0
        %1782 = vmatpush.msra.mxu0 0.0
        %1783 = vmatpush.msra.mxu0 0.0
        %1784 = vmatpush.msra.mxu0 0.0
        %1785 = vmatpush.msra.mxu0 0.0
        %1786 = vmatpush.msra.mxu0 0.0
        %1787 = vmatpush.msra.mxu0 0.0
        %1788 = vmatpush.msra.mxu0 0.0
        %1789 = vmatpush.msra.mxu0 0.0
        %1790 = vmatpush.msra.mxu0 0.0
        %1791 = vmatpush.msra.mxu0 0.0
        %1792 = vmatpush.msra.mxu0 0.0
        %1793 = vmatpush.msra.mxu0 0.0
        %1794 = vmatpush.msra.mxu0 0.0
        %1795 = vmatpush.msra.mxu0 0.0
        %1796 = vmatpush.msra.mxu0 %v1776
        %1797 = vmatmul.f32.gmra.mxu0 %v1779
        %v1798 = vpop.f32.mrf.mxu0
        %v1799 = vadd.f32 0.0, %v1798
        %1800 = vdwg.mxu0
        %v1802 = vsel %vm1094, %v1773, 0
        %v1805 = vsel %vm1094, %v1799, 0
        %1807 = vmatpush.msra.mxu0 0.0
        %1808 = vmatpush.msra.mxu0 0.0
        %1809 = vmatpush.msra.mxu0 0.0
        %1810 = vmatpush.msra.mxu0 0.0
        %1811 = vmatpush.msra.mxu0 0.0
        %1812 = vmatpush.msra.mxu0 0.0
        %1813 = vmatpush.msra.mxu0 0.0
        %1814 = vmatpush.msra.mxu0 0.0
        %1815 = vmatpush.msra.mxu0 0.0
        %1816 = vmatpush.msra.mxu0 0.0
        %1817 = vmatpush.msra.mxu0 0.0
        %1818 = vmatpush.msra.mxu0 0.0
        %1819 = vmatpush.msra.mxu0 %v1091
        %1820 = vmatpush.msra.mxu0 %v1090
        %1821 = vmatpush.msra.mxu0 %v1089
        %1822 = vmatpush.msra.mxu0 %v1088
        %1823 = vmatmul.f32.gmra.mxu0 %v1802
        %v1824 = vpop.f32.mrf.mxu0
        %v1825 = vadd.f32 0.0, %v1824
        %1826 = vmatmul.f32.gmra.mxu0 %v1805
        %v1827 = vpop.f32.mrf.mxu0
        %v1828 = vadd.f32 0.0, %v1827
        %1829 = vdwg.mxu0
        %v1830 = vadd.f32 %v1643, %v1825
        %v1831 = vadd.f32 %v1644, %v1828
        %v1832 = vadd.f32 %v884, %v1830
        %v1833 = vadd.f32 %v885, %v1831
        %v1834 = vld [vmem:[%s741] sm:$0x1]
        %v1836 = vperm.slane %v1834, 0
        %v1838 = vadd.f32 %v1832, %v1836
        %v1839 = vadd.f32 %v1833, %v1836
        %v1840 = vld [vmem:[%s750] sm:$0x1]
        %v1841 = vld [vmem:[%s759] sm:$0x1]
        %1842 = vadd.xlane.f32.xlu0 %v1838
        %v1843 = vpop.xlane.xlu0 %1842
        %1844 = vadd.xlane.f32.xlu0 %v1839
        %v1845 = vpop.xlane.xlu0 %1844
        %v1846 = vmul.f32 %v1843, %v898
        %v1847 = vmul.f32 %v1845, %v898
        %v1848 = vsub.f32 %v1838, %v1846
        %v1849 = vsub.f32 %v1839, %v1847
        %v1850 = vmul.f32 %v1848, %v1848
        %v1851 = vmul.f32 %v1849, %v1849
        %1852 = vadd.xlane.f32.xlu0 %v1850
        %v1853 = vpop.xlane.xlu0 %1852
        %1854 = vadd.xlane.f32.xlu0 %v1851
        %v1855 = vpop.xlane.xlu0 %1854
        %v1856 = vmul.f32 %v1853, %v898
        %v1857 = vmul.f32 %v1855, %v898
        %v1858 = vadd.f32 %v1856, 1e-05
        %v1859 = vadd.f32 %v1857, 1e-05
        %v1860 = vrsqrt.pop %v1858
        %v1861 = vmul.f32 %v1860, %v1858
        %v1862 = vmul.f32 %v1861, %v1860
        %v1863 = vmul.f32 0.5, %v1862
        %v1864 = vsub.f32 1.5, %v1863
        %v1865 = vmul.f32 %v1860, %v1864
        %vm1866 = vweird.f32 %v1858
        %vm1867 = vweird.f32 %v1860
        %vm1868 = vmor %vm1866, %vm1867
        %v1869 = vsel %vm1868, %v1860, %v1865
        %v1870 = vrsqrt.pop %v1859
        %v1871 = vmul.f32 %v1870, %v1859
        %v1872 = vmul.f32 %v1871, %v1870
        %v1873 = vmul.f32 0.5, %v1872
        %v1874 = vsub.f32 1.5, %v1873
        %v1875 = vmul.f32 %v1870, %v1874
        %vm1876 = vweird.f32 %v1859
        %vm1877 = vweird.f32 %v1870
        %vm1878 = vmor %vm1876, %vm1877
        %v1879 = vsel %vm1878, %v1870, %v1875
        %v1880 = vmul.f32 %v1848, %v1869
        %v1881 = vmul.f32 %v1849, %v1879
        %v1883 = vperm.slane %v1840, 0
        %v1885 = vmul.f32 %v1880, %v1883
        %v1886 = vmul.f32 %v1881, %v1883
        %v1888 = vperm.slane %v1841, 0
        %v1890 = vadd.f32 %v1885, %v1888
        %v1891 = vadd.f32 %v1886, %v1888
        %v1892 = vld [vmem:[%s769] sm:$0xff]
        %v1893 = vld [vmem:[%s769 + $0x8] sm:$0xff]
        %v1894 = vld [vmem:[%s769 + $0x10] sm:$0xff]
        %v1895 = vld [vmem:[%s769 + $0x18] sm:$0xff]
        %v1896 = vld [vmem:[%s769 + $0x20] sm:$0xff]
        %v1897 = vld [vmem:[%s769 + $0x28] sm:$0xff]
        %v1898 = vld [vmem:[%s769 + $0x30] sm:$0xff]
        %v1899 = vld [vmem:[%s769 + $0x38] sm:$0xff]
        %v1900 = vld [vmem:[%s769 + $0x40] sm:$0xff]
        %v1901 = vld [vmem:[%s769 + $0x48] sm:$0xff]
        %v1902 = vld [vmem:[%s769 + $0x50] sm:$0xff]
        %v1903 = vld [vmem:[%s769 + $0x58] sm:$0xff]
        %v1904 = vld [vmem:[%s769 + $0x60] sm:$0xff]
        %v1905 = vld [vmem:[%s769 + $0x68] sm:$0xff]
        %v1906 = vld [vmem:[%s769 + $0x70] sm:$0xff]
        %v1907 = vld [vmem:[%s769 + $0x78] sm:$0xff]
        %v1908 = vld [vmem:[%s769 + $0x80] sm:$0xff]
        %v1909 = vld [vmem:[%s769 + $0x88] sm:$0xff]
        %v1910 = vld [vmem:[%s769 + $0x90] sm:$0xff]
        %v1911 = vld [vmem:[%s769 + $0x98] sm:$0xff]
        %v1912 = vld [vmem:[%s769 + $0xa0] sm:$0xff]
        %v1913 = vld [vmem:[%s769 + $0xa8] sm:$0xff]
        %v1914 = vld [vmem:[%s769 + $0xb0] sm:$0xff]
        %v1915 = vld [vmem:[%s769 + $0xb8] sm:$0xff]
        %v1916 = vld [vmem:[%s769 + $0xc0] sm:$0xff]
        %v1917 = vld [vmem:[%s769 + $0xc8] sm:$0xff]
        %v1918 = vld [vmem:[%s769 + $0xd0] sm:$0xff]
        %v1919 = vld [vmem:[%s769 + $0xd8] sm:$0xff]
        %v1920 = vld [vmem:[%s769 + $0xe0] sm:$0xff]
        %v1921 = vld [vmem:[%s769 + $0xe8] sm:$0xff]
        %v1922 = vld [vmem:[%s769 + $0xf0] sm:$0xff]
        %v1923 = vld [vmem:[%s769 + $0xf8] sm:$0xff]
        %v1924 = vld [vmem:[%s769 + $0x100] sm:$0xff]
        %v1925 = vld [vmem:[%s769 + $0x108] sm:$0xff]
        %v1926 = vld [vmem:[%s769 + $0x110] sm:$0xff]
        %v1927 = vld [vmem:[%s769 + $0x118] sm:$0xff]
        %v1928 = vld [vmem:[%s769 + $0x120] sm:$0xff]
        %v1929 = vld [vmem:[%s769 + $0x128] sm:$0xff]
        %v1930 = vld [vmem:[%s769 + $0x130] sm:$0xff]
        %v1931 = vld [vmem:[%s769 + $0x138] sm:$0xff]
        %v1932 = vld [vmem:[%s769 + $0x140] sm:$0xff]
        %v1933 = vld [vmem:[%s769 + $0x148] sm:$0xff]
        %v1934 = vld [vmem:[%s769 + $0x150] sm:$0xff]
        %v1935 = vld [vmem:[%s769 + $0x158] sm:$0xff]
        %v1936 = vld [vmem:[%s769 + $0x160] sm:$0xff]
        %v1937 = vld [vmem:[%s769 + $0x168] sm:$0xff]
        %v1938 = vld [vmem:[%s769 + $0x170] sm:$0xff]
        %v1939 = vld [vmem:[%s769 + $0x178] sm:$0xff]
        %v1940 = vld [vmem:[%s769 + $0x180] sm:$0xff]
        %v1941 = vld [vmem:[%s769 + $0x188] sm:$0xff]
        %v1942 = vld [vmem:[%s769 + $0x190] sm:$0xff]
        %v1943 = vld [vmem:[%s769 + $0x198] sm:$0xff]
        %v1944 = vld [vmem:[%s769 + $0x1a0] sm:$0xff]
        %v1945 = vld [vmem:[%s769 + $0x1a8] sm:$0xff]
        %v1946 = vld [vmem:[%s769 + $0x1b0] sm:$0xff]
        %v1947 = vld [vmem:[%s769 + $0x1b8] sm:$0xff]
        %v1948 = vld [vmem:[%s769 + $0x1c0] sm:$0xff]
        %v1949 = vld [vmem:[%s769 + $0x1c8] sm:$0xff]
        %v1950 = vld [vmem:[%s769 + $0x1d0] sm:$0xff]
        %v1951 = vld [vmem:[%s769 + $0x1d8] sm:$0xff]
        %v1952 = vld [vmem:[%s769 + $0x1e0] sm:$0xff]
        %v1953 = vld [vmem:[%s769 + $0x1e8] sm:$0xff]
        %v1954 = vld [vmem:[%s769 + $0x1f0] sm:$0xff]
        %v1955 = vld [vmem:[%s769 + $0x1f8] sm:$0xff]
        %v1956 = vld [vmem:[%s872] sm:$0xf]
        %v1958 = vperm.slane %v1956, 0
        %v1959 = vperm.slane %v1956, 1
        %v1960 = vperm.slane %v1956, 2
        %v1961 = vperm.slane %v1956, 3
        %1966 = vmatpush.msra.mxu0 %v1952
        %1967 = vmatpush.msra.mxu0 %v1948
        %1968 = vmatpush.msra.mxu0 %v1944
        %1969 = vmatpush.msra.mxu0 %v1940
        %1970 = vmatpush.msra.mxu0 %v1936
        %1971 = vmatpush.msra.mxu0 %v1932
        %1972 = vmatpush.msra.mxu0 %v1928
        %1973 = vmatpush.msra.mxu0 %v1924
        %1974 = vmatpush.msra.mxu0 %v1920
        %1975 = vmatpush.msra.mxu0 %v1916
        %1976 = vmatpush.msra.mxu0 %v1912
        %1977 = vmatpush.msra.mxu0 %v1908
        %1978 = vmatpush.msra.mxu0 %v1904
        %1979 = vmatpush.msra.mxu0 %v1900
        %1980 = vmatpush.msra.mxu0 %v1896
        %1981 = vmatpush.msra.mxu0 %v1892
        %1982 = vmatmul.f32.gmra.mxu0 %v1890
        %v1983 = vpop.f32.mrf.mxu0
        %v1984 = vadd.f32 %v1958, %v1983
        %1985 = vmatmul.f32.gmra.mxu0 %v1891
        %v1986 = vpop.f32.mrf.mxu0
        %v1987 = vadd.f32 %v1958, %v1986
        %1988 = vdwg.mxu0
        %1989 = vmatpush.msra.mxu0 %v1953
        %1990 = vmatpush.msra.mxu0 %v1949
        %1991 = vmatpush.msra.mxu0 %v1945
        %1992 = vmatpush.msra.mxu0 %v1941
        %1993 = vmatpush.msra.mxu0 %v1937
        %1994 = vmatpush.msra.mxu0 %v1933
        %1995 = vmatpush.msra.mxu0 %v1929
        %1996 = vmatpush.msra.mxu0 %v1925
        %1997 = vmatpush.msra.mxu0 %v1921
        %1998 = vmatpush.msra.mxu0 %v1917
        %1999 = vmatpush.msra.mxu0 %v1913
        %2000 = vmatpush.msra.mxu0 %v1909
        %2001 = vmatpush.msra.mxu0 %v1905
        %2002 = vmatpush.msra.mxu0 %v1901
        %2003 = vmatpush.msra.mxu0 %v1897
        %2004 = vmatpush.msra.mxu0 %v1893
        %2005 = vmatmul.f32.gmra.mxu0 %v1890
        %v2006 = vpop.f32.mrf.mxu0
        %v2007 = vadd.f32 %v1959, %v2006
        %2008 = vmatmul.f32.gmra.mxu0 %v1891
        %v2009 = vpop.f32.mrf.mxu0
        %v2010 = vadd.f32 %v1959, %v2009
        %2011 = vdwg.mxu0
        %2012 = vmatpush.msra.mxu0 %v1954
        %2013 = vmatpush.msra.mxu0 %v1950
        %2014 = vmatpush.msra.mxu0 %v1946
        %2015 = vmatpush.msra.mxu0 %v1942
        %2016 = vmatpush.msra.mxu0 %v1938
        %2017 = vmatpush.msra.mxu0 %v1934
        %2018 = vmatpush.msra.mxu0 %v1930
        %2019 = vmatpush.msra.mxu0 %v1926
        %2020 = vmatpush.msra.mxu0 %v1922
        %2021 = vmatpush.msra.mxu0 %v1918
        %2022 = vmatpush.msra.mxu0 %v1914
        %2023 = vmatpush.msra.mxu0 %v1910
        %2024 = vmatpush.msra.mxu0 %v1906
        %2025 = vmatpush.msra.mxu0 %v1902
        %2026 = vmatpush.msra.mxu0 %v1898
        %2027 = vmatpush.msra.mxu0 %v1894
        %2028 = vmatmul.f32.gmra.mxu0 %v1890
        %v2029 = vpop.f32.mrf.mxu0
        %v2030 = vadd.f32 %v1960, %v2029
        %2031 = vmatmul.f32.gmra.mxu0 %v1891
        %v2032 = vpop.f32.mrf.mxu0
        %v2033 = vadd.f32 %v1960, %v2032
        %2034 = vdwg.mxu0
        %2035 = vmatpush.msra.mxu0 %v1955
        %2036 = vmatpush.msra.mxu0 %v1951
        %2037 = vmatpush.msra.mxu0 %v1947
        %2038 = vmatpush.msra.mxu0 %v1943
        %2039 = vmatpush.msra.mxu0 %v1939
        %2040 = vmatpush.msra.mxu0 %v1935
        %2041 = vmatpush.msra.mxu0 %v1931
        %2042 = vmatpush.msra.mxu0 %v1927
        %2043 = vmatpush.msra.mxu0 %v1923
        %2044 = vmatpush.msra.mxu0 %v1919
        %2045 = vmatpush.msra.mxu0 %v1915
        %2046 = vmatpush.msra.mxu0 %v1911
        %2047 = vmatpush.msra.mxu0 %v1907
        %2048 = vmatpush.msra.mxu0 %v1903
        %2049 = vmatpush.msra.mxu0 %v1899
        %2050 = vmatpush.msra.mxu0 %v1895
        %2051 = vmatmul.f32.gmra.mxu0 %v1890
        %v2052 = vpop.f32.mrf.mxu0
        %v2053 = vadd.f32 %v1961, %v2052
        %2054 = vmatmul.f32.gmra.mxu0 %v1891
        %v2055 = vpop.f32.mrf.mxu0
        %v2056 = vadd.f32 %v1961, %v2055
        %2057 = vdwg.mxu0
        %v2058 = vmul.f32 %v1984, 0.5
        %v2059 = vmul.f32 %v2007, 0.5
        %v2060 = vmul.f32 %v2030, 0.5
        %v2061 = vmul.f32 %v2053, 0.5
        %v2062 = vmul.f32 %v1987, 0.5
        %v2063 = vmul.f32 %v2010, 0.5
        %v2064 = vmul.f32 %v2033, 0.5
        %v2065 = vmul.f32 %v2056, 0.5
        %v2066 = vmul.f32 %v1984, 0.70710677
        %v2067 = vmul.f32 %v2007, 0.70710677
        %v2068 = vmul.f32 %v2030, 0.70710677
        %v2069 = vmul.f32 %v2053, 0.70710677
        %v2070 = vmul.f32 %v1987, 0.70710677
        %v2071 = vmul.f32 %v2010, 0.70710677
        %v2072 = vmul.f32 %v2033, 0.70710677
        %v2073 = vmul.f32 %v2056, 0.70710677
        %v2074 = vand.u32 2147483647, %v2066
        %v2075 = vand.u32 2147483647, %v2067
        %v2076 = vand.u32 2147483647, %v2068
        %v2077 = vand.u32 2147483647, %v2069
        %v2078 = vand.u32 2147483647, %v2070
        %v2079 = vand.u32 2147483647, %v2071
        %v2080 = vand.u32 2147483647, %v2072
        %v2081 = vand.u32 2147483647, %v2073
        %v2082 = vmul.f32 %v2074, 0.3275911
        %v2083 = vmul.f32 %v2075, 0.3275911
        %v2084 = vmul.f32 %v2076, 0.3275911
        %v2085 = vmul.f32 %v2077, 0.3275911
        %v2086 = vmul.f32 %v2078, 0.3275911
        %v2087 = vmul.f32 %v2079, 0.3275911
        %v2088 = vmul.f32 %v2080, 0.3275911
        %v2089 = vmul.f32 %v2081, 0.3275911
        %v2090 = vadd.f32 %v2082, 1.0
        %v2091 = vadd.f32 %v2083, 1.0
        %v2092 = vadd.f32 %v2084, 1.0
        %v2093 = vadd.f32 %v2085, 1.0
        %v2094 = vadd.f32 %v2086, 1.0
        %v2095 = vadd.f32 %v2087, 1.0
        %v2096 = vadd.f32 %v2088, 1.0
        %v2097 = vadd.f32 %v2089, 1.0
        %v2098 = vrcp.pop %v2090
        %v2099 = vmul.f32 %v2090, %v2098
        %v2100 = vsub.f32 1.0, %v2099
        %v2101 = vmul.f32 %v2098, %v2100
        %v2102 = vadd.f32 %v2098, %v2101
        %vm2103 = vweird.f32 %v2090
        %vm2104 = vweird.f32 %v2098
        %vm2105 = vmor %vm2103, %vm2104
        %v2106 = vsel %vm2105, %v2098, %v2102
        %v2107 = vand.u32 2147483647, %v2090
        %vm2108 = vcmp.eq.f32.partialorder %v2107, 8.507059e+37
        %v2109 = vand.u32 %v2090, 2147483648
        %v2110 = vor.u32 1.1754944e-38, %v2109
        %v2111 = vsel %vm2108, %v2110, %v2106
        %v2112 = vmul.f32 1.0, %v2111
        %v2113 = vrcp.pop %v2091
        %v2114 = vmul.f32 %v2091, %v2113
        %v2115 = vsub.f32 1.0, %v2114
        %v2116 = vmul.f32 %v2113, %v2115
        %v2117 = vadd.f32 %v2113, %v2116
        %vm2118 = vweird.f32 %v2091
        %vm2119 = vweird.f32 %v2113
        %vm2120 = vmor %vm2118, %vm2119
        %v2121 = vsel %vm2120, %v2113, %v2117
        %v2122 = vand.u32 2147483647, %v2091
        %vm2123 = vcmp.eq.f32.partialorder %v2122, 8.507059e+37
        %v2124 = vand.u32 %v2091, 2147483648
        %v2125 = vor.u32 1.1754944e-38, %v2124
        %v2126 = vsel %vm2123, %v2125, %v2121
        %v2127 = vmul.f32 1.0, %v2126
        %v2128 = vrcp.pop %v2092
        %v2129 = vmul.f32 %v2092, %v2128
        %v2130 = vsub.f32 1.0, %v2129
        %v2131 = vmul.f32 %v2128, %v2130
        %v2132 = vadd.f32 %v2128, %v2131
        %vm2133 = vweird.f32 %v2092
        %vm2134 = vweird.f32 %v2128
        %vm2135 = vmor %vm2133, %vm2134
        %v2136 = vsel %vm2135, %v2128, %v2132
        %v2137 = vand.u32 2147483647, %v2092
        %vm2138 = vcmp.eq.f32.partialorder %v2137, 8.507059e+37
        %v2139 = vand.u32 %v2092, 2147483648
        %v2140 = vor.u32 1.1754944e-38, %v2139
        %v2141 = vsel %vm2138, %v2140, %v2136
        %v2142 = vmul.f32 1.0, %v2141
        %v2143 = vrcp.pop %v2093
        %v2144 = vmul.f32 %v2093, %v2143
        %v2145 = vsub.f32 1.0, %v2144
        %v2146 = vmul.f32 %v2143, %v2145
        %v2147 = vadd.f32 %v2143, %v2146
        %vm2148 = vweird.f32 %v2093
        %vm2149 = vweird.f32 %v2143
        %vm2150 = vmor %vm2148, %vm2149
        %v2151 = vsel %vm2150, %v2143, %v2147
        %v2152 = vand.u32 2147483647, %v2093
        %vm2153 = vcmp.eq.f32.partialorder %v2152, 8.507059e+37
        %v2154 = vand.u32 %v2093, 2147483648
        %v2155 = vor.u32 1.1754944e-38, %v2154
        %v2156 = vsel %vm2153, %v2155, %v2151
        %v2157 = vmul.f32 1.0, %v2156
        %v2158 = vrcp.pop %v2094
        %v2159 = vmul.f32 %v2094, %v2158
        %v2160 = vsub.f32 1.0, %v2159
        %v2161 = vmul.f32 %v2158, %v2160
        %v2162 = vadd.f32 %v2158, %v2161
        %vm2163 = vweird.f32 %v2094
        %vm2164 = vweird.f32 %v2158
        %vm2165 = vmor %vm2163, %vm2164
        %v2166 = vsel %vm2165, %v2158, %v2162
        %v2167 = vand.u32 2147483647, %v2094
        %vm2168 = vcmp.eq.f32.partialorder %v2167, 8.507059e+37
        %v2169 = vand.u32 %v2094, 2147483648
        %v2170 = vor.u32 1.1754944e-38, %v2169
        %v2171 = vsel %vm2168, %v2170, %v2166
        %v2172 = vmul.f32 1.0, %v2171
        %v2173 = vrcp.pop %v2095
        %v2174 = vmul.f32 %v2095, %v2173
        %v2175 = vsub.f32 1.0, %v2174
        %v2176 = vmul.f32 %v2173, %v2175
        %v2177 = vadd.f32 %v2173, %v2176
        %vm2178 = vweird.f32 %v2095
        %vm2179 = vweird.f32 %v2173
        %vm2180 = vmor %vm2178, %vm2179
        %v2181 = vsel %vm2180, %v2173, %v2177
        %v2182 = vand.u32 2147483647, %v2095
        %vm2183 = vcmp.eq.f32.partialorder %v2182, 8.507059e+37
        %v2184 = vand.u32 %v2095, 2147483648
        %v2185 = vor.u32 1.1754944e-38, %v2184
        %v2186 = vsel %vm2183, %v2185, %v2181
        %v2187 = vmul.f32 1.0, %v2186
        %v2188 = vrcp.pop %v2096
        %v2189 = vmul.f32 %v2096, %v2188
        %v2190 = vsub.f32 1.0, %v2189
        %v2191 = vmul.f32 %v2188, %v2190
        %v2192 = vadd.f32 %v2188, %v2191
        %vm2193 = vweird.f32 %v2096
        %vm2194 = vweird.f32 %v2188
        %vm2195 = vmor %vm2193, %vm2194
        %v2196 = vsel %vm2195, %v2188, %v2192
        %v2197 = vand.u32 2147483647, %v2096
        %vm2198 = vcmp.eq.f32.partialorder %v2197, 8.507059e+37
        %v2199 = vand.u32 %v2096, 2147483648
        %v2200 = vor.u32 1.1754944e-38, %v2199
        %v2201 = vsel %vm2198, %v2200, %v2196
        %v2202 = vmul.f32 1.0, %v2201
        %v2203 = vrcp.pop %v2097
        %v2204 = vmul.f32 %v2097, %v2203
        %v2205 = vsub.f32 1.0, %v2204
        %v2206 = vmul.f32 %v2203, %v2205
        %v2207 = vadd.f32 %v2203, %v2206
        %vm2208 = vweird.f32 %v2097
        %vm2209 = vweird.f32 %v2203
        %vm2210 = vmor %vm2208, %vm2209
        %v2211 = vsel %vm2210, %v2203, %v2207
        %v2212 = vand.u32 2147483647, %v2097
        %vm2213 = vcmp.eq.f32.partialorder %v2212, 8.507059e+37
        %v2214 = vand.u32 %v2097, 2147483648
        %v2215 = vor.u32 1.1754944e-38, %v2214
        %v2216 = vsel %vm2213, %v2215, %v2211
        %v2217 = vmul.f32 1.0, %v2216
        %v2218 = vmul.f32 %v2112, 1.0614054
        %v2219 = vmul.f32 %v2127, 1.0614054
        %v2220 = vmul.f32 %v2142, 1.0614054
        %v2221 = vmul.f32 %v2157, 1.0614054
        %v2222 = vmul.f32 %v2172, 1.0614054
        %v2223 = vmul.f32 %v2187, 1.0614054
        %v2224 = vmul.f32 %v2202, 1.0614054
        %v2225 = vmul.f32 %v2217, 1.0614054
        %v2226 = vadd.f32 %v2218, -1.4531521
        %v2227 = vadd.f32 %v2219, -1.4531521
        %v2228 = vadd.f32 %v2220, -1.4531521
        %v2229 = vadd.f32 %v2221, -1.4531521
        %v2230 = vadd.f32 %v2222, -1.4531521
        %v2231 = vadd.f32 %v2223, -1.4531521
        %v2232 = vadd.f32 %v2224, -1.4531521
        %v2233 = vadd.f32 %v2225, -1.4531521
        %v2234 = vmul.f32 %v2226, %v2112
        %v2235 = vmul.f32 %v2227, %v2127
        %v2236 = vmul.f32 %v2228, %v2142
        %v2237 = vmul.f32 %v2229, %v2157
        %v2238 = vmul.f32 %v2230, %v2172
        %v2239 = vmul.f32 %v2231, %v2187
        %v2240 = vmul.f32 %v2232, %v2202
        %v2241 = vmul.f32 %v2233, %v2217
        %v2242 = vadd.f32 %v2234, 1.4214138
        %v2243 = vadd.f32 %v2235, 1.4214138
        %v2244 = vadd.f32 %v2236, 1.4214138
        %v2245 = vadd.f32 %v2237, 1.4214138
        %v2246 = vadd.f32 %v2238, 1.4214138
        %v2247 = vadd.f32 %v2239, 1.4214138
        %v2248 = vadd.f32 %v2240, 1.4214138
        %v2249 = vadd.f32 %v2241, 1.4214138
        %v2250 = vmul.f32 %v2242, %v2112
        %v2251 = vmul.f32 %v2243, %v2127
        %v2252 = vmul.f32 %v2244, %v2142
        %v2253 = vmul.f32 %v2245, %v2157
        %v2254 = vmul.f32 %v2246, %v2172
        %v2255 = vmul.f32 %v2247, %v2187
        %v2256 = vmul.f32 %v2248, %v2202
        %v2257 = vmul.f32 %v2249, %v2217
        %v2258 = vadd.f32 %v2250, -0.28449672
        %v2259 = vadd.f32 %v2251, -0.28449672
        %v2260 = vadd.f32 %v2252, -0.28449672
        %v2261 = vadd.f32 %v2253, -0.28449672
        %v2262 = vadd.f32 %v2254, -0.28449672
        %v2263 = vadd.f32 %v2255, -0.28449672
        %v2264 = vadd.f32 %v2256, -0.28449672
        %v2265 = vadd.f32 %v2257, -0.28449672
        %v2266 = vmul.f32 %v2258, %v2112
        %v2267 = vmul.f32 %v2259, %v2127
        %v2268 = vmul.f32 %v2260, %v2142
        %v2269 = vmul.f32 %v2261, %v2157
        %v2270 = vmul.f32 %v2262, %v2172
        %v2271 = vmul.f32 %v2263, %v2187
        %v2272 = vmul.f32 %v2264, %v2202
        %v2273 = vmul.f32 %v2265, %v2217
        %v2274 = vadd.f32 %v2266, 0.2548296
        %v2275 = vadd.f32 %v2267, 0.2548296
        %v2276 = vadd.f32 %v2268, 0.2548296
        %v2277 = vadd.f32 %v2269, 0.2548296
        %v2278 = vadd.f32 %v2270, 0.2548296
        %v2279 = vadd.f32 %v2271, 0.2548296
        %v2280 = vadd.f32 %v2272, 0.2548296
        %v2281 = vadd.f32 %v2273, 0.2548296
        %v2282 = vmul.f32 %v2274, %v2112
        %v2283 = vmul.f32 %v2275, %v2127
        %v2284 = vmul.f32 %v2276, %v2142
        %v2285 = vmul.f32 %v2277, %v2157
        %v2286 = vmul.f32 %v2278, %v2172
        %v2287 = vmul.f32 %v2279, %v2187
        %v2288 = vmul.f32 %v2280, %v2202
        %v2289 = vmul.f32 %v2281, %v2217
        %v2290 = vsub.f32 0.0, %v2074
        %v2291 = vsub.f32 0.0, %v2075
        %v2292 = vsub.f32 0.0, %v2076
        %v2293 = vsub.f32 0.0, %v2077
        %v2294 = vsub.f32 0.0, %v2078
        %v2295 = vsub.f32 0.0, %v2079
        %v2296 = vsub.f32 0.0, %v2080
        %v2297 = vsub.f32 0.0, %v2081
        %v2298 = vmul.f32 %v2290, %v2074
        %v2299 = vmul.f32 %v2291, %v2075
        %v2300 = vmul.f32 %v2292, %v2076
        %v2301 = vmul.f32 %v2293, %v2077
        %v2302 = vmul.f32 %v2294, %v2078
        %v2303 = vmul.f32 %v2295, %v2079
        %v2304 = vmul.f32 %v2296, %v2080
        %v2305 = vmul.f32 %v2297, %v2081
        %v2306 = vmul.f32 %v2298, 1.442695
        %v2307 = vpow.pop %v2306
        %v2308 = vmul.f32 %v2299, 1.442695
        %v2309 = vpow.pop %v2308
        %v2310 = vmul.f32 %v2300, 1.442695
        %v2311 = vpow.pop %v2310
        %v2312 = vmul.f32 %v2301, 1.442695
        %v2313 = vpow.pop %v2312
        %v2314 = vmul.f32 %v2302, 1.442695
        %v2315 = vpow.pop %v2314
        %v2316 = vmul.f32 %v2303, 1.442695
        %v2317 = vpow.pop %v2316
        %v2318 = vmul.f32 %v2304, 1.442695
        %v2319 = vpow.pop %v2318
        %v2320 = vmul.f32 %v2305, 1.442695
        %v2321 = vpow.pop %v2320
        %v2322 = vmul.f32 %v2282, %v2307
        %v2323 = vmul.f32 %v2283, %v2309
        %v2324 = vmul.f32 %v2284, %v2311
        %v2325 = vmul.f32 %v2285, %v2313
        %v2326 = vmul.f32 %v2286, %v2315
        %v2327 = vmul.f32 %v2287, %v2317
        %v2328 = vmul.f32 %v2288, %v2319
        %v2329 = vmul.f32 %v2289, %v2321
        %v2330 = vsub.f32 1.0, %v2322
        %v2331 = vsub.f32 1.0, %v2323
        %v2332 = vsub.f32 1.0, %v2324
        %v2333 = vsub.f32 1.0, %v2325
        %v2334 = vsub.f32 1.0, %v2326
        %v2335 = vsub.f32 1.0, %v2327
        %v2336 = vsub.f32 1.0, %v2328
        %v2337 = vsub.f32 1.0, %v2329
        %vm2338 = vcmp.ge.f32.partialorder %v2066, 0.0
        %vm2339 = vcmp.ge.f32.partialorder %v2067, 0.0
        %vm2340 = vcmp.ge.f32.partialorder %v2068, 0.0
        %vm2341 = vcmp.ge.f32.partialorder %v2069, 0.0
        %vm2342 = vcmp.ge.f32.partialorder %v2070, 0.0
        %vm2343 = vcmp.ge.f32.partialorder %v2071, 0.0
        %vm2344 = vcmp.ge.f32.partialorder %v2072, 0.0
        %vm2345 = vcmp.ge.f32.partialorder %v2073, 0.0
        %v2346 = vsub.f32 0.0, %v2330
        %v2347 = vsub.f32 0.0, %v2331
        %v2348 = vsub.f32 0.0, %v2332
        %v2349 = vsub.f32 0.0, %v2333
        %v2350 = vsub.f32 0.0, %v2334
        %v2351 = vsub.f32 0.0, %v2335
        %v2352 = vsub.f32 0.0, %v2336
        %v2353 = vsub.f32 0.0, %v2337
        %v2354 = vsel %vm2338, %v2330, %v2346
        %v2355 = vsel %vm2339, %v2331, %v2347
        %v2356 = vsel %vm2340, %v2332, %v2348
        %v2357 = vsel %vm2341, %v2333, %v2349
        %v2358 = vsel %vm2342, %v2334, %v2350
        %v2359 = vsel %vm2343, %v2335, %v2351
        %v2360 = vsel %vm2344, %v2336, %v2352
        %v2361 = vsel %vm2345, %v2337, %v2353
        %v2362 = vadd.f32 %v2354, 1.0
        %v2363 = vadd.f32 %v2355, 1.0
        %v2364 = vadd.f32 %v2356, 1.0
        %v2365 = vadd.f32 %v2357, 1.0
        %v2366 = vadd.f32 %v2358, 1.0
        %v2367 = vadd.f32 %v2359, 1.0
        %v2368 = vadd.f32 %v2360, 1.0
        %v2369 = vadd.f32 %v2361, 1.0
        %v2370 = vmul.f32 %v2058, %v2362
        %v2371 = vmul.f32 %v2059, %v2363
        %v2372 = vmul.f32 %v2060, %v2364
        %v2373 = vmul.f32 %v2061, %v2365
        %v2374 = vmul.f32 %v2062, %v2366
        %v2375 = vmul.f32 %v2063, %v2367
        %v2376 = vmul.f32 %v2064, %v2368
        %v2377 = vmul.f32 %v2065, %v2369
        %v2378 = vld [vmem:[%s779] sm:$0xff]
        %v2379 = vld [vmem:[%s779 + $0x8] sm:$0xff]
        %v2380 = vld [vmem:[%s779 + $0x10] sm:$0xff]
        %v2381 = vld [vmem:[%s779 + $0x18] sm:$0xff]
        %v2382 = vld [vmem:[%s779 + $0x20] sm:$0xff]
        %v2383 = vld [vmem:[%s779 + $0x28] sm:$0xff]
        %v2384 = vld [vmem:[%s779 + $0x30] sm:$0xff]
        %v2385 = vld [vmem:[%s779 + $0x38] sm:$0xff]
        %v2386 = vld [vmem:[%s779 + $0x40] sm:$0xff]
        %v2387 = vld [vmem:[%s779 + $0x48] sm:$0xff]
        %v2388 = vld [vmem:[%s779 + $0x50] sm:$0xff]
        %v2389 = vld [vmem:[%s779 + $0x58] sm:$0xff]
        %v2390 = vld [vmem:[%s779 + $0x60] sm:$0xff]
        %v2391 = vld [vmem:[%s779 + $0x68] sm:$0xff]
        %v2392 = vld [vmem:[%s779 + $0x70] sm:$0xff]
        %v2393 = vld [vmem:[%s779 + $0x78] sm:$0xff]
        %v2394 = vld [vmem:[%s779 + $0x80] sm:$0xff]
        %v2395 = vld [vmem:[%s779 + $0x88] sm:$0xff]
        %v2396 = vld [vmem:[%s779 + $0x90] sm:$0xff]
        %v2397 = vld [vmem:[%s779 + $0x98] sm:$0xff]
        %v2398 = vld [vmem:[%s779 + $0xa0] sm:$0xff]
        %v2399 = vld [vmem:[%s779 + $0xa8] sm:$0xff]
        %v2400 = vld [vmem:[%s779 + $0xb0] sm:$0xff]
        %v2401 = vld [vmem:[%s779 + $0xb8] sm:$0xff]
        %v2402 = vld [vmem:[%s779 + $0xc0] sm:$0xff]
        %v2403 = vld [vmem:[%s779 + $0xc8] sm:$0xff]
        %v2404 = vld [vmem:[%s779 + $0xd0] sm:$0xff]
        %v2405 = vld [vmem:[%s779 + $0xd8] sm:$0xff]
        %v2406 = vld [vmem:[%s779 + $0xe0] sm:$0xff]
        %v2407 = vld [vmem:[%s779 + $0xe8] sm:$0xff]
        %v2408 = vld [vmem:[%s779 + $0xf0] sm:$0xff]
        %v2409 = vld [vmem:[%s779 + $0xf8] sm:$0xff]
        %v2410 = vld [vmem:[%s779 + $0x100] sm:$0xff]
        %v2411 = vld [vmem:[%s779 + $0x108] sm:$0xff]
        %v2412 = vld [vmem:[%s779 + $0x110] sm:$0xff]
        %v2413 = vld [vmem:[%s779 + $0x118] sm:$0xff]
        %v2414 = vld [vmem:[%s779 + $0x120] sm:$0xff]
        %v2415 = vld [vmem:[%s779 + $0x128] sm:$0xff]
        %v2416 = vld [vmem:[%s779 + $0x130] sm:$0xff]
        %v2417 = vld [vmem:[%s779 + $0x138] sm:$0xff]
        %v2418 = vld [vmem:[%s779 + $0x140] sm:$0xff]
        %v2419 = vld [vmem:[%s779 + $0x148] sm:$0xff]
        %v2420 = vld [vmem:[%s779 + $0x150] sm:$0xff]
        %v2421 = vld [vmem:[%s779 + $0x158] sm:$0xff]
        %v2422 = vld [vmem:[%s779 + $0x160] sm:$0xff]
        %v2423 = vld [vmem:[%s779 + $0x168] sm:$0xff]
        %v2424 = vld [vmem:[%s779 + $0x170] sm:$0xff]
        %v2425 = vld [vmem:[%s779 + $0x178] sm:$0xff]
        %v2426 = vld [vmem:[%s779 + $0x180] sm:$0xff]
        %v2427 = vld [vmem:[%s779 + $0x188] sm:$0xff]
        %v2428 = vld [vmem:[%s779 + $0x190] sm:$0xff]
        %v2429 = vld [vmem:[%s779 + $0x198] sm:$0xff]
        %v2430 = vld [vmem:[%s779 + $0x1a0] sm:$0xff]
        %v2431 = vld [vmem:[%s779 + $0x1a8] sm:$0xff]
        %v2432 = vld [vmem:[%s779 + $0x1b0] sm:$0xff]
        %v2433 = vld [vmem:[%s779 + $0x1b8] sm:$0xff]
        %v2434 = vld [vmem:[%s779 + $0x1c0] sm:$0xff]
        %v2435 = vld [vmem:[%s779 + $0x1c8] sm:$0xff]
        %v2436 = vld [vmem:[%s779 + $0x1d0] sm:$0xff]
        %v2437 = vld [vmem:[%s779 + $0x1d8] sm:$0xff]
        %v2438 = vld [vmem:[%s779 + $0x1e0] sm:$0xff]
        %v2439 = vld [vmem:[%s779 + $0x1e8] sm:$0xff]
        %v2440 = vld [vmem:[%s779 + $0x1f0] sm:$0xff]
        %v2441 = vld [vmem:[%s779 + $0x1f8] sm:$0xff]
        %v2442 = vld [vmem:[%s875] sm:$0x1]
        %v2444 = vperm.slane %v2442, 0
        %2446 = vmatpush.msra.mxu0 %v2393
        %2447 = vmatpush.msra.mxu0 %v2392
        %2448 = vmatpush.msra.mxu0 %v2391
        %2449 = vmatpush.msra.mxu0 %v2390
        %2450 = vmatpush.msra.mxu0 %v2389
        %2451 = vmatpush.msra.mxu0 %v2388
        %2452 = vmatpush.msra.mxu0 %v2387
        %2453 = vmatpush.msra.mxu0 %v2386
        %2454 = vmatpush.msra.mxu0 %v2385
        %2455 = vmatpush.msra.mxu0 %v2384
        %2456 = vmatpush.msra.mxu0 %v2383
        %2457 = vmatpush.msra.mxu0 %v2382
        %2458 = vmatpush.msra.mxu0 %v2381
        %2459 = vmatpush.msra.mxu0 %v2380
        %2460 = vmatpush.msra.mxu0 %v2379
        %2461 = vmatpush.msra.mxu0 %v2378
        %2462 = vmatmul.f32.gmra.mxu0 %v2370
        %v2463 = vpop.f32.mrf.mxu0
        %v2464 = vadd.f32 %v2444, %v2463
        %2465 = vmatmul.f32.gmra.mxu0 %v2374
        %v2466 = vpop.f32.mrf.mxu0
        %v2467 = vadd.f32 %v2444, %v2466
        %2468 = vdwg.mxu0
        %2469 = vmatpush.msra.mxu0 %v2409
        %2470 = vmatpush.msra.mxu0 %v2408
        %2471 = vmatpush.msra.mxu0 %v2407
        %2472 = vmatpush.msra.mxu0 %v2406
        %2473 = vmatpush.msra.mxu0 %v2405
        %2474 = vmatpush.msra.mxu0 %v2404
        %2475 = vmatpush.msra.mxu0 %v2403
        %2476 = vmatpush.msra.mxu0 %v2402
        %2477 = vmatpush.msra.mxu0 %v2401
        %2478 = vmatpush.msra.mxu0 %v2400
        %2479 = vmatpush.msra.mxu0 %v2399
        %2480 = vmatpush.msra.mxu0 %v2398
        %2481 = vmatpush.msra.mxu0 %v2397
        %2482 = vmatpush.msra.mxu0 %v2396
        %2483 = vmatpush.msra.mxu0 %v2395
        %2484 = vmatpush.msra.mxu0 %v2394
        %2485 = vmatmul.f32.gmra.mxu0 %v2371
        %v2486 = vpop.f32.mrf.mxu0
        %v2487 = vadd.f32 %v2464, %v2486
        %2488 = vmatmul.f32.gmra.mxu0 %v2375
        %v2489 = vpop.f32.mrf.mxu0
        %v2490 = vadd.f32 %v2467, %v2489
        %2491 = vdwg.mxu0
        %2492 = vmatpush.msra.mxu0 %v2425
        %2493 = vmatpush.msra.mxu0 %v2424
        %2494 = vmatpush.msra.mxu0 %v2423
        %2495 = vmatpush.msra.mxu0 %v2422
        %2496 = vmatpush.msra.mxu0 %v2421
        %2497 = vmatpush.msra.mxu0 %v2420
        %2498 = vmatpush.msra.mxu0 %v2419
        %2499 = vmatpush.msra.mxu0 %v2418
        %2500 = vmatpush.msra.mxu0 %v2417
        %2501 = vmatpush.msra.mxu0 %v2416
        %2502 = vmatpush.msra.mxu0 %v2415
        %2503 = vmatpush.msra.mxu0 %v2414
        %2504 = vmatpush.msra.mxu0 %v2413
        %2505 = vmatpush.msra.mxu0 %v2412
        %2506 = vmatpush.msra.mxu0 %v2411
        %2507 = vmatpush.msra.mxu0 %v2410
        %2508 = vmatmul.f32.gmra.mxu0 %v2372
        %v2509 = vpop.f32.mrf.mxu0
        %v2510 = vadd.f32 %v2487, %v2509
        %2511 = vmatmul.f32.gmra.mxu0 %v2376
        %v2512 = vpop.f32.mrf.mxu0
        %v2513 = vadd.f32 %v2490, %v2512
        %2514 = vdwg.mxu0
        %2515 = vmatpush.msra.mxu0 %v2441
        %2516 = vmatpush.msra.mxu0 %v2440
        %2517 = vmatpush.msra.mxu0 %v2439
        %2518 = vmatpush.msra.mxu0 %v2438
        %2519 = vmatpush.msra.mxu0 %v2437
        %2520 = vmatpush.msra.mxu0 %v2436
        %2521 = vmatpush.msra.mxu0 %v2435
        %2522 = vmatpush.msra.mxu0 %v2434
        %2523 = vmatpush.msra.mxu0 %v2433
        %2524 = vmatpush.msra.mxu0 %v2432
        %2525 = vmatpush.msra.mxu0 %v2431
        %2526 = vmatpush.msra.mxu0 %v2430
        %2527 = vmatpush.msra.mxu0 %v2429
        %2528 = vmatpush.msra.mxu0 %v2428
        %2529 = vmatpush.msra.mxu0 %v2427
        %2530 = vmatpush.msra.mxu0 %v2426
        %2531 = vmatmul.f32.gmra.mxu0 %v2373
        %v2532 = vpop.f32.mrf.mxu0
        %v2533 = vadd.f32 %v2510, %v2532
        %2534 = vmatmul.f32.gmra.mxu0 %v2377
        %v2535 = vpop.f32.mrf.mxu0
        %v2536 = vadd.f32 %v2513, %v2535
        %2537 = vdwg.mxu0
        %v2538 = vadd.f32 %v1838, %v2533
        %v2539 = vadd.f32 %v1839, %v2536
        %2540 = vst [vmem:[#allocation2] sm:$0xff] %v2538
        %2541 = vst [vmem:[#allocation2 + $0x8] sm:$0xff] %v2539
        %p2542 = scmp.eq.s32.totalorder %s43, 1
        // Predicated region
        $region129: #{tpu_custom_call.1} parent=79 // pred_check
          %p2543 = pneg %p2542
        $region130: #{tpu_custom_call.1} parent=79 // pred_check_branch
          %2545 = sbr.rel (%p2543) target = $region132
        $region131: #{tpu_custom_call.1} parent=79 // pred_region
          %v2546 = vld [vmem:[%s13] sm:$0x1]
          %v2547 = vld [vmem:[%s14] sm:$0x1]
          %2548 = vadd.xlane.f32.xlu0 %v2538
          %v2549 = vpop.xlane.xlu0 %2548
          %2550 = vadd.xlane.f32.xlu0 %v2539
          %v2551 = vpop.xlane.xlu0 %2550
          %v2552 = vmul.f32 %v2549, %v898
          %v2553 = vmul.f32 %v2551, %v898
          %v2554 = vsub.f32 %v2538, %v2552
          %v2555 = vsub.f32 %v2539, %v2553
          %v2556 = vmul.f32 %v2554, %v2554
          %v2557 = vmul.f32 %v2555, %v2555
          %2558 = vadd.xlane.f32.xlu0 %v2556
          %v2559 = vpop.xlane.xlu0 %2558
          %2560 = vadd.xlane.f32.xlu0 %v2557
          %v2561 = vpop.xlane.xlu0 %2560
          %v2562 = vmul.f32 %v2559, %v898
          %v2563 = vmul.f32 %v2561, %v898
          %v2564 = vadd.f32 %v2562, 1e-05
          %v2565 = vadd.f32 %v2563, 1e-05
          %v2566 = vrsqrt.pop %v2564
          %v2567 = vmul.f32 %v2566, %v2564
          %v2568 = vmul.f32 %v2567, %v2566
          %v2569 = vmul.f32 0.5, %v2568
          %v2570 = vsub.f32 1.5, %v2569
          %v2571 = vmul.f32 %v2566, %v2570
          %vm2572 = vweird.f32 %v2564
          %vm2573 = vweird.f32 %v2566
          %vm2574 = vmor %vm2572, %vm2573
          %v2575 = vsel %vm2574, %v2566, %v2571
          %v2576 = vrsqrt.pop %v2565
          %v2577 = vmul.f32 %v2576, %v2565
          %v2578 = vmul.f32 %v2577, %v2576
          %v2579 = vmul.f32 0.5, %v2578
          %v2580 = vsub.f32 1.5, %v2579
          %v2581 = vmul.f32 %v2576, %v2580
          %vm2582 = vweird.f32 %v2565
          %vm2583 = vweird.f32 %v2576
          %vm2584 = vmor %vm2582, %vm2583
          %v2585 = vsel %vm2584, %v2576, %v2581
          %v2586 = vmul.f32 %v2554, %v2575
          %v2587 = vmul.f32 %v2555, %v2585
          %v2589 = vperm.slane %v2546, 0
          %v2591 = vmul.f32 %v2586, %v2589
          %v2592 = vmul.f32 %v2587, %v2589
          %v2594 = vperm.slane %v2547, 0
          %v2596 = vadd.f32 %v2591, %v2594
          %v2597 = vadd.f32 %v2592, %v2594
          %2598 = vst [vmem:[#allocation21] sm:$0xff] %v2596
          %2599 = vst [vmem:[#allocation21 + $0x8] sm:$0xff] %v2597
        $region132: #{tpu_custom_call.1} parent=79 // pred_fallthru
          _
        // Predicated region
        $region133: #{tpu_custom_call.1} parent=79 // pred_check
          %p2600 = pneg %p431
        $region134: #{tpu_custom_call.1} parent=79 // pred_check_branch
          %2602 = sbr.rel (%p2600) target = $region136
        $region135: #{tpu_custom_call.1} parent=79 // pred_region
          %2604 = vsyncadd [#allocation5], 0
          %s2605 = sshll.u32 [#allocation21], 4
          %s2606 = int_to_ptr.vmem [resolvable:$true] %s2605
          %s2607 = sshll.u32 %s15, 4
          %s2608 = int_to_ptr.hbm [resolvable:$true] %s2607
          %2613 = dma.vmem_to_hbm [thread:$0]  %s2606, 256, %s2608, [#allocation5], 128, 128, 8
        $region136: #{tpu_custom_call.1} parent=79 // pred_fallthru
          _
        // Predicated region
        $region137: #{tpu_custom_call.1} parent=79 // pred_check
          %p2614 = pneg %p431
        $region138: #{tpu_custom_call.1} parent=79 // pred_check_branch
          %2616 = sbr.rel (%p2614) target = $region140
        $region139: #{tpu_custom_call.1} parent=79 // pred_region
          %2618 = dma.done [#allocation5], 256
        $region140: #{tpu_custom_call.1} parent=79 // pred_fallthru
          _
      $region80: #{tpu_custom_call.1} parent=5 // pred_fallthru
        _
      %p2619 = scmp.le.s32.totalorder 2, %s38
      // Predicated region
      $region141: #{tpu_custom_call.1} parent=5 // pred_check
        %p2620 = pneg %p2619
      $region142: #{tpu_custom_call.1} parent=5 // pred_check_branch
        %2622 = sbr.rel (%p2620) target = $region144
      $region143: #{tpu_custom_call.1} parent=5 // pred_region
        %s2623 = ssub.s32 %s38, 2
      $region144: #{tpu_custom_call.1} parent=5 // pred_fallthru
        _
    $region6: #{tpu_custom_call.1} parent=1 // loop_footer
      %s42 = sadd.s32 1, %s38
    $region7: #{tpu_custom_call.1} parent=1 // loop_footer_branch
      %37 = sbr.rel target = $region3
    $region8: #{tpu_custom_call.1} parent=1 // loop_exit
      _
    %2624 = vsyncpa [#allocation4], 1
    %s2625 = scalar_lea.sflag [#allocation4], 1
    %2626 = vsyncpa %s2625, 1
    %2627 = vsyncpa [#allocation7], 1
    %s2628 = scalar_lea.sflag [#allocation7], 1
    %2629 = vsyncpa %s2628, 1
    %2630 = vsyncpa [#allocation10], 1
    %s2631 = scalar_lea.sflag [#allocation10], 1
    %2632 = vsyncpa %s2631, 1
    %2633 = vsyncpa [#allocation13], 1
    %s2634 = scalar_lea.sflag [#allocation13], 1
    %2635 = vsyncpa %s2634, 1
    %2636 = vsyncpa [#allocation16], 1
    %s2637 = scalar_lea.sflag [#allocation16], 1
    %2638 = vsyncpa %s2637, 1
    %2639 = vsyncpa [#allocation19], 1
    %s2640 = scalar_lea.sflag [#allocation19], 1
    %2641 = vsyncpa %s2640, 1
    %2642 = vsyncpa [#allocation5], 1
    %s2643 = scalar_lea.sflag [#allocation5], 1
    %2644 = vsyncpa %s2643, 1

</llo_original>
